<compile_context>
chip_gen: v5e
topology: v5e:2x2
jax: 0.10.0
libtpu: 0.0.40
codegen_flags: <defaults>
</compile_context>

<pallas_src>
import functools
import inspect

import jax
import jax.numpy as jnp
from jax import lax
from jax.experimental import pallas as pl
from jax.experimental.pallas import tpu as pltpu

_NEG_INF = float("-inf")          # python scalars only: jnp.float32(...) constants would be
_IDX_SENTINEL = 2 ** 30           # captured by the kernel trace and rejected by pallas_call.
_MIB = 1024 * 1024


def _round_up(x, m):
    return ((x + m - 1) // m) * m


def _vmem_capacity_bytes():
    try:
        return int(pltpu.get_tpu_info().vmem_capacity_bytes)
    except Exception:
        return 64 * _MIB          # conservative fallback (v7x per-TensorCore VMEM)


def _supports_buffered():
    if not hasattr(pl, "Buffered"):
        return False
    try:
        return "pipeline_mode" in inspect.signature(pl.BlockSpec).parameters
    except (TypeError, ValueError):
        return False


def choose_vocab_tile(hidden_size, vocab_size, *, n_splits=2, weight_dtype=jnp.bfloat16):
    """Generation-aware weight-tile sizing (v5e/v6e: 128 MiB VMEM -> TV up to 4096,
    v7x: 64 MiB -> TV <= 2048).  Returns (vocab_tile, n_weight_buffers)."""
    itemsize = jnp.dtype(weight_dtype).itemsize
    budget = int(_vmem_capacity_bytes() * 0.65)     # headroom for scratch/logits/outputs
    per_split = _round_up(-(-vocab_size // n_splits), 128)
    tv = 256
    for cand in (4096, 2048, 1024, 512, 256):
        if 2 * cand * hidden_size * itemsize <= budget:
            tv = cand
            break
    tv = min(tv, per_split)
    n_buf = 3 if 3 * tv * hidden_size * itemsize <= budget else 2
    return tv, n_buf


def prepare_lm_head_weight(lm_head_weight, *, vocab_tile, n_splits=2):
    """One-time weight-load prep: transpose torch (V, H) -> (H, V) and zero-pad the vocab
    to a multiple of n_splits * vocab_tile.  Paid once, not per sampling call."""
    V, H = lm_head_weight.shape
    v_pad = _round_up(V, n_splits * vocab_tile)
    wt = jnp.transpose(lm_head_weight)
    if v_pad != V:
        wt = jnp.pad(wt, ((0, 0), (0, v_pad - V)))
    return wt, V


def _lm_head_topk_kernel(x_ref, lnw_ref, wt_ref, vals_ref, idx_ref, normed_ref,
                         *, top_k, kp, eps, v_total, v_pad, tv, nj_inner):
    c = pl.program_id(0)          # vocab split (one per TensorCore on v7x)
    j = pl.program_id(1)          # vocab tile within the split (running top-K carry axis)
    B = x_ref.shape[0]

    # ---- once per split (per core): RMSNorm + running top-K init ----
    @pl.when(j == 0)
    def _():
        x = x_ref[...].astype(jnp.float32)
        var = jnp.mean(x * x, axis=-1, keepdims=True)
        normed = x * lax.rsqrt(var + eps)
        normed_ref[...] = (normed * lnw_ref[...].astype(jnp.float32)).astype(jnp.bfloat16)
        vals_ref[...] = jnp.full(vals_ref.shape, _NEG_INF, jnp.float32)
        idx_ref[...] = jnp.full(idx_ref.shape, _IDX_SENTINEL, jnp.int32)

    # ---- lm_head matmul for this vocab tile (bf16 MXU, f32 accumulate == .float()) ----
    logits = jnp.dot(normed_ref[...], wt_ref[...],
                     preferred_element_type=jnp.float32)                     # (B, TV)

    base = (c * nj_inner + j) * tv
    lane = lax.broadcasted_iota(jnp.int32, (1, tv), 1)
    tile_idx = base + lane                                                   # (1, TV) vocab ids
    if v_total < v_pad:                       # static: only emitted when padding exists
        logits = jnp.where(tile_idx < v_total, logits, _NEG_INF)

    old_vals = vals_ref[0]                                                   # (B, KP) running top-K
    old_kth = old_vals[:, top_k - 1:top_k]                                   # (B, 1) running K-th value
    tile_max = jnp.max(logits, axis=-1, keepdims=True)                       # (B, 1)
    kcol = lax.broadcasted_iota(jnp.int32, (1, kp), 1)                       # (1, KP)

    # ---- gated top-K update: tiles that cannot change the top-K cost one reduce ----
    @pl.when(jnp.any(tile_max > old_kth))
    def _():
        old_idx = idx_ref[0]                                                 # (B, KP)

        # phase 1: extract the tile entries that can enter the top-K (usually a handful);
        # early-exits once every row's remaining max <= its running K-th value.
        def cond(state):
            n, wmax, _, _, _ = state
            return jnp.logical_and(n < top_k, jnp.any(wmax > old_kth))

        def body(state):
            n, wmax, work, cv, ci = state
            a = jnp.min(jnp.where(work == wmax, tile_idx, _IDX_SENTINEL),
                        axis=-1, keepdims=True)                              # first-occurrence argmax
            sel = kcol == n
            cv = jnp.where(sel, wmax, cv)
            ci = jnp.where(sel, a, ci)
            work = jnp.where(tile_idx == a, _NEG_INF, work)
            return n + 1, jnp.max(work, axis=-1, keepdims=True), work, cv, ci

        cv0 = jnp.full((B, kp), _NEG_INF, jnp.float32)
        ci0 = jnp.full((B, kp), _IDX_SENTINEL, jnp.int32)
        _, _, _, cand_vals, cand_idx = lax.while_loop(
            cond, body, (jnp.zeros((), jnp.int32), tile_max, logits, cv0, ci0))

        # phase 2: merge two descending-sorted lists (running top-K, tile candidates) with a
        # vectorized rank-scatter.  Ties go to the running list (strictly smaller vocab ids),
        # reproducing torch.topk's first-occurrence ordering.  Entries whose rank lands in the
        # padding region are masked out below.
        n_gt = jnp.sum((cand_vals[:, None, :] > old_vals[:, :, None]).astype(jnp.int32),
                       axis=-1)                                              # (B, KP)
        n_ge = jnp.sum((old_vals[:, None, :] >= cand_vals[:, :, None]).astype(jnp.int32),
                       axis=-1)                                              # (B, KP)
        rank_old = kcol + n_gt
        rank_new = kcol + n_ge

        dst = lax.broadcasted_iota(jnp.int32, (1, 1, kp), 2)                 # (1, 1, KP)
        oh_old = rank_old[:, :, None] == dst                                 # (B, KP, KP)
        oh_new = rank_new[:, :, None] == dst

        merged_v = (jnp.sum(jnp.where(oh_old, old_vals[:, :, None], 0.0), axis=1)
                    + jnp.sum(jnp.where(oh_new, cand_vals[:, :, None], 0.0), axis=1))
        merged_i = (jnp.sum(jnp.where(oh_old, old_idx[:, :, None], 0), axis=1)
                    + jnp.sum(jnp.where(oh_new, cand_idx[:, :, None], 0), axis=1))

        keep = kcol < top_k
        vals_ref[0] = jnp.where(keep, merged_v, _NEG_INF)
        idx_ref[0] = jnp.where(keep, merged_i, _IDX_SENTINEL)


def lm_head_topk(hidden_states, ln_weight, wt_padded, vocab_size, *,
                 vocab_tile, n_splits=2, n_weight_buffers=2,
                 top_k=50, top_p=0.8, min_tokens_to_keep=5, eps=1e-6):
    B, H = hidden_states.shape
    H2, v_pad = wt_padded.shape
    assert H2 == H
    assert vocab_tile % 128 == 0 and vocab_tile >= 128
    assert v_pad % (n_splits * vocab_tile) == 0
    kp = _round_up(max(top_k, 1), 128)        # lane-padded running top-K width
    assert 0 < top_k <= kp
    nj_inner = v_pad // (n_splits * vocab_tile)
    lnw = ln_weight.reshape(1, H)

    kernel = functools.partial(
        _lm_head_topk_kernel, top_k=int(top_k), kp=int(kp), eps=float(eps),
        v_total=int(vocab_size), v_pad=int(v_pad), tv=int(vocab_tile),
        nj_inner=int(nj_inner))

    w_itemsize = jnp.dtype(wt_padded.dtype).itemsize
    n_buf = max(2, int(n_weight_buffers))
    # generation-aware VMEM request: what we need, never more than ~90% of physical VMEM
    need = (n_buf * H * vocab_tile * w_itemsize        # streamed weight tiles
            + 3 * B * H * 2                            # x (double-buffered) + normed scratch
            + 8 * B * vocab_tile * 4                   # logits / extraction work arrays
            + 4 * B * kp * kp * 4                      # rank-merge one-hots
            + 8 * _MIB)
    vmem_limit = min(int(_vmem_capacity_bytes() * 0.9), max(32 * _MIB, need))

    cost = pl.CostEstimate(
        flops=int(2 * B * H * v_pad),
        transcendentals=0,
        bytes_accessed=int(H * v_pad * w_itemsize
                           + B * H * jnp.dtype(hidden_states.dtype).itemsize
                           + 2 * n_splits * B * kp * 4))

    w_index_map = lambda c, j: (0, c * nj_inner + j)
    w_spec = pl.BlockSpec((H, vocab_tile), w_index_map)
    if n_buf > 2 and _supports_buffered():
        # deeper weight pipeline so the DMA engine runs ahead over occasional "active" tiles
        w_spec = pl.BlockSpec((H, vocab_tile), w_index_map,
                              pipeline_mode=pl.Buffered(n_buf))

    vals, idx = pl.pallas_call(
        kernel,
        grid=(n_splits, nj_inner),
        out_shape=(jax.ShapeDtypeStruct((n_splits, B, kp), jnp.float32),
                   jax.ShapeDtypeStruct((n_splits, B, kp), jnp.int32)),
        in_specs=[pl.BlockSpec((B, H), lambda c, j: (0, 0)),
                  pl.BlockSpec((1, H), lambda c, j: (0, 0)),
                  w_spec],
        out_specs=(pl.BlockSpec((1, B, kp), lambda c, j: (c, 0, 0)),
                   pl.BlockSpec((1, B, kp), lambda c, j: (c, 0, 0))),
        scratch_shapes=[pltpu.VMEM((B, H), jnp.bfloat16)],   # normed hidden states
        compiler_params=pltpu.CompilerParams(
            dimension_semantics=("parallel", "arbitrary"),   # splits parallel; tile axis carries top-K
            vmem_limit_bytes=int(vmem_limit)),
        cost_estimate=cost,
    )(hidden_states, lnw, wt_padded)

    # Tiny JAX-side merge of the per-split top-K partials + top-p filtering (B x n_splits*KP).
    # Concatenating split 0 before split 1 keeps lax.top_k's lowest-index tie-break consistent
    # with global first-occurrence ordering (split 0 holds strictly smaller vocab indices).
    v2 = jnp.transpose(vals, (1, 0, 2)).reshape(B, n_splits * kp)
    i2 = jnp.transpose(idx, (1, 0, 2)).reshape(B, n_splits * kp)
    top_vals, pos = lax.top_k(v2, top_k)
    token = jnp.take_along_axis(i2, pos, axis=-1)
    p = jax.nn.softmax(top_vals, axis=-1)
    cum = jnp.cumsum(p, axis=-1)
    keep = (jnp.arange(top_k) < min_tokens_to_keep)[None, :]
    mask = (cum < top_p) | keep
    filtered = jnp.where(mask, top_vals, -1000.0)
    probs = jax.nn.softmax(filtered, axis=-1)
    # TODO(synk): torch.topk returns int64 indices; int32 is sufficient for vocab < 2^31.
    return probs, token


def _reference(hidden_states, ln_weight, lm_head_weight, *,
               top_k, top_p, min_tokens_to_keep, eps=1e-6):
    x = hidden_states.astype(jnp.float32)
    var = jnp.mean(x * x, axis=-1, keepdims=True)
    normed = (x * lax.rsqrt(var + eps) * ln_weight.astype(jnp.float32)).astype(jnp.bfloat16)
    logits = jnp.dot(normed, lm_head_weight.T, preferred_element_type=jnp.float32)
    vals, tok = lax.top_k(logits, top_k)
    p = jax.nn.softmax(vals, axis=-1)
    cum = jnp.cumsum(p, axis=-1)
    keep = (jnp.arange(top_k) < min_tokens_to_keep)[None, :]
    mask = (cum < top_p) | keep
    filt = jnp.where(mask, vals, -1000.0)
    return jax.nn.softmax(filt, axis=-1), tok.astype(jnp.int32)


if __name__ == "__main__":
    # Small synthetic shapes consistent with the module's forward:
    # hidden_states (B, H), lm_head weight (V, H), ln_f weight (H,).
    # V is NOT a multiple of the tiling so the padded last tile is exercised.
    B, H, V = 2, 256, 1000
    TOP_K, TOP_P, MIN_KEEP = 8, 0.8, 3

    key = jax.random.PRNGKey(0)
    kx, kln, kw = jax.random.split(key, 3)
    hidden_states = jax.random.normal(kx, (B, H), dtype=jnp.float32).astype(jnp.bfloat16)
    ln_weight = (1.0 + 0.1 * jax.random.normal(kln, (H,), dtype=jnp.float32)).astype(jnp.bfloat16)
    lm_head_weight = (0.05 * jax.random.normal(kw, (V, H), dtype=jnp.float32)).astype(jnp.bfloat16)

    # Weight whose winners all live in the first 256 vocab rows -> later tiles never beat the
    # running K-th value, exercising the gated / early-exit path of the kernel.
    row_scale = jnp.where(jnp.arange(V)[:, None] < 256, 1.0, 1e-3).astype(jnp.float32)
    peaked_weight = (lm_head_weight.astype(jnp.float32) * row_scale).astype(jnp.bfloat16)

    def run_case(weight, vocab_tile, n_splits, n_buf):
        wt_padded, vocab = prepare_lm_head_weight(weight, vocab_tile=vocab_tile,
                                                  n_splits=n_splits)
        wt_padded = jax.block_until_ready(wt_padded)   # weight-load time, not per call
        probs, token = lm_head_topk(hidden_states, ln_weight, wt_padded, vocab,
                                    vocab_tile=vocab_tile, n_splits=n_splits,
                                    n_weight_buffers=n_buf,
                                    top_k=TOP_K, top_p=TOP_P,
                                    min_tokens_to_keep=MIN_KEEP)
        probs, token = jax.block_until_ready((probs, token))
        ref_probs, ref_token = _reference(hidden_states, ln_weight, weight,
                                          top_k=TOP_K, top_p=TOP_P,
                                          min_tokens_to_keep=MIN_KEEP)
        assert probs.shape == (B, TOP_K) and token.shape == (B, TOP_K)
        assert bool(jnp.all(jnp.abs(jnp.sum(probs, axis=-1) - 1.0) < 1e-4))
        assert bool(jnp.all((token >= 0) & (token < V)))
        assert bool(jnp.allclose(probs, ref_probs, atol=5e-3)), "probs mismatch vs reference"
        assert bool(jnp.array_equal(token, ref_token)), "token mismatch vs reference"

    # (a) explicit small tiles, 2 vocab splits, multiple tiles per split (padded last tile)
    run_case(lm_head_weight, vocab_tile=256, n_splits=2, n_buf=2)
    # (b) auto (generation-aware) tiling, single split
    tv_auto, nbuf_auto = choose_vocab_tile(H, V, n_splits=1)
    run_case(lm_head_weight, vocab_tile=tv_auto, n_splits=1, n_buf=nbuf_auto)
    # (c) peaked logits: later tiles are gated off (early-exit / skip path)
    run_case(peaked_weight, vocab_tile=256, n_splits=2, n_buf=2)

    print("KERNEL_OK")
</pallas_src>

<mosaic_0001>
module attributes {stable_mosaic.version = 11 : i64} {
  func.func @_lm_head_topk_kernel(%arg0: i32, %arg1: i32, %arg2: memref<2x256xbf16, #tpu.memory_space<vmem>>, %arg3: memref<1x256xbf16, #tpu.memory_space<vmem>>, %arg4: memref<256x256xbf16, #tpu.memory_space<vmem>>, %arg5: memref<1x2x128xf32, #tpu.memory_space<vmem>>, %arg6: memref<1x2x128xi32, #tpu.memory_space<vmem>>, %arg7: memref<2x256xbf16, #tpu.memory_space<vmem>>) attributes {dimension_semantics = [#tpu.dimension_semantics<parallel>, #tpu.dimension_semantics<arbitrary>], iteration_bounds = array<i64: 2, 2>, scalar_prefetch = 0 : i64, scratch_operands = 1 : i64, tpu.core_type = #tpu.core_type<tc>, window_params = [{pipeline_mode = #tpu.pipeline_mode<synchronous>, transform_indices = @transform_0, window_bounds = array<i64: 2, 256>}, {pipeline_mode = #tpu.pipeline_mode<synchronous>, transform_indices = @transform_1, window_bounds = array<i64: 1, 256>}, {transform_indices = @transform_2, window_bounds = array<i64: 256, 256>}, {transform_indices = @transform_3, window_bounds = array<i64: 1, 2, 128>}, {transform_indices = @transform_4, window_bounds = array<i64: 1, 2, 128>}]} {
    %c0_i32 = arith.constant 0 : i32
    %0 = arith.cmpi eq, %arg1, %c0_i32 : i32
    %1 = arith.extui %0 : i1 to i32
    %c0_i32_0 = arith.constant 0 : i32
    %2 = arith.cmpi ne, %1, %c0_i32_0 : i32
    scf.if %2 {
      %c0_14 = arith.constant 0 : index
      %c0_15 = arith.constant 0 : index
      %35 = vector.load %arg2[%c0_14, %c0_15] : memref<2x256xbf16, #tpu.memory_space<vmem>>, vector<2x256xbf16>
      %36 = arith.extf %35 : vector<2x256xbf16> to vector<2x256xf32>
      %37 = arith.mulf %36, %36 : vector<2x256xf32>
      %cst_16 = arith.constant dense<0.000000e+00> : vector<2xf32>
      %38 = vector.multi_reduction <add>, %37, %cst_16 [1] : vector<2x256xf32> to vector<2xf32>
      %39 = vector.shape_cast %38 : vector<2xf32> to vector<2x1xf32>
      %cst_17 = arith.constant 2.560000e+02 : f32
      %40 = vector.broadcast %cst_17 : f32 to vector<2x1xf32>
      %41 = arith.divf %39, %40 : vector<2x1xf32>
      %cst_18 = arith.constant 9.99999997E-7 : f32
      %42 = vector.broadcast %cst_18 : f32 to vector<2x1xf32>
      %43 = arith.addf %41, %42 : vector<2x1xf32>
      %44 = math.rsqrt %43 : vector<2x1xf32>
      %45 = vector.broadcast %44 : vector<2x1xf32> to vector<2x256xf32>
      %46 = arith.mulf %36, %45 : vector<2x256xf32>
      %c0_19 = arith.constant 0 : index
      %c0_20 = arith.constant 0 : index
      %47 = vector.load %arg3[%c0_19, %c0_20] : memref<1x256xbf16, #tpu.memory_space<vmem>>, vector<1x256xbf16>
      %48 = arith.extf %47 : vector<1x256xbf16> to vector<1x256xf32>
      %49 = vector.broadcast %48 : vector<1x256xf32> to vector<2x256xf32>
      %50 = arith.mulf %46, %49 : vector<2x256xf32>
      %51 = arith.truncf %50 : vector<2x256xf32> to vector<2x256xbf16>
      %c0_21 = arith.constant 0 : index
      %c0_22 = arith.constant 0 : index
      %52 = vector.load %arg7[%c0_21, %c0_22] : memref<2x256xbf16, #tpu.memory_space<vmem>>, vector<2x256xbf16>
      tpu.vector_store %arg7[%c0_21, %c0_22], %51 {strides = array<i32>} : memref<2x256xbf16, #tpu.memory_space<vmem>>, vector<2x256xbf16>,
      %cst_23 = arith.constant 0xFF800000 : f32
      %53 = vector.broadcast %cst_23 : f32 to vector<1x2x128xf32>
      %c0_24 = arith.constant 0 : index
      %c0_25 = arith.constant 0 : index
      %c0_26 = arith.constant 0 : index
      %54 = vector.load %arg5[%c0_24, %c0_25, %c0_26] : memref<1x2x128xf32, #tpu.memory_space<vmem>>, vector<1x2x128xf32>
      tpu.vector_store %arg5[%c0_24, %c0_25, %c0_26], %53 {strides = array<i32>} : memref<1x2x128xf32, #tpu.memory_space<vmem>>, vector<1x2x128xf32>,
      %c1073741824_i32 = arith.constant 1073741824 : i32
      %55 = vector.broadcast %c1073741824_i32 : i32 to vector<1x2x128xi32>
      %c0_27 = arith.constant 0 : index
      %c0_28 = arith.constant 0 : index
      %c0_29 = arith.constant 0 : index
      %56 = vector.load %arg6[%c0_27, %c0_28, %c0_29] : memref<1x2x128xi32, #tpu.memory_space<vmem>>, vector<1x2x128xi32>
      tpu.vector_store %arg6[%c0_27, %c0_28, %c0_29], %55 {strides = array<i32>} : memref<1x2x128xi32, #tpu.memory_space<vmem>>, vector<1x2x128xi32>,
    } else {
    }
    %c0 = arith.constant 0 : index
    %c0_1 = arith.constant 0 : index
    %3 = vector.load %arg7[%c0, %c0_1] : memref<2x256xbf16, #tpu.memory_space<vmem>>, vector<2x256xbf16>
    %c0_2 = arith.constant 0 : index
    %c0_3 = arith.constant 0 : index
    %4 = vector.load %arg4[%c0_2, %c0_3] : memref<256x256xbf16, #tpu.memory_space<vmem>>, vector<256x256xbf16>
    %cst = arith.constant dense<0.000000e+00> : vector<2x256xf32>
    %5 = tpu.matmul %3, %4, %cst {dimension_numbers = #tpu.dot_dimension_numbers<[1], [0], [0], [1], [0, 0, 1, 1], [], []>} : vector<2x256xbf16>, vector<256x256xbf16>, vector<2x256xf32> -> vector<2x256xf32>
    %c2_i32 = arith.constant 2 : i32
    %6 = arith.muli %arg0, %c2_i32 : i32
    %7 = arith.addi %6, %arg1 : i32
    %c256_i32 = arith.constant 256 : i32
    %8 = arith.muli %7, %c256_i32 : i32
    %9 = tpu.iota {dimensions = array<i32: 1>} : vector<1x256xi32>
    %10 = vector.broadcast %8 : i32 to vector<1x256xi32>
    %11 = arith.addi %10, %9 : vector<1x256xi32>
    %c1000_i32 = arith.constant 1000 : i32
    %12 = vector.broadcast %c1000_i32 : i32 to vector<1x256xi32>
    %13 = arith.cmpi slt, %11, %12 : vector<1x256xi32>
    %cst_4 = arith.constant 0xFF800000 : f32
    %14 = vector.shape_cast %13 : vector<1x256xi1> to vector<1x256xi1>
    %15 = vector.broadcast %14 : vector<1x256xi1> to vector<2x256xi1>
    %16 = vector.broadcast %cst_4 : f32 to vector<2x256xf32>
    %17 = arith.select %15, %5, %16 : vector<2x256xi1>, vector<2x256xf32>
    %c0_5 = arith.constant 0 : index
    %c0_6 = arith.constant 0 : index
    %c0_7 = arith.constant 0 : index
    %18 = vector.load %arg5[%c0_5, %c0_6, %c0_7] : memref<1x2x128xf32, #tpu.memory_space<vmem>>, vector<1x2x128xf32>
    %19 = vector.shape_cast %18 : vector<1x2x128xf32> to vector<2x128xf32>
    %20 = vector.extract_strided_slice %19 {offsets = [0, 7], sizes = [2, 1], strides = [1, 1]} : vector<2x128xf32> to vector<2x1xf32>
    %cst_8 = arith.constant dense<0xFF800000> : vector<2xf32>
    %21 = vector.multi_reduction <maximumf>, %17, %cst_8 [1] : vector<2x256xf32> to vector<2xf32>
    %22 = vector.shape_cast %21 : vector<2xf32> to vector<2x1xf32>
    %23 = tpu.iota {dimensions = array<i32: 1>} : vector<1x128xi32>
    %24 = arith.cmpf ogt, %22, %20 : vector<2x1xf32>
    %cst_9 = arith.constant 1.000000e+00 : f32
    %cst_10 = arith.constant 0.000000e+00 : f32
    %25 = vector.broadcast %cst_9 : f32 to vector<2x1xf32>
    %26 = vector.broadcast %cst_10 : f32 to vector<2x1xf32>
    %27 = arith.select %24, %25, %26 : vector<2x1xi1>, vector<2x1xf32>
    %28 = vector.shape_cast %27 : vector<2x1xf32> to vector<1x2x1xf32>
    %cst_11 = arith.constant dense<0xFF800000> : vector<1xf32>
    %29 = vector.multi_reduction <maximumf>, %28, %cst_11 [1, 2] : vector<1x2x1xf32> to vector<1xf32>
    %30 = vector.shape_cast %29 : vector<1xf32> to vector<1x1x1xf32>
    %31 = vector.extract %30[0, 0, 0] : f32 from vector<1x1x1xf32>
    %cst_12 = arith.constant 0.000000e+00 : f32
    %32 = arith.cmpf ogt, %31, %cst_12 : f32
    %33 = arith.extui %32 : i1 to i32
    %c0_i32_13 = arith.constant 0 : i32
    %34 = arith.cmpi ne, %33, %c0_i32_13 : i32
    scf.if %34 {
      %c0_14 = arith.constant 0 : index
      %c0_15 = arith.constant 0 : index
      %c0_16 = arith.constant 0 : index
      %35 = vector.load %arg6[%c0_14, %c0_15, %c0_16] : memref<1x2x128xi32, #tpu.memory_space<vmem>>, vector<1x2x128xi32>
      %36 = vector.shape_cast %35 : vector<1x2x128xi32> to vector<2x128xi32>
      %cst_17 = arith.constant 0xFF800000 : f32
      %37 = vector.broadcast %cst_17 : f32 to vector<2x128xf32>
      %c1073741824_i32 = arith.constant 1073741824 : i32
      %38 = vector.broadcast %c1073741824_i32 : i32 to vector<2x128xi32>
      %c0_i32_18 = arith.constant 0 : i32
      %39:5 = scf.while (%arg8 = %c0_i32_18, %arg9 = %22, %arg10 = %17, %arg11 = %37, %arg12 = %38) : (i32, vector<2x1xf32>, vector<2x256xf32>, vector<2x128xf32>, vector<2x128xi32>) -> (i32, vector<2x1xf32>, vector<2x256xf32>, vector<2x128xf32>, vector<2x128xi32>) {
        %c8_i32_37 = arith.constant 8 : i32
        %109 = arith.cmpi slt, %arg8, %c8_i32_37 : i32
        %110 = arith.cmpf ogt, %arg9, %20 : vector<2x1xf32>
        %cst_38 = arith.constant 1.000000e+00 : f32
        %cst_39 = arith.constant 0.000000e+00 : f32
        %111 = vector.broadcast %cst_38 : f32 to vector<2x1xf32>
        %112 = vector.broadcast %cst_39 : f32 to vector<2x1xf32>
        %113 = arith.select %110, %111, %112 : vector<2x1xi1>, vector<2x1xf32>
        %114 = vector.shape_cast %113 : vector<2x1xf32> to vector<1x2x1xf32>
        %cst_40 = arith.constant dense<0xFF800000> : vector<1xf32>
        %115 = vector.multi_reduction <maximumf>, %114, %cst_40 [1, 2] : vector<1x2x1xf32> to vector<1xf32>
        %116 = vector.shape_cast %115 : vector<1xf32> to vector<1x1x1xf32>
        %117 = vector.extract %116[0, 0, 0] : f32 from vector<1x1x1xf32>
        %cst_41 = arith.constant 0.000000e+00 : f32
        %118 = arith.cmpf ogt, %117, %cst_41 : f32
        %119 = arith.andi %109, %118 : i1
        scf.condition(%119) %arg8, %arg9, %arg10, %arg11, %arg12 : i32, vector<2x1xf32>, vector<2x256xf32>, vector<2x128xf32>, vector<2x128xi32>
      } do {
      ^bb0(%arg8: i32, %arg9: vector<2x1xf32>, %arg10: vector<2x256xf32>, %arg11: vector<2x128xf32>, %arg12: vector<2x128xi32>):
        %109 = vector.broadcast %arg9 : vector<2x1xf32> to vector<2x256xf32>
        %110 = arith.cmpf oeq, %arg10, %109 : vector<2x256xf32>
        %c1073741824_i32_37 = arith.constant 1073741824 : i32
        %111 = vector.shape_cast %11 : vector<1x256xi32> to vector<1x256xi32>
        %112 = vector.broadcast %111 : vector<1x256xi32> to vector<2x256xi32>
        %113 = vector.broadcast %c1073741824_i32_37 : i32 to vector<2x256xi32>
        %114 = arith.select %110, %112, %113 : vector<2x256xi1>, vector<2x256xi32>
        %cst_38 = arith.constant dense<2147483647> : vector<2xi32>
        %115 = vector.multi_reduction <minsi>, %114, %cst_38 [1] : vector<2x256xi32> to vector<2xi32>
        %116 = vector.shape_cast %115 : vector<2xi32> to vector<2x1xi32>
        %117 = vector.broadcast %arg8 : i32 to vector<1x128xi32>
        %118 = arith.cmpi eq, %23, %117 : vector<1x128xi32>
        %119 = vector.shape_cast %118 : vector<1x128xi1> to vector<1x128xi1>
        %120 = vector.broadcast %119 : vector<1x128xi1> to vector<2x128xi1>
        %121 = vector.shape_cast %arg9 : vector<2x1xf32> to vector<2x1xf32>
        %122 = vector.broadcast %121 : vector<2x1xf32> to vector<2x128xf32>
        %123 = arith.select %120, %122, %arg11 : vector<2x128xi1>, vector<2x128xf32>
        %124 = vector.shape_cast %118 : vector<1x128xi1> to vector<1x128xi1>
        %125 = vector.broadcast %124 : vector<1x128xi1> to vector<2x128xi1>
        %126 = vector.shape_cast %116 : vector<2x1xi32> to vector<2x1xi32>
        %127 = vector.broadcast %126 : vector<2x1xi32> to vector<2x128xi32>
        %128 = arith.select %125, %127, %arg12 : vector<2x128xi1>, vector<2x128xi32>
        %129 = vector.broadcast %11 : vector<1x256xi32> to vector<2x256xi32>
        %130 = vector.broadcast %116 : vector<2x1xi32> to vector<2x256xi32>
        %131 = arith.cmpi eq, %129, %130 : vector<2x256xi32>
        %cst_39 = arith.constant 0xFF800000 : f32
        %132 = vector.broadcast %cst_39 : f32 to vector<2x256xf32>
        %133 = arith.select %131, %132, %arg10 : vector<2x256xi1>, vector<2x256xf32>
        %c1_i32 = arith.constant 1 : i32
        %134 = arith.addi %arg8, %c1_i32 : i32
        %cst_40 = arith.constant dense<0xFF800000> : vector<2xf32>
        %135 = vector.multi_reduction <maximumf>, %133, %cst_40 [1] : vector<2x256xf32> to vector<2xf32>
        %136 = vector.shape_cast %135 : vector<2xf32> to vector<2x1xf32>
        scf.yield %134, %136, %133, %123, %128 : i32, vector<2x1xf32>, vector<2x256xf32>, vector<2x128xf32>, vector<2x128xi32>
      }
      %40 = vector.shape_cast %39#3 : vector<2x128xf32> to vector<2x1x128xf32>
      %41 = vector.shape_cast %19 : vector<2x128xf32> to vector<2x128x1xf32>
      %42 = vector.broadcast %40 : vector<2x1x128xf32> to vector<2x128x128xf32>
      %43 = vector.broadcast %41 : vector<2x128x1xf32> to vector<2x128x128xf32>
      %44 = arith.cmpf ogt, %42, %43 : vector<2x128x128xf32>
      %45 = arith.extui %44 : vector<2x128x128xi1> to vector<2x128x128xi32>
      %cst_19 = arith.constant dense<0> : vector<2x128xi32>
      %46 = vector.multi_reduction <add>, %45, %cst_19 [2] : vector<2x128x128xi32> to vector<2x128xi32>
      %47 = vector.shape_cast %19 : vector<2x128xf32> to vector<2x1x128xf32>
      %48 = vector.shape_cast %39#3 : vector<2x128xf32> to vector<2x128x1xf32>
      %49 = vector.broadcast %47 : vector<2x1x128xf32> to vector<2x128x128xf32>
      %50 = vector.broadcast %48 : vector<2x128x1xf32> to vector<2x128x128xf32>
      %51 = arith.cmpf oge, %49, %50 : vector<2x128x128xf32>
      %52 = arith.extui %51 : vector<2x128x128xi1> to vector<2x128x128xi32>
      %cst_20 = arith.constant dense<0> : vector<2x128xi32>
      %53 = vector.multi_reduction <add>, %52, %cst_20 [2] : vector<2x128x128xi32> to vector<2x128xi32>
      %54 = vector.broadcast %23 : vector<1x128xi32> to vector<2x128xi32>
      %55 = arith.addi %54, %46 : vector<2x128xi32>
      %56 = vector.broadcast %23 : vector<1x128xi32> to vector<2x128xi32>
      %57 = arith.addi %56, %53 : vector<2x128xi32>
      %58 = tpu.iota {dimensions = array<i32: 2>} : vector<1x1x128xi32>
      %59 = vector.shape_cast %55 : vector<2x128xi32> to vector<2x128x1xi32>
      %60 = vector.broadcast %59 : vector<2x128x1xi32> to vector<2x128x128xi32>
      %61 = vector.broadcast %58 : vector<1x1x128xi32> to vector<2x128x128xi32>
      %62 = arith.cmpi eq, %60, %61 : vector<2x128x128xi32>
      %63 = vector.shape_cast %57 : vector<2x128xi32> to vector<2x128x1xi32>
      %64 = vector.broadcast %63 : vector<2x128x1xi32> to vector<2x128x128xi32>
      %65 = vector.broadcast %58 : vector<1x1x128xi32> to vector<2x128x128xi32>
      %66 = arith.cmpi eq, %64, %65 : vector<2x128x128xi32>
      %67 = vector.shape_cast %19 : vector<2x128xf32> to vector<2x128x1xf32>
      %cst_21 = arith.constant 0.000000e+00 : f32
      %68 = vector.shape_cast %67 : vector<2x128x1xf32> to vector<2x128x1xf32>
      %69 = vector.broadcast %68 : vector<2x128x1xf32> to vector<2x128x128xf32>
      %70 = vector.broadcast %cst_21 : f32 to vector<2x128x128xf32>
      %71 = arith.select %62, %69, %70 : vector<2x128x128xi1>, vector<2x128x128xf32>
      %cst_22 = arith.constant dense<0.000000e+00> : vector<2x128xf32>
      %72 = vector.multi_reduction <add>, %71, %cst_22 [1] : vector<2x128x128xf32> to vector<2x128xf32>
      %73 = vector.shape_cast %39#3 : vector<2x128xf32> to vector<2x128x1xf32>
      %cst_23 = arith.constant 0.000000e+00 : f32
      %74 = vector.shape_cast %73 : vector<2x128x1xf32> to vector<2x128x1xf32>
      %75 = vector.broadcast %74 : vector<2x128x1xf32> to vector<2x128x128xf32>
      %76 = vector.broadcast %cst_23 : f32 to vector<2x128x128xf32>
      %77 = arith.select %66, %75, %76 : vector<2x128x128xi1>, vector<2x128x128xf32>
      %cst_24 = arith.constant dense<0.000000e+00> : vector<2x128xf32>
      %78 = vector.multi_reduction <add>, %77, %cst_24 [1] : vector<2x128x128xf32> to vector<2x128xf32>
      %79 = arith.addf %72, %78 : vector<2x128xf32>
      %80 = vector.shape_cast %36 : vector<2x128xi32> to vector<2x128x1xi32>
      %c0_i32_25 = arith.constant 0 : i32
      %81 = vector.shape_cast %80 : vector<2x128x1xi32> to vector<2x128x1xi32>
      %82 = vector.broadcast %81 : vector<2x128x1xi32> to vector<2x128x128xi32>
      %83 = vector.broadcast %c0_i32_25 : i32 to vector<2x128x128xi32>
      %84 = arith.select %62, %82, %83 : vector<2x128x128xi1>, vector<2x128x128xi32>
      %cst_26 = arith.constant dense<0> : vector<2x128xi32>
      %85 = vector.multi_reduction <add>, %84, %cst_26 [1] : vector<2x128x128xi32> to vector<2x128xi32>
      %86 = vector.shape_cast %39#4 : vector<2x128xi32> to vector<2x128x1xi32>
      %c0_i32_27 = arith.constant 0 : i32
      %87 = vector.shape_cast %86 : vector<2x128x1xi32> to vector<2x128x1xi32>
      %88 = vector.broadcast %87 : vector<2x128x1xi32> to vector<2x128x128xi32>
      %89 = vector.broadcast %c0_i32_27 : i32 to vector<2x128x128xi32>
      %90 = arith.select %66, %88, %89 : vector<2x128x128xi1>, vector<2x128x128xi32>
      %cst_28 = arith.constant dense<0> : vector<2x128xi32>
      %91 = vector.multi_reduction <add>, %90, %cst_28 [1] : vector<2x128x128xi32> to vector<2x128xi32>
      %92 = arith.addi %85, %91 : vector<2x128xi32>
      %c8_i32 = arith.constant 8 : i32
      %93 = vector.broadcast %c8_i32 : i32 to vector<1x128xi32>
      %94 = arith.cmpi slt, %23, %93 : vector<1x128xi32>
      %cst_29 = arith.constant 0xFF800000 : f32
      %95 = vector.shape_cast %94 : vector<1x128xi1> to vector<1x128xi1>
      %96 = vector.broadcast %95 : vector<1x128xi1> to vector<2x128xi1>
      %97 = vector.broadcast %cst_29 : f32 to vector<2x128xf32>
      %98 = arith.select %96, %79, %97 : vector<2x128xi1>, vector<2x128xf32>
      %c0_30 = arith.constant 0 : index
      %c0_31 = arith.constant 0 : index
      %c0_32 = arith.constant 0 : index
      %99 = vector.load %arg5[%c0_30, %c0_31, %c0_32] : memref<1x2x128xf32, #tpu.memory_space<vmem>>, vector<1x2x128xf32>
      %100 = vector.shape_cast %99 : vector<1x2x128xf32> to vector<2x128xf32>
      %101 = vector.shape_cast %98 : vector<2x128xf32> to vector<1x2x128xf32>
      tpu.vector_store %arg5[%c0_30, %c0_31, %c0_32], %101 {strides = array<i32>} : memref<1x2x128xf32, #tpu.memory_space<vmem>>, vector<1x2x128xf32>,
      %c1073741824_i32_33 = arith.constant 1073741824 : i32
      %102 = vector.shape_cast %94 : vector<1x128xi1> to vector<1x128xi1>
      %103 = vector.broadcast %102 : vector<1x128xi1> to vector<2x128xi1>
      %104 = vector.broadcast %c1073741824_i32_33 : i32 to vector<2x128xi32>
      %105 = arith.select %103, %92, %104 : vector<2x128xi1>, vector<2x128xi32>
      %c0_34 = arith.constant 0 : index
      %c0_35 = arith.constant 0 : index
      %c0_36 = arith.constant 0 : index
      %106 = vector.load %arg6[%c0_34, %c0_35, %c0_36] : memref<1x2x128xi32, #tpu.memory_space<vmem>>, vector<1x2x128xi32>
      %107 = vector.shape_cast %106 : vector<1x2x128xi32> to vector<2x128xi32>
      %108 = vector.shape_cast %105 : vector<2x128xi32> to vector<1x2x128xi32>
      tpu.vector_store %arg6[%c0_34, %c0_35, %c0_36], %108 {strides = array<i32>} : memref<1x2x128xi32, #tpu.memory_space<vmem>>, vector<1x2x128xi32>,
    } else {
    }
    return
  }
  func.func @transform_0(%arg0: i32, %arg1: i32) -> (i32, i32) {
    %c0_i32 = arith.constant 0 : i32
    %c0_i32_0 = arith.constant 0 : i32
    %c0_i32_1 = arith.constant 0 : i32
    return %c0_i32, %c0_i32_0 : i32, i32
  }
  func.func @transform_1(%arg0: i32, %arg1: i32) -> (i32, i32) {
    %c0_i32 = arith.constant 0 : i32
    %c0_i32_0 = arith.constant 0 : i32
    %c0_i32_1 = arith.constant 0 : i32
    return %c0_i32, %c0_i32_0 : i32, i32
  }
  func.func @transform_2(%arg0: i32, %arg1: i32) -> (i32, i32) {
    %c2_i32 = arith.constant 2 : i32
    %0 = arith.muli %arg0, %c2_i32 : i32
    %1 = arith.addi %0, %arg1 : i32
    %c0_i32 = arith.constant 0 : i32
    %c0_i32_0 = arith.constant 0 : i32
    return %c0_i32, %1 : i32, i32
  }
  func.func @transform_3(%arg0: i32, %arg1: i32) -> (i32, i32, i32) {
    %c0_i32 = arith.constant 0 : i32
    %c0_i32_0 = arith.constant 0 : i32
    %c0_i32_1 = arith.constant 0 : i32
    return %arg0, %c0_i32, %c0_i32_0 : i32, i32, i32
  }
  func.func @transform_4(%arg0: i32, %arg1: i32) -> (i32, i32, i32) {
    %c0_i32 = arith.constant 0 : i32
    %c0_i32_0 = arith.constant 0 : i32
    %c0_i32_1 = arith.constant 0 : i32
    return %arg0, %c0_i32, %c0_i32_0 : i32, i32, i32
  }
}

</mosaic_0001>

<llo_original>
// kernel: tpu_custom_call.1
$region0: #{tpu_custom_call.1}
  #allocation0 [shape = 'u32[]', space=smem, size = 0x4, offset = 0x4, fixed_abs, tag = 'smem constant byte address 0x4 - core index']
  #allocation1 [shape = 'u32[72,128]{1,0:T(1,128)}', space=vmem, size = 0x9000, scoped, tag = 'internal scratch']
  #allocation2 [shape = 'bf16[2,256]{1,0:T(2,128)(2,1)}', space=vmem, size = 0x400, scoped, tag = 'scratch operand']
  %s0 = inlined_call_operand.hbm [shape: bf16[2,256], index: 0, kind: input, shape index: {}]
  %s1 = inlined_call_operand.hbm [shape: bf16[1,256], index: 1, kind: input, shape index: {}]
  %s2 = inlined_call_operand.hbm [shape: bf16[256,1024], index: 2, kind: input, shape index: {}]
  %s3 = inlined_call_operand.hbm [shape: f32[2,2,128], index: 3, kind: output, shape index: {0}]
  %s4 = inlined_call_operand.hbm [shape: s32[2,2,128], index: 4, kind: output, shape index: {1}]
  %5 = xla_tuple %s3, %s4
  %s6 = sld [smem:[#allocation0]]
  $region80: #{tpu_custom_call.1} parent=0
    _
  %s8 = ssub.s32 1, %s6
  %s9 = scalar_select 0, %s8, %s6
  $region1: #{tpu_custom_call.1} parent=0
    #allocation3 [shape = 'u8[1024]{0}', space=vmem, size = 0x400, scoped, tag = 'input window, operand 0, single buffered']
    #allocation4 [shape = 's32[2]{0}', space=sflag, size = 0x8, scoped, tag = 'scoped memory for tpu_custom_call.1']
    #allocation5 [shape = 's32[2]{0}', space=sflag, size = 0x8, scoped, tag = 'scoped memory for tpu_custom_call.1']
    #allocation6 [shape = 'u8[1024]{0}', space=vmem, size = 0x400, scoped, tag = 'input window, operand 1, single buffered']
    #allocation7 [shape = 's32[1]{0}', space=sflag, size = 0x4, scoped, tag = 'scoped memory for tpu_custom_call.1']
    #allocation8 [shape = 'u8[262144]{0}', space=vmem, size = 0x40000, scoped, tag = 'input window, operand 2']
    #allocation9 [shape = 'u8[2048]{0}', space=vmem, size = 0x800, scoped, tag = 'output window, operand 0']
    #allocation10 [shape = 'u8[2048]{0}', space=vmem, size = 0x800, scoped, tag = 'output window, operand 1']
    #allocation11 [shape = 's32[2]{0}', space=sflag, size = 0x8, scoped, tag = 'scoped memory for tpu_custom_call.1']
    %10 = vsyncpa [#allocation4], 0
    %11 = vsyncpa [#allocation7], 0
    %12 = vsyncpa [#allocation5], 0
    %s13 = scalar_lea.sflag [#allocation5], 1
    %14 = vsyncpa %s13, 0
    %15 = vsyncpa [#allocation11], 0
    %s16 = scalar_lea.sflag [#allocation11], 1
    %17 = vsyncpa %s16, 0
    loop: start=0, step=1, limit=6
    $region2: #{tpu_custom_call.1} parent=1 // loop_pre_header
      _
    $region3: #{tpu_custom_call.1} parent=1 // loop_header
      %s19 = sphi 0, %s23
      %p20 = scmp.ge.s32.totalorder %s19, 6
      %s26 = sphi 0, %s38
      %s27 = sphi 0, %s34
      %s28 = sphi 0, %s26
      %s29 = sphi 0, %s27
      %s30 = sphi 0, %s28
      %s31 = sphi 0, %s29
      %s39 = sphi 0, %s39
      %s41 = sphi 0, %s39
      %s42 = sphi 0, %s41
      %s56 = sphi 0, %s42
      %s60 = sphi 0, %s60
      %s62 = sphi 0, %s60
      %s63 = sphi 0, %s62
      %s77 = sphi 0, %s63
      %s87 = sphi 0, %s89
      %s90 = sphi 0, %s87
      %s91 = sphi 0, %s90
      %s107 = sphi 0, %s91
      %s113 = sphi 0, %s115
      %s116 = sphi 0, %s113
      %s117 = sphi 0, %s116
      %s133 = sphi 0, %s117
      %s139 = sphi 0, %s141
      %s142 = sphi 0, %s139
      %s143 = sphi 0, %s142
      %s159 = sphi 0, %s143
    $region4: #{tpu_custom_call.1} parent=1 // loop_header_branch
      %22 = sbr.rel (%p20) target = $region8
    $region5: #{tpu_custom_call.1} parent=1 // loop_body
      %s24 = ssub.s32 %s19, 1
      %s25 = ssub.s32 %s19, 2
      %s32 = sadd.s32 1, %s27
      %p33 = scmp.ge.s32.totalorder %s32, 2
      %s34 = scalar_select %p33, 0, %s32
      %s35 = sadd.s32 1, %s26
      %s36 = scalar_select %p33, %s35, %s26
      %p37 = scmp.ge.s32.totalorder %s36, 2
      %s38 = scalar_select %p37, 0, %s36
      %s40 = sadd.s32 %s39, 1
      %p43 = scmp.eq.s32.totalorder %s19, 3
      %p44 = scmp.ne.s32.totalorder %s39, %s41
      %p45 = scmp.eq.s32.totalorder %s19, 0
      %p46 = por %p44, %p45
      %p47 = scmp.ne.s32.totalorder %s39, %s41
      %p48 = scmp.eq.s32.totalorder %s24, 3
      %p49 = por %p47, %p48
      %p50 = scmp.ne.s32.totalorder %s41, %s42
      %p51 = scmp.eq.s32.totalorder %s24, 0
      %p52 = por %p50, %p51
      %p53 = scmp.ne.s32.totalorder %s41, %s42
      %p54 = scmp.eq.s32.totalorder %s25, 3
      %p55 = por %p53, %p54
      %p57 = scmp.ne.s32.totalorder %s42, %s56
      %p58 = scmp.eq.s32.totalorder %s25, 0
      %p59 = por %p57, %p58
      %s61 = sadd.s32 %s60, 1
      %p64 = scmp.eq.s32.totalorder %s19, 3
      %p65 = scmp.ne.s32.totalorder %s60, %s62
      %p66 = scmp.eq.s32.totalorder %s19, 0
      %p67 = por %p65, %p66
      %p68 = scmp.ne.s32.totalorder %s60, %s62
      %p69 = scmp.eq.s32.totalorder %s24, 3
      %p70 = por %p68, %p69
      %p71 = scmp.ne.s32.totalorder %s62, %s63
      %p72 = scmp.eq.s32.totalorder %s24, 0
      %p73 = por %p71, %p72
      %p74 = scmp.ne.s32.totalorder %s62, %s63
      %p75 = scmp.eq.s32.totalorder %s25, 3
      %p76 = por %p74, %p75
      %p78 = scmp.ne.s32.totalorder %s63, %s77
      %p79 = scmp.eq.s32.totalorder %s25, 0
      %p80 = por %p78, %p79
      %s81 = smul.u32 %s26, 2
      %s82 = sadd.s32 %s81, %s27
      %s83 = smul.u32 %s38, 2
      %s84 = sadd.s32 %s83, %s34
      %s85 = ssub.s32 %s82, %s84
      %p86 = scmp.eq.s32.totalorder %s85, 0
      %s88 = sadd.s32 %s87, 1
      %s89 = scalar_select %p86, %s87, %s88
      %p92 = pneg %p86
      %p93 = scmp.eq.s32.totalorder %s19, 3
      %p94 = por %p92, %p93
      %p95 = scmp.ne.s32.totalorder %s87, %s90
      %p96 = scmp.eq.s32.totalorder %s19, 0
      %p97 = por %p95, %p96
      %p98 = scmp.ne.s32.totalorder %s87, %s90
      %p99 = scmp.eq.s32.totalorder %s24, 3
      %p100 = por %p98, %p99
      %p101 = scmp.ne.s32.totalorder %s90, %s91
      %p102 = scmp.eq.s32.totalorder %s24, 0
      %p103 = por %p101, %p102
      %p104 = scmp.ne.s32.totalorder %s90, %s91
      %p105 = scmp.eq.s32.totalorder %s25, 3
      %p106 = por %p104, %p105
      %p108 = scmp.ne.s32.totalorder %s91, %s107
      %p109 = scmp.eq.s32.totalorder %s25, 0
      %p110 = por %p108, %p109
      %s111 = ssub.s32 %s26, %s38
      %p112 = scmp.eq.s32.totalorder %s111, 0
      %s114 = sadd.s32 %s113, 1
      %s115 = scalar_select %p112, %s113, %s114
      %p118 = pneg %p112
      %p119 = scmp.eq.s32.totalorder %s19, 3
      %p120 = por %p118, %p119
      %p121 = scmp.ne.s32.totalorder %s113, %s116
      %p122 = scmp.eq.s32.totalorder %s19, 0
      %p123 = por %p121, %p122
      %p124 = scmp.ne.s32.totalorder %s113, %s116
      %p125 = scmp.eq.s32.totalorder %s24, 3
      %p126 = por %p124, %p125
      %p127 = scmp.ne.s32.totalorder %s116, %s117
      %p128 = scmp.eq.s32.totalorder %s24, 0
      %p129 = por %p127, %p128
      %p130 = scmp.ne.s32.totalorder %s116, %s117
      %p131 = scmp.eq.s32.totalorder %s25, 3
      %p132 = por %p130, %p131
      %p134 = scmp.ne.s32.totalorder %s117, %s133
      %p135 = scmp.eq.s32.totalorder %s25, 0
      %p136 = por %p134, %p135
      %s137 = ssub.s32 %s26, %s38
      %p138 = scmp.eq.s32.totalorder %s137, 0
      %s140 = sadd.s32 %s139, 1
      %s141 = scalar_select %p138, %s139, %s140
      %p144 = pneg %p138
      %p145 = scmp.eq.s32.totalorder %s19, 3
      %p146 = por %p144, %p145
      %p147 = scmp.ne.s32.totalorder %s139, %s142
      %p148 = scmp.eq.s32.totalorder %s19, 0
      %p149 = por %p147, %p148
      %p150 = scmp.ne.s32.totalorder %s139, %s142
      %p151 = scmp.eq.s32.totalorder %s24, 3
      %p152 = por %p150, %p151
      %p153 = scmp.ne.s32.totalorder %s142, %s143
      %p154 = scmp.eq.s32.totalorder %s24, 0
      %p155 = por %p153, %p154
      %p156 = scmp.ne.s32.totalorder %s142, %s143
      %p157 = scmp.eq.s32.totalorder %s25, 3
      %p158 = por %p156, %p157
      %p160 = scmp.ne.s32.totalorder %s143, %s159
      %p161 = scmp.eq.s32.totalorder %s25, 0
      %p162 = por %p160, %p161
      %p163 = scmp.le.s32.totalorder 1, %s19
      %p164 = scmp.lt.s32.totalorder %s19, 5
      %p165 = pnand %p163, %p164
      %p166 = pneg %p165
      // Predicated region
      $region9: #{tpu_custom_call.1} parent=5 // pred_check
        _
      $region10: #{tpu_custom_call.1} parent=5 // pred_check_branch
        %168 = sbr.rel (%p165) target = $region12
      $region11: #{tpu_custom_call.1} parent=5 // pred_region
        %s169 = ssub.s32 %s19, 1
        // Predicated region
        $region13: #{tpu_custom_call.1} parent=11 // pred_check
          %p170 = pneg %p52
        $region14: #{tpu_custom_call.1} parent=11 // pred_check_branch
          %172 = sbr.rel (%p170) target = $region16
        $region15: #{tpu_custom_call.1} parent=11 // pred_region
          %174 = vsyncadd [#allocation4], 0
          %s176 = sshll.u32 %s0, 4
          %s177 = int_to_ptr.hbm [resolvable:$true] %s176
          %s178 = sshll.u32 [#allocation3], 4
          %s179 = int_to_ptr.vmem [resolvable:$true] %s178
          %181 = dma.hbm_to_vmem [thread:$0]  %s177, 32, %s179, [#allocation4]
        $region16: #{tpu_custom_call.1} parent=11 // pred_fallthru
          _
        // Predicated region
        $region17: #{tpu_custom_call.1} parent=11 // pred_check
          %p182 = pneg %p73
        $region18: #{tpu_custom_call.1} parent=11 // pred_check_branch
          %184 = sbr.rel (%p182) target = $region20
        $region19: #{tpu_custom_call.1} parent=11 // pred_region
          %186 = vsyncadd [#allocation7], 0
          %s188 = sshll.u32 %s1, 4
          %s189 = int_to_ptr.hbm [resolvable:$true] %s188
          %s190 = sshll.u32 [#allocation6], 4
          %s191 = int_to_ptr.vmem [resolvable:$true] %s190
          %193 = dma.hbm_to_vmem [thread:$0]  %s189, 32, %s191, [#allocation7]
        $region20: #{tpu_custom_call.1} parent=11 // pred_fallthru
          _
      $region12: #{tpu_custom_call.1} parent=5 // pred_fallthru
        _
      %p194 = scmp.lt.s32.totalorder %s19, 4
      // Predicated region
      $region21: #{tpu_custom_call.1} parent=5 // pred_check
        %p195 = pneg %p194
      $region22: #{tpu_custom_call.1} parent=5 // pred_check_branch
        %197 = sbr.rel (%p195) target = $region24
      $region23: #{tpu_custom_call.1} parent=5 // pred_region
        // Predicated region
        $region25: #{tpu_custom_call.1} parent=23 // pred_check
          %p198 = pneg %p97
        $region26: #{tpu_custom_call.1} parent=23 // pred_check_branch
          %200 = sbr.rel (%p198) target = $region28
        $region27: #{tpu_custom_call.1} parent=23 // pred_region
          %s201 = sand.u32 %s19, 1
          %s202 = scalar_lea.sflag [#allocation4], %s201
          %s203 = sand.u32 %s87, 1
          %s204 = smul.addr %s203, 256
          %s205 = scalar_lea.vmem [#allocation8], %s204
          %s206 = smul.u32 %s26, 2
          %s207 = sadd.s32 %s206, %s27
          %s208 = smul.u32 2, %s207
          %210 = vsyncadd %s202, 0
          %s211 = smul.addr %s208, 4
          %s212 = scalar_lea.hbm %s2, %s211
          %s213 = sshll.u32 %s212, 4
          %s214 = int_to_ptr.hbm [resolvable:$true] %s213
          %s215 = sshll.u32 %s205, 4
          %s216 = int_to_ptr.vmem [resolvable:$true] %s215
          %221 = dma.hbm_to_vmem [thread:$0]  %s214, 4096, %s216, %s202, 512, 128, 8
        $region28: #{tpu_custom_call.1} parent=23 // pred_fallthru
          _
      $region24: #{tpu_custom_call.1} parent=5 // pred_fallthru
        _
      %p222 = scmp.le.s32.totalorder 1, %s19
      %p223 = scmp.lt.s32.totalorder %s19, 5
      %p224 = pnand %p222, %p223
      %p225 = pneg %p224
      // Predicated region
      $region29: #{tpu_custom_call.1} parent=5 // pred_check
        _
      $region30: #{tpu_custom_call.1} parent=5 // pred_check_branch
        %227 = sbr.rel (%p224) target = $region32
      $region31: #{tpu_custom_call.1} parent=5 // pred_region
        %s228 = ssub.s32 %s19, 1
        // Predicated region
        $region33: #{tpu_custom_call.1} parent=31 // pred_check
          %p229 = pneg %p52
        $region34: #{tpu_custom_call.1} parent=31 // pred_check_branch
          %231 = sbr.rel (%p229) target = $region36
        $region35: #{tpu_custom_call.1} parent=31 // pred_region
          %233 = dma.done [#allocation4], 32
        $region36: #{tpu_custom_call.1} parent=31 // pred_fallthru
          _
        // Predicated region
        $region37: #{tpu_custom_call.1} parent=31 // pred_check
          %p234 = pneg %p73
        $region38: #{tpu_custom_call.1} parent=31 // pred_check_branch
          %236 = sbr.rel (%p234) target = $region40
        $region39: #{tpu_custom_call.1} parent=31 // pred_region
          %238 = dma.done [#allocation7], 32
        $region40: #{tpu_custom_call.1} parent=31 // pred_fallthru
          _
        %s239 = sand.u32 %s24, 1
        %s240 = scalar_lea.sflag [#allocation4], %s239
        %s241 = sand.u32 %s90, 1
        %s242 = smul.addr %s241, 256
        %s243 = scalar_lea.vmem [#allocation8], %s242
        // Predicated region
        $region41: #{tpu_custom_call.1} parent=31 // pred_check
          %p244 = pneg %p103
        $region42: #{tpu_custom_call.1} parent=31 // pred_check_branch
          %246 = sbr.rel (%p244) target = $region44
        $region43: #{tpu_custom_call.1} parent=31 // pred_region
          %248 = dma.done %s240, 4096
        $region44: #{tpu_custom_call.1} parent=31 // pred_fallthru
          _
        %p249 = pneg %p52
        %p250 = pneg %p49
        %p251 = pneg %p73
        %p252 = pneg %p70
        %s253 = sand.u32 %s24, 1
        %s254 = scalar_lea.sflag [#allocation4], %s253
        %s255 = sand.u32 %s90, 1
        %s256 = smul.addr %s255, 256
        %s257 = scalar_lea.vmem [#allocation8], %s256
        %p258 = pneg %p103
        %p259 = pneg %p100
        %p260 = pneg %p129
        %p261 = pneg %p126
        %s262 = sand.u32 %s116, 1
        %s263 = scalar_lea.sflag [#allocation5], %s262
        %s264 = sand.u32 %s116, 1
        %s265 = smul.addr %s264, 2
        %s266 = scalar_lea.vmem [#allocation9], %s265
        %p267 = pneg %p155
        %p268 = pneg %p152
        %s269 = sand.u32 %s142, 1
        %s270 = scalar_lea.sflag [#allocation11], %s269
        %s271 = sand.u32 %s142, 1
        %s272 = smul.addr %s271, 2
        %s273 = scalar_lea.vmem [#allocation10], %s272
        %s274 = smul.u32 %s28, 2
        %s275 = sadd.s32 %s274, %s29
        %s276 = smul.u32 2, %s275
        %p277 = scmp.eq.s32.totalorder %s29, 0
        // Predicated region
        $region45: #{tpu_custom_call.1} parent=31 // pred_check
          %p278 = pneg %p277
        $region46: #{tpu_custom_call.1} parent=31 // pred_check_branch
          %280 = sbr.rel (%p278) target = $region48
        $region47: #{tpu_custom_call.1} parent=31 // pred_region
          %v281 = vld [vmem:[#allocation3] sm:$0x3]
          %v282 = vunpack.c.l.bf16 %v281
          %v283 = vmul.f32 %v282, %v282
          %285 = vst [vmem:[#allocation1] ss:$4 sm:$0xff] %v283
          %v286 = vld.sshfl [vmem:[#allocation1] sm:$0xff pattern:$0x73625140]
          %v287 = vld.sshfl [vmem:[#allocation1 + $0x8] sm:$0xff pattern:$0x73625140]
          %vm290 = vcmask 1041408
          %v291 = vsel %vm290, %v286, 0.0
          %v292 = vsel %vm290, %v287, 0.0
          %v293 = vadd.f32 %v291, %v292
          %294 = vadd.xlane.f32.xlu0 %v293
          %v295 = vpop.xlane.xlu0 %294
          %v296 = vrcp.pop 256.0
          %v297 = vmul.f32 256.0, %v296
          %v298 = vsub.f32 1.0, %v297
          %v299 = vmul.f32 %v296, %v298
          %v300 = vadd.f32 %v296, %v299
          %vm301 = vweird.f32 %v296
          %v302 = vsel %vm301, %v296, %v300
          %v303 = vmul.f32 %v295, %v302
          %v304 = vadd.f32 %v303, 1e-06
          %v305 = vrsqrt.pop %v304
          %v306 = vmul.f32 %v305, %v304
          %v307 = vmul.f32 %v306, %v305
          %v308 = vmul.f32 0.5, %v307
          %v309 = vsub.f32 1.5, %v308
          %v310 = vmul.f32 %v305, %v309
          %vm311 = vweird.f32 %v304
          %vm312 = vweird.f32 %v305
          %vm313 = vmor %vm311, %vm312
          %v314 = vsel %vm313, %v305, %v310
          %v317 = vunpack.c.l.s4 269488144
          %v318 = vunpack.c.0.s8 %v317
          %v319 = vperm.slane %v314, %v318
          %v321 = vmul.f32 %v282, %v319
          %v322 = vld [vmem:[#allocation6] sm:$0x3]
          %v323 = vunpack.c.l.bf16 %v322
          %v325 = vperm.slane %v323, 0
          %v326 = vperm.slane %v323, 2
          %v329 = vperm.slane %v325, 0
          %v330 = vperm.slane %v326, 0
          %v333 = vrot.slane %v330, 6
          %v334 = vsel %vm290, %v329, %v333
          %v336 = vmul.f32 %v321, %v334
          %338 = vst [vmem:[#allocation1] ss:$4 sm:$0xff] %v336
          %v339 = vld.sshfl [vmem:[#allocation1] sm:$0xff pattern:$0x73625140]
          %v340 = vld.sshfl [vmem:[#allocation1 + $0x8] sm:$0xff pattern:$0x73625140]
          %v343 = vpack.c.bf16 %v340, %v339
          %v345 = vrot.slane %v343, 3
          %vm346 = vcmask 1040384
          %v349 = vsel %vm346, %v343, %v345
          %351 = vst [vmem:[#allocation2] sm:$0x3] %v349
          %352 = vst [vmem:[%s266] sm:$0x3] -inf
          %353 = vst [vmem:[%s273] sm:$0x3] 1073741824
        $region48: #{tpu_custom_call.1} parent=31 // pred_fallthru
          _
        %v354 = vld [vmem:[#allocation2] sm:$0x3]
        %v355 = vld [vmem:[%s243] sm:$0xff]
        %v356 = vld [vmem:[%s243 + $0x8] sm:$0xff]
        %v357 = vld [vmem:[%s243 + $0x10] sm:$0xff]
        %v358 = vld [vmem:[%s243 + $0x18] sm:$0xff]
        %v359 = vld [vmem:[%s243 + $0x20] sm:$0xff]
        %v360 = vld [vmem:[%s243 + $0x28] sm:$0xff]
        %v361 = vld [vmem:[%s243 + $0x30] sm:$0xff]
        %v362 = vld [vmem:[%s243 + $0x38] sm:$0xff]
        %v363 = vld [vmem:[%s243 + $0x40] sm:$0xff]
        %v364 = vld [vmem:[%s243 + $0x48] sm:$0xff]
        %v365 = vld [vmem:[%s243 + $0x50] sm:$0xff]
        %v366 = vld [vmem:[%s243 + $0x58] sm:$0xff]
        %v367 = vld [vmem:[%s243 + $0x60] sm:$0xff]
        %v368 = vld [vmem:[%s243 + $0x68] sm:$0xff]
        %v369 = vld [vmem:[%s243 + $0x70] sm:$0xff]
        %v370 = vld [vmem:[%s243 + $0x78] sm:$0xff]
        %v371 = vld [vmem:[%s243 + $0x80] sm:$0xff]
        %v372 = vld [vmem:[%s243 + $0x88] sm:$0xff]
        %v373 = vld [vmem:[%s243 + $0x90] sm:$0xff]
        %v374 = vld [vmem:[%s243 + $0x98] sm:$0xff]
        %v375 = vld [vmem:[%s243 + $0xa0] sm:$0xff]
        %v376 = vld [vmem:[%s243 + $0xa8] sm:$0xff]
        %v377 = vld [vmem:[%s243 + $0xb0] sm:$0xff]
        %v378 = vld [vmem:[%s243 + $0xb8] sm:$0xff]
        %v379 = vld [vmem:[%s243 + $0xc0] sm:$0xff]
        %v380 = vld [vmem:[%s243 + $0xc8] sm:$0xff]
        %v381 = vld [vmem:[%s243 + $0xd0] sm:$0xff]
        %v382 = vld [vmem:[%s243 + $0xd8] sm:$0xff]
        %v383 = vld [vmem:[%s243 + $0xe0] sm:$0xff]
        %v384 = vld [vmem:[%s243 + $0xe8] sm:$0xff]
        %v385 = vld [vmem:[%s243 + $0xf0] sm:$0xff]
        %v386 = vld [vmem:[%s243 + $0xf8] sm:$0xff]
        %388 = vst [vmem:[#allocation1] ss:$9 sm:$0xff] %v354
        %v389 = vld [vmem:[#allocation1] sm:$0xff]
        %v390 = vld [vmem:[#allocation1 + $0x9] sm:$0xff]
        %v425 = vunpack.c.l.b16 %v355
        %v426 = vunpack.c.h.b16 %v355
        %v427 = vunpack.c.l.b16 %v356
        %v428 = vunpack.c.h.b16 %v356
        %v429 = vunpack.c.l.b16 %v357
        %v430 = vunpack.c.h.b16 %v357
        %v431 = vunpack.c.l.b16 %v358
        %v432 = vunpack.c.h.b16 %v358
        %v433 = vunpack.c.l.b16 %v359
        %v434 = vunpack.c.h.b16 %v359
        %v435 = vunpack.c.l.b16 %v360
        %v436 = vunpack.c.h.b16 %v360
        %v437 = vunpack.c.l.b16 %v361
        %v438 = vunpack.c.h.b16 %v361
        %v439 = vunpack.c.l.b16 %v362
        %v440 = vunpack.c.h.b16 %v362
        %v441 = vunpack.c.l.b16 %v363
        %v442 = vunpack.c.h.b16 %v363
        %v443 = vunpack.c.l.b16 %v364
        %v444 = vunpack.c.h.b16 %v364
        %v445 = vunpack.c.l.b16 %v365
        %v446 = vunpack.c.h.b16 %v365
        %v447 = vunpack.c.l.b16 %v366
        %v448 = vunpack.c.h.b16 %v366
        %v449 = vunpack.c.l.b16 %v367
        %v450 = vunpack.c.h.b16 %v367
        %v451 = vunpack.c.l.b16 %v368
        %v452 = vunpack.c.h.b16 %v368
        %v453 = vunpack.c.l.b16 %v369
        %v454 = vunpack.c.h.b16 %v369
        %v455 = vunpack.c.l.b16 %v370
        %v456 = vunpack.c.h.b16 %v370
        %v457 = vunpack.c.l.b16 %v371
        %v458 = vunpack.c.h.b16 %v371
        %v459 = vunpack.c.l.b16 %v372
        %v460 = vunpack.c.h.b16 %v372
        %v461 = vunpack.c.l.b16 %v373
        %v462 = vunpack.c.h.b16 %v373
        %v463 = vunpack.c.l.b16 %v374
        %v464 = vunpack.c.h.b16 %v374
        %v465 = vunpack.c.l.b16 %v375
        %v466 = vunpack.c.h.b16 %v375
        %v467 = vunpack.c.l.b16 %v376
        %v468 = vunpack.c.h.b16 %v376
        %v469 = vunpack.c.l.b16 %v377
        %v470 = vunpack.c.h.b16 %v377
        %v471 = vunpack.c.l.b16 %v378
        %v472 = vunpack.c.h.b16 %v378
        %v473 = vunpack.c.l.b16 %v379
        %v474 = vunpack.c.h.b16 %v379
        %v475 = vunpack.c.l.b16 %v380
        %v476 = vunpack.c.h.b16 %v380
        %v477 = vunpack.c.l.b16 %v381
        %v478 = vunpack.c.h.b16 %v381
        %v479 = vunpack.c.l.b16 %v382
        %v480 = vunpack.c.h.b16 %v382
        %v481 = vunpack.c.l.b16 %v383
        %v482 = vunpack.c.h.b16 %v383
        %v483 = vunpack.c.l.b16 %v384
        %v484 = vunpack.c.h.b16 %v384
        %v485 = vunpack.c.l.b16 %v385
        %v486 = vunpack.c.h.b16 %v385
        %v487 = vunpack.c.l.b16 %v386
        %v488 = vunpack.c.h.b16 %v386
        %v489 = vpack.c.b16 %v427, %v425
        %v490 = vpack.c.b16 %v428, %v426
        %v491 = vpack.c.b16 %v431, %v429
        %v492 = vpack.c.b16 %v432, %v430
        %v493 = vpack.c.b16 %v435, %v433
        %v494 = vpack.c.b16 %v436, %v434
        %v495 = vpack.c.b16 %v439, %v437
        %v496 = vpack.c.b16 %v440, %v438
        %v497 = vpack.c.b16 %v443, %v441
        %v498 = vpack.c.b16 %v444, %v442
        %v499 = vpack.c.b16 %v447, %v445
        %v500 = vpack.c.b16 %v448, %v446
        %v501 = vpack.c.b16 %v451, %v449
        %v502 = vpack.c.b16 %v452, %v450
        %v503 = vpack.c.b16 %v455, %v453
        %v504 = vpack.c.b16 %v456, %v454
        %v505 = vpack.c.b16 %v459, %v457
        %v506 = vpack.c.b16 %v460, %v458
        %v507 = vpack.c.b16 %v463, %v461
        %v508 = vpack.c.b16 %v464, %v462
        %v509 = vpack.c.b16 %v467, %v465
        %v510 = vpack.c.b16 %v468, %v466
        %v511 = vpack.c.b16 %v471, %v469
        %v512 = vpack.c.b16 %v472, %v470
        %v513 = vpack.c.b16 %v475, %v473
        %v514 = vpack.c.b16 %v476, %v474
        %v515 = vpack.c.b16 %v479, %v477
        %v516 = vpack.c.b16 %v480, %v478
        %v517 = vpack.c.b16 %v483, %v481
        %v518 = vpack.c.b16 %v484, %v482
        %v519 = vpack.c.b16 %v487, %v485
        %v520 = vpack.c.b16 %v488, %v486
        %553 = vmatpush.bf16.msra.mxu0 %v503
        %554 = vmatpush.bf16.msra.mxu0 %v501
        %555 = vmatpush.bf16.msra.mxu0 %v499
        %556 = vmatpush.bf16.msra.mxu0 %v497
        %557 = vmatpush.bf16.msra.mxu0 %v495
        %558 = vmatpush.bf16.msra.mxu0 %v493
        %559 = vmatpush.bf16.msra.mxu0 %v491
        %560 = vmatpush.bf16.msra.mxu0 %v489
        %561 = vmatmul.bf16.gmra.mxu0 %v389
        %v562 = vpop.f32.mrf.mxu0
        %v563 = vadd.f32 0.0, %v562
        %v564 = vpop.f32.mrf.mxu0
        %565 = vdwg.mxu0
        %566 = vmatpush.bf16.msra.mxu0 %v519
        %567 = vmatpush.bf16.msra.mxu0 %v517
        %568 = vmatpush.bf16.msra.mxu0 %v515
        %569 = vmatpush.bf16.msra.mxu0 %v513
        %570 = vmatpush.bf16.msra.mxu0 %v511
        %571 = vmatpush.bf16.msra.mxu0 %v509
        %572 = vmatpush.bf16.msra.mxu0 %v507
        %573 = vmatpush.bf16.msra.mxu0 %v505
        %574 = vmatmul.bf16.gmra.mxu0 %v390
        %v575 = vpop.f32.mrf.mxu0
        %v576 = vadd.f32 %v563, %v575
        %v577 = vpop.f32.mrf.mxu0
        %578 = vdwg.mxu0
        %579 = vmatpush.bf16.msra.mxu0 %v504
        %580 = vmatpush.bf16.msra.mxu0 %v502
        %581 = vmatpush.bf16.msra.mxu0 %v500
        %582 = vmatpush.bf16.msra.mxu0 %v498
        %583 = vmatpush.bf16.msra.mxu0 %v496
        %584 = vmatpush.bf16.msra.mxu0 %v494
        %585 = vmatpush.bf16.msra.mxu0 %v492
        %586 = vmatpush.bf16.msra.mxu0 %v490
        %587 = vmatmul.bf16.gmra.mxu0 %v389
        %v588 = vpop.f32.mrf.mxu0
        %v589 = vadd.f32 0.0, %v588
        %v590 = vpop.f32.mrf.mxu0
        %591 = vdwg.mxu0
        %592 = vmatpush.bf16.msra.mxu0 %v520
        %593 = vmatpush.bf16.msra.mxu0 %v518
        %594 = vmatpush.bf16.msra.mxu0 %v516
        %595 = vmatpush.bf16.msra.mxu0 %v514
        %596 = vmatpush.bf16.msra.mxu0 %v512
        %597 = vmatpush.bf16.msra.mxu0 %v510
        %598 = vmatpush.bf16.msra.mxu0 %v508
        %599 = vmatpush.bf16.msra.mxu0 %v506
        %600 = vmatmul.bf16.gmra.mxu0 %v390
        %v601 = vpop.f32.mrf.mxu0
        %v602 = vadd.f32 %v589, %v601
        %v603 = vpop.f32.mrf.mxu0
        %604 = vdwg.mxu0
        %s605 = smul.u32 %s28, 2
        %s606 = sadd.s32 %s605, %s29
        %s607 = smul.u32 %s606, 256
        %v608 = vlaneseq
        %v609 = vand.u32 %v608, 127
        %v610 = vadd.s32 %v609, 128
        %v611 = vstv %s607
        %v612 = vadd.s32 %v611, %v609
        %v613 = vadd.s32 %v611, %v610
        %vm614 = vcmp.lt.s32.totalorder %v612, 1000
        %vm615 = vcmp.lt.s32.totalorder %v613, 1000
        %v616 = vsel %vm614, 1, 0
        %v617 = vsel %vm615, 1, 0
        %vm618 = vcmp.eq.s32.totalorder %v616, 1
        %vm619 = vcmp.eq.s32.totalorder %v617, 1
        %v620 = vsel %vm618, %v576, -inf
        %v621 = vsel %vm619, %v602, -inf
        %v622 = vld [vmem:[%s266] sm:$0x3]
        %vm623 = vcmask 1041408
        %v624 = vsel %vm623, %v620, -inf
        %v625 = vsel %vm623, %v621, -inf
        %v626 = vmax.f32 %v624, %v625
        %627 = vmax.xlane.f32.xlu0 %v626
        %v628 = vpop.xlane.xlu0 %627
        %vm629 = vcmp.gt.f32.partialorder %v628, %v622
        %v630 = vsel %vm629, 1.0, 0.0
        %vm631 = vcmask 58424
        %v632 = vsel %vm631, %v630, -inf
        %633 = vmax.xlane.f32.xlu0 %v632
        %v634 = vpop.xlane.xlu0 %633
        %v635 = vrot.slane %v634, 4
        %v636 = vmax.f32 %v634, %v635
        %v637 = vrot.slane %v636, 2
        %v638 = vmax.f32 %v636, %v637
        %v639 = vrot.slane %v638, 1
        %v640 = vmax.f32 %v638, %v639
        %s641 = vtos %v640
        %p642 = scmp.gt.f32.partialorder %s641, 0.0
        // Predicated region
        $region49: #{tpu_custom_call.1} parent=31 // pred_check
          %p643 = pneg %p642
        $region50: #{tpu_custom_call.1} parent=31 // pred_check_branch
          %645 = sbr.rel (%p643) target = $region52
        $region51: #{tpu_custom_call.1} parent=31 // pred_region
          %v646 = vld [vmem:[%s273] sm:$0x3]
          // While loop
          $region53: #{tpu_custom_call.1} parent=51 // loop_pre_header
            _
          $region54: #{tpu_custom_call.1} parent=51 // loop_header
            %s648 = sphi 0, %s704
            %v649 = vphi %v628, %v709
            %v650 = vphi %v620, %v702
            %v651 = vphi %v621, %v703
            %v652 = vphi -inf, %v698
            %v653 = vphi 1073741824, %v699
            %p654 = scmp.lt.s32.totalorder %s648, 8
            %vm655 = vcmp.gt.f32.partialorder %v649, %v622
            %v656 = vsel %vm655, 1.0, 0.0
            %v657 = vsel %vm631, %v656, -inf
            %658 = vmax.xlane.f32.xlu0 %v657
            %v659 = vpop.xlane.xlu0 %658
            %v660 = vrot.slane %v659, 4
            %v661 = vmax.f32 %v659, %v660
            %v662 = vrot.slane %v661, 2
            %v663 = vmax.f32 %v661, %v662
            %v664 = vrot.slane %v663, 1
            %v665 = vmax.f32 %v663, %v664
            %s666 = vtos %v665
            %p667 = scmp.gt.f32.partialorder %s666, 0.0
            %p668 = pnand %p654, %p667
            %p669 = pneg %p668
          $region55: #{tpu_custom_call.1} parent=51 // loop_header_branch
            %671 = sbr.rel (%p668) target = $region59
          $region56: #{tpu_custom_call.1} parent=51 // loop_body
            %vm672 = vcmp.eq.f32.partialorder %v650, %v649
            %vm673 = vcmp.eq.f32.partialorder %v651, %v649
            %v674 = vsel %vm672, %v612, 1073741824
            %v675 = vsel %vm673, %v613, 1073741824
            %v676 = vsel %vm623, %v674, 2147483647
            %v677 = vsel %vm623, %v675, 2147483647
            %vm678 = vcmp.lt.s32.totalorder %v676, %v677
            %v679 = vsel %vm678, %v676, %v677
            %v680 = vand.u32 %v679, 65535
            %v681 = vshra.s32 %v679, 16
            %v682 = vcvt.s32.f32 %v680
            %v683 = vcvt.s32.f32 %v681
            %684 = vmin.xlane.f32.xlu0 %v683
            %v685 = vpop.xlane.xlu0 %684
            %vm686 = vcmp.eq.f32.partialorder %v683, %v685
            %v687 = vsel %vm686, %v682, inf
            %688 = vmin.xlane.f32.xlu0 %v687
            %v689 = vpop.xlane.xlu0 %688
            %v690 = vcvt.f32.s32 %v689
            %v691 = vcvt.f32.s32 %v685
            %v692 = vshll.u32 %v691, 16
            %v693 = vadd.s32 %v692, %v690
            %v694 = vstv %s648
            %vm695 = vcmp.eq.s32.totalorder %v609, %v694
            %v696 = vsel %vm695, 1, 0
            %vm697 = vcmp.eq.s32.totalorder %v696, 1
            %v698 = vsel %vm697, %v649, %v652
            %v699 = vsel %vm697, %v693, %v653
            %vm700 = vcmp.eq.s32.totalorder %v612, %v693
            %vm701 = vcmp.eq.s32.totalorder %v613, %v693
            %v702 = vsel %vm700, -inf, %v650
            %v703 = vsel %vm701, -inf, %v651
            %s704 = sadd.s32 %s648, 1
            %v705 = vsel %vm623, %v702, -inf
            %v706 = vsel %vm623, %v703, -inf
            %v707 = vmax.f32 %v705, %v706
            %708 = vmax.xlane.f32.xlu0 %v707
            %v709 = vpop.xlane.xlu0 %708
          $region57: #{tpu_custom_call.1} parent=51 // loop_footer
            _
          $region58: #{tpu_custom_call.1} parent=51 // loop_footer_branch
            %647 = sbr.rel target = $region54
          $region59: #{tpu_custom_call.1} parent=51 // loop_exit
            _
          %v711 = vrot.slane %v652, 1
          %v712 = vperm.slane %v622, 0
          %v713 = vlaneseq
          %v714 = vshrl.u32 %v713, 7
          %716 = vset.pattern.permute.xlu0 %v714
          %717 = vperm.xlu0 %716, %v712
          %v718 = vpop.permute.xlu0 %717
          %v719 = vlaneseq
          %v720 = vshrl.u32 %v719, 7
          %v721 = vadd.s32 %v720, 8
          %722 = vset.pattern.permute.xlu0 %v721
          %723 = vperm.xlu0 %722, %v712
          %v724 = vpop.permute.xlu0 %723
          %v725 = vlaneseq
          %v726 = vshrl.u32 %v725, 7
          %v727 = vadd.s32 %v726, 16
          %728 = vset.pattern.permute.xlu0 %v727
          %729 = vperm.xlu0 %728, %v712
          %v730 = vpop.permute.xlu0 %729
          %v731 = vlaneseq
          %v732 = vshrl.u32 %v731, 7
          %v733 = vadd.s32 %v732, 24
          %734 = vset.pattern.permute.xlu0 %v733
          %735 = vperm.xlu0 %734, %v712
          %v736 = vpop.permute.xlu0 %735
          %v737 = vlaneseq
          %v738 = vshrl.u32 %v737, 7
          %v739 = vadd.s32 %v738, 32
          %740 = vset.pattern.permute.xlu0 %v739
          %741 = vperm.xlu0 %740, %v712
          %v742 = vpop.permute.xlu0 %741
          %v743 = vlaneseq
          %v744 = vshrl.u32 %v743, 7
          %v745 = vadd.s32 %v744, 40
          %746 = vset.pattern.permute.xlu0 %v745
          %747 = vperm.xlu0 %746, %v712
          %v748 = vpop.permute.xlu0 %747
          %v749 = vlaneseq
          %v750 = vshrl.u32 %v749, 7
          %v751 = vadd.s32 %v750, 48
          %752 = vset.pattern.permute.xlu0 %v751
          %753 = vperm.xlu0 %752, %v712
          %v754 = vpop.permute.xlu0 %753
          %v755 = vlaneseq
          %v756 = vshrl.u32 %v755, 7
          %v757 = vadd.s32 %v756, 56
          %758 = vset.pattern.permute.xlu0 %v757
          %759 = vperm.xlu0 %758, %v712
          %v760 = vpop.permute.xlu0 %759
          %v761 = vlaneseq
          %v762 = vshrl.u32 %v761, 7
          %v763 = vadd.s32 %v762, 64
          %764 = vset.pattern.permute.xlu0 %v763
          %765 = vperm.xlu0 %764, %v712
          %v766 = vpop.permute.xlu0 %765
          %v767 = vlaneseq
          %v768 = vshrl.u32 %v767, 7
          %v769 = vadd.s32 %v768, 72
          %770 = vset.pattern.permute.xlu0 %v769
          %771 = vperm.xlu0 %770, %v712
          %v772 = vpop.permute.xlu0 %771
          %v773 = vlaneseq
          %v774 = vshrl.u32 %v773, 7
          %v775 = vadd.s32 %v774, 80
          %776 = vset.pattern.permute.xlu0 %v775
          %777 = vperm.xlu0 %776, %v712
          %v778 = vpop.permute.xlu0 %777
          %v779 = vlaneseq
          %v780 = vshrl.u32 %v779, 7
          %v781 = vadd.s32 %v780, 88
          %782 = vset.pattern.permute.xlu0 %v781
          %783 = vperm.xlu0 %782, %v712
          %v784 = vpop.permute.xlu0 %783
          %v785 = vlaneseq
          %v786 = vshrl.u32 %v785, 7
          %v787 = vadd.s32 %v786, 96
          %788 = vset.pattern.permute.xlu0 %v787
          %789 = vperm.xlu0 %788, %v712
          %v790 = vpop.permute.xlu0 %789
          %v791 = vlaneseq
          %v792 = vshrl.u32 %v791, 7
          %v793 = vadd.s32 %v792, 104
          %794 = vset.pattern.permute.xlu0 %v793
          %795 = vperm.xlu0 %794, %v712
          %v796 = vpop.permute.xlu0 %795
          %v797 = vlaneseq
          %v798 = vshrl.u32 %v797, 7
          %v799 = vadd.s32 %v798, 112
          %800 = vset.pattern.permute.xlu0 %v799
          %801 = vperm.xlu0 %800, %v712
          %v802 = vpop.permute.xlu0 %801
          %v803 = vlaneseq
          %v804 = vshrl.u32 %v803, 7
          %v805 = vadd.s32 %v804, 120
          %806 = vset.pattern.permute.xlu0 %v805
          %807 = vperm.xlu0 %806, %v712
          %v808 = vpop.permute.xlu0 %807
          %v809 = vperm.slane %v622, 1
          %v810 = vlaneseq
          %v811 = vshrl.u32 %v810, 7
          %813 = vset.pattern.permute.xlu0 %v811
          %814 = vperm.xlu0 %813, %v809
          %v815 = vpop.permute.xlu0 %814
          %v816 = vlaneseq
          %v817 = vshrl.u32 %v816, 7
          %v818 = vadd.s32 %v817, 8
          %819 = vset.pattern.permute.xlu0 %v818
          %820 = vperm.xlu0 %819, %v809
          %v821 = vpop.permute.xlu0 %820
          %v822 = vlaneseq
          %v823 = vshrl.u32 %v822, 7
          %v824 = vadd.s32 %v823, 16
          %825 = vset.pattern.permute.xlu0 %v824
          %826 = vperm.xlu0 %825, %v809
          %v827 = vpop.permute.xlu0 %826
          %v828 = vlaneseq
          %v829 = vshrl.u32 %v828, 7
          %v830 = vadd.s32 %v829, 24
          %831 = vset.pattern.permute.xlu0 %v830
          %832 = vperm.xlu0 %831, %v809
          %v833 = vpop.permute.xlu0 %832
          %v834 = vlaneseq
          %v835 = vshrl.u32 %v834, 7
          %v836 = vadd.s32 %v835, 32
          %837 = vset.pattern.permute.xlu0 %v836
          %838 = vperm.xlu0 %837, %v809
          %v839 = vpop.permute.xlu0 %838
          %v840 = vlaneseq
          %v841 = vshrl.u32 %v840, 7
          %v842 = vadd.s32 %v841, 40
          %843 = vset.pattern.permute.xlu0 %v842
          %844 = vperm.xlu0 %843, %v809
          %v845 = vpop.permute.xlu0 %844
          %v846 = vlaneseq
          %v847 = vshrl.u32 %v846, 7
          %v848 = vadd.s32 %v847, 48
          %849 = vset.pattern.permute.xlu0 %v848
          %850 = vperm.xlu0 %849, %v809
          %v851 = vpop.permute.xlu0 %850
          %v852 = vlaneseq
          %v853 = vshrl.u32 %v852, 7
          %v854 = vadd.s32 %v853, 56
          %855 = vset.pattern.permute.xlu0 %v854
          %856 = vperm.xlu0 %855, %v809
          %v857 = vpop.permute.xlu0 %856
          %v858 = vlaneseq
          %v859 = vshrl.u32 %v858, 7
          %v860 = vadd.s32 %v859, 64
          %861 = vset.pattern.permute.xlu0 %v860
          %862 = vperm.xlu0 %861, %v809
          %v863 = vpop.permute.xlu0 %862
          %v864 = vlaneseq
          %v865 = vshrl.u32 %v864, 7
          %v866 = vadd.s32 %v865, 72
          %867 = vset.pattern.permute.xlu0 %v866
          %868 = vperm.xlu0 %867, %v809
          %v869 = vpop.permute.xlu0 %868
          %v870 = vlaneseq
          %v871 = vshrl.u32 %v870, 7
          %v872 = vadd.s32 %v871, 80
          %873 = vset.pattern.permute.xlu0 %v872
          %874 = vperm.xlu0 %873, %v809
          %v875 = vpop.permute.xlu0 %874
          %v876 = vlaneseq
          %v877 = vshrl.u32 %v876, 7
          %v878 = vadd.s32 %v877, 88
          %879 = vset.pattern.permute.xlu0 %v878
          %880 = vperm.xlu0 %879, %v809
          %v881 = vpop.permute.xlu0 %880
          %v882 = vlaneseq
          %v883 = vshrl.u32 %v882, 7
          %v884 = vadd.s32 %v883, 96
          %885 = vset.pattern.permute.xlu0 %v884
          %886 = vperm.xlu0 %885, %v809
          %v887 = vpop.permute.xlu0 %886
          %v888 = vlaneseq
          %v889 = vshrl.u32 %v888, 7
          %v890 = vadd.s32 %v889, 104
          %891 = vset.pattern.permute.xlu0 %v890
          %892 = vperm.xlu0 %891, %v809
          %v893 = vpop.permute.xlu0 %892
          %v894 = vlaneseq
          %v895 = vshrl.u32 %v894, 7
          %v896 = vadd.s32 %v895, 112
          %897 = vset.pattern.permute.xlu0 %v896
          %898 = vperm.xlu0 %897, %v809
          %v899 = vpop.permute.xlu0 %898
          %v900 = vlaneseq
          %v901 = vshrl.u32 %v900, 7
          %v902 = vadd.s32 %v901, 120
          %903 = vset.pattern.permute.xlu0 %v902
          %904 = vperm.xlu0 %903, %v809
          %v905 = vpop.permute.xlu0 %904
          %v906 = vperm.slane %v652, 0
          %v907 = vperm.slane %v711, 0
          %vm910 = vcmp.gt.f32.partialorder %v906, %v718
          %vm911 = vcmp.gt.f32.partialorder %v906, %v724
          %vm912 = vcmp.gt.f32.partialorder %v906, %v730
          %vm913 = vcmp.gt.f32.partialorder %v906, %v736
          %vm914 = vcmp.gt.f32.partialorder %v906, %v742
          %vm915 = vcmp.gt.f32.partialorder %v906, %v748
          %vm916 = vcmp.gt.f32.partialorder %v906, %v754
          %vm917 = vcmp.gt.f32.partialorder %v906, %v760
          %vm918 = vcmp.gt.f32.partialorder %v906, %v766
          %vm919 = vcmp.gt.f32.partialorder %v906, %v772
          %vm920 = vcmp.gt.f32.partialorder %v906, %v778
          %vm921 = vcmp.gt.f32.partialorder %v906, %v784
          %vm922 = vcmp.gt.f32.partialorder %v906, %v790
          %vm923 = vcmp.gt.f32.partialorder %v906, %v796
          %vm924 = vcmp.gt.f32.partialorder %v906, %v802
          %vm925 = vcmp.gt.f32.partialorder %v906, %v808
          %vm926 = vcmp.gt.f32.partialorder %v907, %v815
          %vm927 = vcmp.gt.f32.partialorder %v907, %v821
          %vm928 = vcmp.gt.f32.partialorder %v907, %v827
          %vm929 = vcmp.gt.f32.partialorder %v907, %v833
          %vm930 = vcmp.gt.f32.partialorder %v907, %v839
          %vm931 = vcmp.gt.f32.partialorder %v907, %v845
          %vm932 = vcmp.gt.f32.partialorder %v907, %v851
          %vm933 = vcmp.gt.f32.partialorder %v907, %v857
          %vm934 = vcmp.gt.f32.partialorder %v907, %v863
          %vm935 = vcmp.gt.f32.partialorder %v907, %v869
          %vm936 = vcmp.gt.f32.partialorder %v907, %v875
          %vm937 = vcmp.gt.f32.partialorder %v907, %v881
          %vm938 = vcmp.gt.f32.partialorder %v907, %v887
          %vm939 = vcmp.gt.f32.partialorder %v907, %v893
          %vm940 = vcmp.gt.f32.partialorder %v907, %v899
          %vm941 = vcmp.gt.f32.partialorder %v907, %v905
          %v942 = vsel %vm910, 1, 0
          %v943 = vsel %vm911, 1, 0
          %v944 = vsel %vm912, 1, 0
          %v945 = vsel %vm913, 1, 0
          %v946 = vsel %vm914, 1, 0
          %v947 = vsel %vm915, 1, 0
          %v948 = vsel %vm916, 1, 0
          %v949 = vsel %vm917, 1, 0
          %v950 = vsel %vm918, 1, 0
          %v951 = vsel %vm919, 1, 0
          %v952 = vsel %vm920, 1, 0
          %v953 = vsel %vm921, 1, 0
          %v954 = vsel %vm922, 1, 0
          %v955 = vsel %vm923, 1, 0
          %v956 = vsel %vm924, 1, 0
          %v957 = vsel %vm925, 1, 0
          %v958 = vsel %vm926, 1, 0
          %v959 = vsel %vm927, 1, 0
          %v960 = vsel %vm928, 1, 0
          %v961 = vsel %vm929, 1, 0
          %v962 = vsel %vm930, 1, 0
          %v963 = vsel %vm931, 1, 0
          %v964 = vsel %vm932, 1, 0
          %v965 = vsel %vm933, 1, 0
          %v966 = vsel %vm934, 1, 0
          %v967 = vsel %vm935, 1, 0
          %v968 = vsel %vm936, 1, 0
          %v969 = vsel %vm937, 1, 0
          %v970 = vsel %vm938, 1, 0
          %v971 = vsel %vm939, 1, 0
          %v972 = vsel %vm940, 1, 0
          %v973 = vsel %vm941, 1, 0
          %v974 = vand.u32 %v942, 65535
          %v975 = vshrl.u32 %v942, 16
          %v976 = vcvt.s32.f32 %v974
          %v977 = vcvt.s32.f32 %v975
          %978 = vadd.xlane.f32.xlu0 %v976
          %v979 = vpop.xlane.xlu0 %978
          %980 = vadd.xlane.f32.xlu0 %v977
          %v981 = vpop.xlane.xlu0 %980
          %v982 = vcvt.f32.s32 %v979
          %v983 = vcvt.f32.s32 %v981
          %v984 = vshll.u32 %v983, 16
          %v985 = vadd.s32 %v984, %v982
          %v986 = vand.u32 %v943, 65535
          %v987 = vshrl.u32 %v943, 16
          %v988 = vcvt.s32.f32 %v986
          %v989 = vcvt.s32.f32 %v987
          %990 = vadd.xlane.f32.xlu0 %v988
          %v991 = vpop.xlane.xlu0 %990
          %992 = vadd.xlane.f32.xlu0 %v989
          %v993 = vpop.xlane.xlu0 %992
          %v994 = vcvt.f32.s32 %v991
          %v995 = vcvt.f32.s32 %v993
          %v996 = vshll.u32 %v995, 16
          %v997 = vadd.s32 %v996, %v994
          %v998 = vand.u32 %v944, 65535
          %v999 = vshrl.u32 %v944, 16
          %v1000 = vcvt.s32.f32 %v998
          %v1001 = vcvt.s32.f32 %v999
          %1002 = vadd.xlane.f32.xlu0 %v1000
          %v1003 = vpop.xlane.xlu0 %1002
          %1004 = vadd.xlane.f32.xlu0 %v1001
          %v1005 = vpop.xlane.xlu0 %1004
          %v1006 = vcvt.f32.s32 %v1003
          %v1007 = vcvt.f32.s32 %v1005
          %v1008 = vshll.u32 %v1007, 16
          %v1009 = vadd.s32 %v1008, %v1006
          %v1010 = vand.u32 %v945, 65535
          %v1011 = vshrl.u32 %v945, 16
          %v1012 = vcvt.s32.f32 %v1010
          %v1013 = vcvt.s32.f32 %v1011
          %1014 = vadd.xlane.f32.xlu0 %v1012
          %v1015 = vpop.xlane.xlu0 %1014
          %1016 = vadd.xlane.f32.xlu0 %v1013
          %v1017 = vpop.xlane.xlu0 %1016
          %v1018 = vcvt.f32.s32 %v1015
          %v1019 = vcvt.f32.s32 %v1017
          %v1020 = vshll.u32 %v1019, 16
          %v1021 = vadd.s32 %v1020, %v1018
          %v1022 = vand.u32 %v946, 65535
          %v1023 = vshrl.u32 %v946, 16
          %v1024 = vcvt.s32.f32 %v1022
          %v1025 = vcvt.s32.f32 %v1023
          %1026 = vadd.xlane.f32.xlu0 %v1024
          %v1027 = vpop.xlane.xlu0 %1026
          %1028 = vadd.xlane.f32.xlu0 %v1025
          %v1029 = vpop.xlane.xlu0 %1028
          %v1030 = vcvt.f32.s32 %v1027
          %v1031 = vcvt.f32.s32 %v1029
          %v1032 = vshll.u32 %v1031, 16
          %v1033 = vadd.s32 %v1032, %v1030
          %v1034 = vand.u32 %v947, 65535
          %v1035 = vshrl.u32 %v947, 16
          %v1036 = vcvt.s32.f32 %v1034
          %v1037 = vcvt.s32.f32 %v1035
          %1038 = vadd.xlane.f32.xlu0 %v1036
          %v1039 = vpop.xlane.xlu0 %1038
          %1040 = vadd.xlane.f32.xlu0 %v1037
          %v1041 = vpop.xlane.xlu0 %1040
          %v1042 = vcvt.f32.s32 %v1039
          %v1043 = vcvt.f32.s32 %v1041
          %v1044 = vshll.u32 %v1043, 16
          %v1045 = vadd.s32 %v1044, %v1042
          %v1046 = vand.u32 %v948, 65535
          %v1047 = vshrl.u32 %v948, 16
          %v1048 = vcvt.s32.f32 %v1046
          %v1049 = vcvt.s32.f32 %v1047
          %1050 = vadd.xlane.f32.xlu0 %v1048
          %v1051 = vpop.xlane.xlu0 %1050
          %1052 = vadd.xlane.f32.xlu0 %v1049
          %v1053 = vpop.xlane.xlu0 %1052
          %v1054 = vcvt.f32.s32 %v1051
          %v1055 = vcvt.f32.s32 %v1053
          %v1056 = vshll.u32 %v1055, 16
          %v1057 = vadd.s32 %v1056, %v1054
          %v1058 = vand.u32 %v949, 65535
          %v1059 = vshrl.u32 %v949, 16
          %v1060 = vcvt.s32.f32 %v1058
          %v1061 = vcvt.s32.f32 %v1059
          %1062 = vadd.xlane.f32.xlu0 %v1060
          %v1063 = vpop.xlane.xlu0 %1062
          %1064 = vadd.xlane.f32.xlu0 %v1061
          %v1065 = vpop.xlane.xlu0 %1064
          %v1066 = vcvt.f32.s32 %v1063
          %v1067 = vcvt.f32.s32 %v1065
          %v1068 = vshll.u32 %v1067, 16
          %v1069 = vadd.s32 %v1068, %v1066
          %v1070 = vand.u32 %v950, 65535
          %v1071 = vshrl.u32 %v950, 16
          %v1072 = vcvt.s32.f32 %v1070
          %v1073 = vcvt.s32.f32 %v1071
          %1074 = vadd.xlane.f32.xlu0 %v1072
          %v1075 = vpop.xlane.xlu0 %1074
          %1076 = vadd.xlane.f32.xlu0 %v1073
          %v1077 = vpop.xlane.xlu0 %1076
          %v1078 = vcvt.f32.s32 %v1075
          %v1079 = vcvt.f32.s32 %v1077
          %v1080 = vshll.u32 %v1079, 16
          %v1081 = vadd.s32 %v1080, %v1078
          %v1082 = vand.u32 %v951, 65535
          %v1083 = vshrl.u32 %v951, 16
          %v1084 = vcvt.s32.f32 %v1082
          %v1085 = vcvt.s32.f32 %v1083
          %1086 = vadd.xlane.f32.xlu0 %v1084
          %v1087 = vpop.xlane.xlu0 %1086
          %1088 = vadd.xlane.f32.xlu0 %v1085
          %v1089 = vpop.xlane.xlu0 %1088
          %v1090 = vcvt.f32.s32 %v1087
          %v1091 = vcvt.f32.s32 %v1089
          %v1092 = vshll.u32 %v1091, 16
          %v1093 = vadd.s32 %v1092, %v1090
          %v1094 = vand.u32 %v952, 65535
          %v1095 = vshrl.u32 %v952, 16
          %v1096 = vcvt.s32.f32 %v1094
          %v1097 = vcvt.s32.f32 %v1095
          %1098 = vadd.xlane.f32.xlu0 %v1096
          %v1099 = vpop.xlane.xlu0 %1098
          %1100 = vadd.xlane.f32.xlu0 %v1097
          %v1101 = vpop.xlane.xlu0 %1100
          %v1102 = vcvt.f32.s32 %v1099
          %v1103 = vcvt.f32.s32 %v1101
          %v1104 = vshll.u32 %v1103, 16
          %v1105 = vadd.s32 %v1104, %v1102
          %v1106 = vand.u32 %v953, 65535
          %v1107 = vshrl.u32 %v953, 16
          %v1108 = vcvt.s32.f32 %v1106
          %v1109 = vcvt.s32.f32 %v1107
          %1110 = vadd.xlane.f32.xlu0 %v1108
          %v1111 = vpop.xlane.xlu0 %1110
          %1112 = vadd.xlane.f32.xlu0 %v1109
          %v1113 = vpop.xlane.xlu0 %1112
          %v1114 = vcvt.f32.s32 %v1111
          %v1115 = vcvt.f32.s32 %v1113
          %v1116 = vshll.u32 %v1115, 16
          %v1117 = vadd.s32 %v1116, %v1114
          %v1118 = vand.u32 %v954, 65535
          %v1119 = vshrl.u32 %v954, 16
          %v1120 = vcvt.s32.f32 %v1118
          %v1121 = vcvt.s32.f32 %v1119
          %1122 = vadd.xlane.f32.xlu0 %v1120
          %v1123 = vpop.xlane.xlu0 %1122
          %1124 = vadd.xlane.f32.xlu0 %v1121
          %v1125 = vpop.xlane.xlu0 %1124
          %v1126 = vcvt.f32.s32 %v1123
          %v1127 = vcvt.f32.s32 %v1125
          %v1128 = vshll.u32 %v1127, 16
          %v1129 = vadd.s32 %v1128, %v1126
          %v1130 = vand.u32 %v955, 65535
          %v1131 = vshrl.u32 %v955, 16
          %v1132 = vcvt.s32.f32 %v1130
          %v1133 = vcvt.s32.f32 %v1131
          %1134 = vadd.xlane.f32.xlu0 %v1132
          %v1135 = vpop.xlane.xlu0 %1134
          %1136 = vadd.xlane.f32.xlu0 %v1133
          %v1137 = vpop.xlane.xlu0 %1136
          %v1138 = vcvt.f32.s32 %v1135
          %v1139 = vcvt.f32.s32 %v1137
          %v1140 = vshll.u32 %v1139, 16
          %v1141 = vadd.s32 %v1140, %v1138
          %v1142 = vand.u32 %v956, 65535
          %v1143 = vshrl.u32 %v956, 16
          %v1144 = vcvt.s32.f32 %v1142
          %v1145 = vcvt.s32.f32 %v1143
          %1146 = vadd.xlane.f32.xlu0 %v1144
          %v1147 = vpop.xlane.xlu0 %1146
          %1148 = vadd.xlane.f32.xlu0 %v1145
          %v1149 = vpop.xlane.xlu0 %1148
          %v1150 = vcvt.f32.s32 %v1147
          %v1151 = vcvt.f32.s32 %v1149
          %v1152 = vshll.u32 %v1151, 16
          %v1153 = vadd.s32 %v1152, %v1150
          %v1154 = vand.u32 %v957, 65535
          %v1155 = vshrl.u32 %v957, 16
          %v1156 = vcvt.s32.f32 %v1154
          %v1157 = vcvt.s32.f32 %v1155
          %1158 = vadd.xlane.f32.xlu0 %v1156
          %v1159 = vpop.xlane.xlu0 %1158
          %1160 = vadd.xlane.f32.xlu0 %v1157
          %v1161 = vpop.xlane.xlu0 %1160
          %v1162 = vcvt.f32.s32 %v1159
          %v1163 = vcvt.f32.s32 %v1161
          %v1164 = vshll.u32 %v1163, 16
          %v1165 = vadd.s32 %v1164, %v1162
          %v1166 = vand.u32 %v958, 65535
          %v1167 = vshrl.u32 %v958, 16
          %v1168 = vcvt.s32.f32 %v1166
          %v1169 = vcvt.s32.f32 %v1167
          %1170 = vadd.xlane.f32.xlu0 %v1168
          %v1171 = vpop.xlane.xlu0 %1170
          %1172 = vadd.xlane.f32.xlu0 %v1169
          %v1173 = vpop.xlane.xlu0 %1172
          %v1174 = vcvt.f32.s32 %v1171
          %v1175 = vcvt.f32.s32 %v1173
          %v1176 = vshll.u32 %v1175, 16
          %v1177 = vadd.s32 %v1176, %v1174
          %v1178 = vand.u32 %v959, 65535
          %v1179 = vshrl.u32 %v959, 16
          %v1180 = vcvt.s32.f32 %v1178
          %v1181 = vcvt.s32.f32 %v1179
          %1182 = vadd.xlane.f32.xlu0 %v1180
          %v1183 = vpop.xlane.xlu0 %1182
          %1184 = vadd.xlane.f32.xlu0 %v1181
          %v1185 = vpop.xlane.xlu0 %1184
          %v1186 = vcvt.f32.s32 %v1183
          %v1187 = vcvt.f32.s32 %v1185
          %v1188 = vshll.u32 %v1187, 16
          %v1189 = vadd.s32 %v1188, %v1186
          %v1190 = vand.u32 %v960, 65535
          %v1191 = vshrl.u32 %v960, 16
          %v1192 = vcvt.s32.f32 %v1190
          %v1193 = vcvt.s32.f32 %v1191
          %1194 = vadd.xlane.f32.xlu0 %v1192
          %v1195 = vpop.xlane.xlu0 %1194
          %1196 = vadd.xlane.f32.xlu0 %v1193
          %v1197 = vpop.xlane.xlu0 %1196
          %v1198 = vcvt.f32.s32 %v1195
          %v1199 = vcvt.f32.s32 %v1197
          %v1200 = vshll.u32 %v1199, 16
          %v1201 = vadd.s32 %v1200, %v1198
          %v1202 = vand.u32 %v961, 65535
          %v1203 = vshrl.u32 %v961, 16
          %v1204 = vcvt.s32.f32 %v1202
          %v1205 = vcvt.s32.f32 %v1203
          %1206 = vadd.xlane.f32.xlu0 %v1204
          %v1207 = vpop.xlane.xlu0 %1206
          %1208 = vadd.xlane.f32.xlu0 %v1205
          %v1209 = vpop.xlane.xlu0 %1208
          %v1210 = vcvt.f32.s32 %v1207
          %v1211 = vcvt.f32.s32 %v1209
          %v1212 = vshll.u32 %v1211, 16
          %v1213 = vadd.s32 %v1212, %v1210
          %v1214 = vand.u32 %v962, 65535
          %v1215 = vshrl.u32 %v962, 16
          %v1216 = vcvt.s32.f32 %v1214
          %v1217 = vcvt.s32.f32 %v1215
          %1218 = vadd.xlane.f32.xlu0 %v1216
          %v1219 = vpop.xlane.xlu0 %1218
          %1220 = vadd.xlane.f32.xlu0 %v1217
          %v1221 = vpop.xlane.xlu0 %1220
          %v1222 = vcvt.f32.s32 %v1219
          %v1223 = vcvt.f32.s32 %v1221
          %v1224 = vshll.u32 %v1223, 16
          %v1225 = vadd.s32 %v1224, %v1222
          %v1226 = vand.u32 %v963, 65535
          %v1227 = vshrl.u32 %v963, 16
          %v1228 = vcvt.s32.f32 %v1226
          %v1229 = vcvt.s32.f32 %v1227
          %1230 = vadd.xlane.f32.xlu0 %v1228
          %v1231 = vpop.xlane.xlu0 %1230
          %1232 = vadd.xlane.f32.xlu0 %v1229
          %v1233 = vpop.xlane.xlu0 %1232
          %v1234 = vcvt.f32.s32 %v1231
          %v1235 = vcvt.f32.s32 %v1233
          %v1236 = vshll.u32 %v1235, 16
          %v1237 = vadd.s32 %v1236, %v1234
          %v1238 = vand.u32 %v964, 65535
          %v1239 = vshrl.u32 %v964, 16
          %v1240 = vcvt.s32.f32 %v1238
          %v1241 = vcvt.s32.f32 %v1239
          %1242 = vadd.xlane.f32.xlu0 %v1240
          %v1243 = vpop.xlane.xlu0 %1242
          %1244 = vadd.xlane.f32.xlu0 %v1241
          %v1245 = vpop.xlane.xlu0 %1244
          %v1246 = vcvt.f32.s32 %v1243
          %v1247 = vcvt.f32.s32 %v1245
          %v1248 = vshll.u32 %v1247, 16
          %v1249 = vadd.s32 %v1248, %v1246
          %v1250 = vand.u32 %v965, 65535
          %v1251 = vshrl.u32 %v965, 16
          %v1252 = vcvt.s32.f32 %v1250
          %v1253 = vcvt.s32.f32 %v1251
          %1254 = vadd.xlane.f32.xlu0 %v1252
          %v1255 = vpop.xlane.xlu0 %1254
          %1256 = vadd.xlane.f32.xlu0 %v1253
          %v1257 = vpop.xlane.xlu0 %1256
          %v1258 = vcvt.f32.s32 %v1255
          %v1259 = vcvt.f32.s32 %v1257
          %v1260 = vshll.u32 %v1259, 16
          %v1261 = vadd.s32 %v1260, %v1258
          %v1262 = vand.u32 %v966, 65535
          %v1263 = vshrl.u32 %v966, 16
          %v1264 = vcvt.s32.f32 %v1262
          %v1265 = vcvt.s32.f32 %v1263
          %1266 = vadd.xlane.f32.xlu0 %v1264
          %v1267 = vpop.xlane.xlu0 %1266
          %1268 = vadd.xlane.f32.xlu0 %v1265
          %v1269 = vpop.xlane.xlu0 %1268
          %v1270 = vcvt.f32.s32 %v1267
          %v1271 = vcvt.f32.s32 %v1269
          %v1272 = vshll.u32 %v1271, 16
          %v1273 = vadd.s32 %v1272, %v1270
          %v1274 = vand.u32 %v967, 65535
          %v1275 = vshrl.u32 %v967, 16
          %v1276 = vcvt.s32.f32 %v1274
          %v1277 = vcvt.s32.f32 %v1275
          %1278 = vadd.xlane.f32.xlu0 %v1276
          %v1279 = vpop.xlane.xlu0 %1278
          %1280 = vadd.xlane.f32.xlu0 %v1277
          %v1281 = vpop.xlane.xlu0 %1280
          %v1282 = vcvt.f32.s32 %v1279
          %v1283 = vcvt.f32.s32 %v1281
          %v1284 = vshll.u32 %v1283, 16
          %v1285 = vadd.s32 %v1284, %v1282
          %v1286 = vand.u32 %v968, 65535
          %v1287 = vshrl.u32 %v968, 16
          %v1288 = vcvt.s32.f32 %v1286
          %v1289 = vcvt.s32.f32 %v1287
          %1290 = vadd.xlane.f32.xlu0 %v1288
          %v1291 = vpop.xlane.xlu0 %1290
          %1292 = vadd.xlane.f32.xlu0 %v1289
          %v1293 = vpop.xlane.xlu0 %1292
          %v1294 = vcvt.f32.s32 %v1291
          %v1295 = vcvt.f32.s32 %v1293
          %v1296 = vshll.u32 %v1295, 16
          %v1297 = vadd.s32 %v1296, %v1294
          %v1298 = vand.u32 %v969, 65535
          %v1299 = vshrl.u32 %v969, 16
          %v1300 = vcvt.s32.f32 %v1298
          %v1301 = vcvt.s32.f32 %v1299
          %1302 = vadd.xlane.f32.xlu0 %v1300
          %v1303 = vpop.xlane.xlu0 %1302
          %1304 = vadd.xlane.f32.xlu0 %v1301
          %v1305 = vpop.xlane.xlu0 %1304
          %v1306 = vcvt.f32.s32 %v1303
          %v1307 = vcvt.f32.s32 %v1305
          %v1308 = vshll.u32 %v1307, 16
          %v1309 = vadd.s32 %v1308, %v1306
          %v1310 = vand.u32 %v970, 65535
          %v1311 = vshrl.u32 %v970, 16
          %v1312 = vcvt.s32.f32 %v1310
          %v1313 = vcvt.s32.f32 %v1311
          %1314 = vadd.xlane.f32.xlu0 %v1312
          %v1315 = vpop.xlane.xlu0 %1314
          %1316 = vadd.xlane.f32.xlu0 %v1313
          %v1317 = vpop.xlane.xlu0 %1316
          %v1318 = vcvt.f32.s32 %v1315
          %v1319 = vcvt.f32.s32 %v1317
          %v1320 = vshll.u32 %v1319, 16
          %v1321 = vadd.s32 %v1320, %v1318
          %v1322 = vand.u32 %v971, 65535
          %v1323 = vshrl.u32 %v971, 16
          %v1324 = vcvt.s32.f32 %v1322
          %v1325 = vcvt.s32.f32 %v1323
          %1326 = vadd.xlane.f32.xlu0 %v1324
          %v1327 = vpop.xlane.xlu0 %1326
          %1328 = vadd.xlane.f32.xlu0 %v1325
          %v1329 = vpop.xlane.xlu0 %1328
          %v1330 = vcvt.f32.s32 %v1327
          %v1331 = vcvt.f32.s32 %v1329
          %v1332 = vshll.u32 %v1331, 16
          %v1333 = vadd.s32 %v1332, %v1330
          %v1334 = vand.u32 %v972, 65535
          %v1335 = vshrl.u32 %v972, 16
          %v1336 = vcvt.s32.f32 %v1334
          %v1337 = vcvt.s32.f32 %v1335
          %1338 = vadd.xlane.f32.xlu0 %v1336
          %v1339 = vpop.xlane.xlu0 %1338
          %1340 = vadd.xlane.f32.xlu0 %v1337
          %v1341 = vpop.xlane.xlu0 %1340
          %v1342 = vcvt.f32.s32 %v1339
          %v1343 = vcvt.f32.s32 %v1341
          %v1344 = vshll.u32 %v1343, 16
          %v1345 = vadd.s32 %v1344, %v1342
          %v1346 = vand.u32 %v973, 65535
          %v1347 = vshrl.u32 %v973, 16
          %v1348 = vcvt.s32.f32 %v1346
          %v1349 = vcvt.s32.f32 %v1347
          %1350 = vadd.xlane.f32.xlu0 %v1348
          %v1351 = vpop.xlane.xlu0 %1350
          %1352 = vadd.xlane.f32.xlu0 %v1349
          %v1353 = vpop.xlane.xlu0 %1352
          %v1354 = vcvt.f32.s32 %v1351
          %v1355 = vcvt.f32.s32 %v1353
          %v1356 = vshll.u32 %v1355, 16
          %v1357 = vadd.s32 %v1356, %v1354
          %v1359 = vrot.slane %v622, 1
          %v1360 = vperm.slane %v652, 0
          %v1361 = vlaneseq
          %v1362 = vshrl.u32 %v1361, 7
          %1364 = vset.pattern.permute.xlu0 %v1362
          %1365 = vperm.xlu0 %1364, %v1360
          %v1366 = vpop.permute.xlu0 %1365
          %v1367 = vlaneseq
          %v1368 = vshrl.u32 %v1367, 7
          %v1369 = vadd.s32 %v1368, 8
          %1370 = vset.pattern.permute.xlu0 %v1369
          %1371 = vperm.xlu0 %1370, %v1360
          %v1372 = vpop.permute.xlu0 %1371
          %v1373 = vlaneseq
          %v1374 = vshrl.u32 %v1373, 7
          %v1375 = vadd.s32 %v1374, 16
          %1376 = vset.pattern.permute.xlu0 %v1375
          %1377 = vperm.xlu0 %1376, %v1360
          %v1378 = vpop.permute.xlu0 %1377
          %v1379 = vlaneseq
          %v1380 = vshrl.u32 %v1379, 7
          %v1381 = vadd.s32 %v1380, 24
          %1382 = vset.pattern.permute.xlu0 %v1381
          %1383 = vperm.xlu0 %1382, %v1360
          %v1384 = vpop.permute.xlu0 %1383
          %v1385 = vlaneseq
          %v1386 = vshrl.u32 %v1385, 7
          %v1387 = vadd.s32 %v1386, 32
          %1388 = vset.pattern.permute.xlu0 %v1387
          %1389 = vperm.xlu0 %1388, %v1360
          %v1390 = vpop.permute.xlu0 %1389
          %v1391 = vlaneseq
          %v1392 = vshrl.u32 %v1391, 7
          %v1393 = vadd.s32 %v1392, 40
          %1394 = vset.pattern.permute.xlu0 %v1393
          %1395 = vperm.xlu0 %1394, %v1360
          %v1396 = vpop.permute.xlu0 %1395
          %v1397 = vlaneseq
          %v1398 = vshrl.u32 %v1397, 7
          %v1399 = vadd.s32 %v1398, 48
          %1400 = vset.pattern.permute.xlu0 %v1399
          %1401 = vperm.xlu0 %1400, %v1360
          %v1402 = vpop.permute.xlu0 %1401
          %v1403 = vlaneseq
          %v1404 = vshrl.u32 %v1403, 7
          %v1405 = vadd.s32 %v1404, 56
          %1406 = vset.pattern.permute.xlu0 %v1405
          %1407 = vperm.xlu0 %1406, %v1360
          %v1408 = vpop.permute.xlu0 %1407
          %v1409 = vlaneseq
          %v1410 = vshrl.u32 %v1409, 7
          %v1411 = vadd.s32 %v1410, 64
          %1412 = vset.pattern.permute.xlu0 %v1411
          %1413 = vperm.xlu0 %1412, %v1360
          %v1414 = vpop.permute.xlu0 %1413
          %v1415 = vlaneseq
          %v1416 = vshrl.u32 %v1415, 7
          %v1417 = vadd.s32 %v1416, 72
          %1418 = vset.pattern.permute.xlu0 %v1417
          %1419 = vperm.xlu0 %1418, %v1360
          %v1420 = vpop.permute.xlu0 %1419
          %v1421 = vlaneseq
          %v1422 = vshrl.u32 %v1421, 7
          %v1423 = vadd.s32 %v1422, 80
          %1424 = vset.pattern.permute.xlu0 %v1423
          %1425 = vperm.xlu0 %1424, %v1360
          %v1426 = vpop.permute.xlu0 %1425
          %v1427 = vlaneseq
          %v1428 = vshrl.u32 %v1427, 7
          %v1429 = vadd.s32 %v1428, 88
          %1430 = vset.pattern.permute.xlu0 %v1429
          %1431 = vperm.xlu0 %1430, %v1360
          %v1432 = vpop.permute.xlu0 %1431
          %v1433 = vlaneseq
          %v1434 = vshrl.u32 %v1433, 7
          %v1435 = vadd.s32 %v1434, 96
          %1436 = vset.pattern.permute.xlu0 %v1435
          %1437 = vperm.xlu0 %1436, %v1360
          %v1438 = vpop.permute.xlu0 %1437
          %v1439 = vlaneseq
          %v1440 = vshrl.u32 %v1439, 7
          %v1441 = vadd.s32 %v1440, 104
          %1442 = vset.pattern.permute.xlu0 %v1441
          %1443 = vperm.xlu0 %1442, %v1360
          %v1444 = vpop.permute.xlu0 %1443
          %v1445 = vlaneseq
          %v1446 = vshrl.u32 %v1445, 7
          %v1447 = vadd.s32 %v1446, 112
          %1448 = vset.pattern.permute.xlu0 %v1447
          %1449 = vperm.xlu0 %1448, %v1360
          %v1450 = vpop.permute.xlu0 %1449
          %v1451 = vlaneseq
          %v1452 = vshrl.u32 %v1451, 7
          %v1453 = vadd.s32 %v1452, 120
          %1454 = vset.pattern.permute.xlu0 %v1453
          %1455 = vperm.xlu0 %1454, %v1360
          %v1456 = vpop.permute.xlu0 %1455
          %v1457 = vperm.slane %v652, 1
          %v1458 = vlaneseq
          %v1459 = vshrl.u32 %v1458, 7
          %1461 = vset.pattern.permute.xlu0 %v1459
          %1462 = vperm.xlu0 %1461, %v1457
          %v1463 = vpop.permute.xlu0 %1462
          %v1464 = vlaneseq
          %v1465 = vshrl.u32 %v1464, 7
          %v1466 = vadd.s32 %v1465, 8
          %1467 = vset.pattern.permute.xlu0 %v1466
          %1468 = vperm.xlu0 %1467, %v1457
          %v1469 = vpop.permute.xlu0 %1468
          %v1470 = vlaneseq
          %v1471 = vshrl.u32 %v1470, 7
          %v1472 = vadd.s32 %v1471, 16
          %1473 = vset.pattern.permute.xlu0 %v1472
          %1474 = vperm.xlu0 %1473, %v1457
          %v1475 = vpop.permute.xlu0 %1474
          %v1476 = vlaneseq
          %v1477 = vshrl.u32 %v1476, 7
          %v1478 = vadd.s32 %v1477, 24
          %1479 = vset.pattern.permute.xlu0 %v1478
          %1480 = vperm.xlu0 %1479, %v1457
          %v1481 = vpop.permute.xlu0 %1480
          %v1482 = vlaneseq
          %v1483 = vshrl.u32 %v1482, 7
          %v1484 = vadd.s32 %v1483, 32
          %1485 = vset.pattern.permute.xlu0 %v1484
          %1486 = vperm.xlu0 %1485, %v1457
          %v1487 = vpop.permute.xlu0 %1486
          %v1488 = vlaneseq
          %v1489 = vshrl.u32 %v1488, 7
          %v1490 = vadd.s32 %v1489, 40
          %1491 = vset.pattern.permute.xlu0 %v1490
          %1492 = vperm.xlu0 %1491, %v1457
          %v1493 = vpop.permute.xlu0 %1492
          %v1494 = vlaneseq
          %v1495 = vshrl.u32 %v1494, 7
          %v1496 = vadd.s32 %v1495, 48
          %1497 = vset.pattern.permute.xlu0 %v1496
          %1498 = vperm.xlu0 %1497, %v1457
          %v1499 = vpop.permute.xlu0 %1498
          %v1500 = vlaneseq
          %v1501 = vshrl.u32 %v1500, 7
          %v1502 = vadd.s32 %v1501, 56
          %1503 = vset.pattern.permute.xlu0 %v1502
          %1504 = vperm.xlu0 %1503, %v1457
          %v1505 = vpop.permute.xlu0 %1504
          %v1506 = vlaneseq
          %v1507 = vshrl.u32 %v1506, 7
          %v1508 = vadd.s32 %v1507, 64
          %1509 = vset.pattern.permute.xlu0 %v1508
          %1510 = vperm.xlu0 %1509, %v1457
          %v1511 = vpop.permute.xlu0 %1510
          %v1512 = vlaneseq
          %v1513 = vshrl.u32 %v1512, 7
          %v1514 = vadd.s32 %v1513, 72
          %1515 = vset.pattern.permute.xlu0 %v1514
          %1516 = vperm.xlu0 %1515, %v1457
          %v1517 = vpop.permute.xlu0 %1516
          %v1518 = vlaneseq
          %v1519 = vshrl.u32 %v1518, 7
          %v1520 = vadd.s32 %v1519, 80
          %1521 = vset.pattern.permute.xlu0 %v1520
          %1522 = vperm.xlu0 %1521, %v1457
          %v1523 = vpop.permute.xlu0 %1522
          %v1524 = vlaneseq
          %v1525 = vshrl.u32 %v1524, 7
          %v1526 = vadd.s32 %v1525, 88
          %1527 = vset.pattern.permute.xlu0 %v1526
          %1528 = vperm.xlu0 %1527, %v1457
          %v1529 = vpop.permute.xlu0 %1528
          %v1530 = vlaneseq
          %v1531 = vshrl.u32 %v1530, 7
          %v1532 = vadd.s32 %v1531, 96
          %1533 = vset.pattern.permute.xlu0 %v1532
          %1534 = vperm.xlu0 %1533, %v1457
          %v1535 = vpop.permute.xlu0 %1534
          %v1536 = vlaneseq
          %v1537 = vshrl.u32 %v1536, 7
          %v1538 = vadd.s32 %v1537, 104
          %1539 = vset.pattern.permute.xlu0 %v1538
          %1540 = vperm.xlu0 %1539, %v1457
          %v1541 = vpop.permute.xlu0 %1540
          %v1542 = vlaneseq
          %v1543 = vshrl.u32 %v1542, 7
          %v1544 = vadd.s32 %v1543, 112
          %1545 = vset.pattern.permute.xlu0 %v1544
          %1546 = vperm.xlu0 %1545, %v1457
          %v1547 = vpop.permute.xlu0 %1546
          %v1548 = vlaneseq
          %v1549 = vshrl.u32 %v1548, 7
          %v1550 = vadd.s32 %v1549, 120
          %1551 = vset.pattern.permute.xlu0 %v1550
          %1552 = vperm.xlu0 %1551, %v1457
          %v1553 = vpop.permute.xlu0 %1552
          %v1554 = vperm.slane %v622, 0
          %v1555 = vperm.slane %v1359, 0
          %vm1558 = vcmp.ge.f32.partialorder %v1554, %v1366
          %vm1559 = vcmp.ge.f32.partialorder %v1554, %v1372
          %vm1560 = vcmp.ge.f32.partialorder %v1554, %v1378
          %vm1561 = vcmp.ge.f32.partialorder %v1554, %v1384
          %vm1562 = vcmp.ge.f32.partialorder %v1554, %v1390
          %vm1563 = vcmp.ge.f32.partialorder %v1554, %v1396
          %vm1564 = vcmp.ge.f32.partialorder %v1554, %v1402
          %vm1565 = vcmp.ge.f32.partialorder %v1554, %v1408
          %vm1566 = vcmp.ge.f32.partialorder %v1554, %v1414
          %vm1567 = vcmp.ge.f32.partialorder %v1554, %v1420
          %vm1568 = vcmp.ge.f32.partialorder %v1554, %v1426
          %vm1569 = vcmp.ge.f32.partialorder %v1554, %v1432
          %vm1570 = vcmp.ge.f32.partialorder %v1554, %v1438
          %vm1571 = vcmp.ge.f32.partialorder %v1554, %v1444
          %vm1572 = vcmp.ge.f32.partialorder %v1554, %v1450
          %vm1573 = vcmp.ge.f32.partialorder %v1554, %v1456
          %vm1574 = vcmp.ge.f32.partialorder %v1555, %v1463
          %vm1575 = vcmp.ge.f32.partialorder %v1555, %v1469
          %vm1576 = vcmp.ge.f32.partialorder %v1555, %v1475
          %vm1577 = vcmp.ge.f32.partialorder %v1555, %v1481
          %vm1578 = vcmp.ge.f32.partialorder %v1555, %v1487
          %vm1579 = vcmp.ge.f32.partialorder %v1555, %v1493
          %vm1580 = vcmp.ge.f32.partialorder %v1555, %v1499
          %vm1581 = vcmp.ge.f32.partialorder %v1555, %v1505
          %vm1582 = vcmp.ge.f32.partialorder %v1555, %v1511
          %vm1583 = vcmp.ge.f32.partialorder %v1555, %v1517
          %vm1584 = vcmp.ge.f32.partialorder %v1555, %v1523
          %vm1585 = vcmp.ge.f32.partialorder %v1555, %v1529
          %vm1586 = vcmp.ge.f32.partialorder %v1555, %v1535
          %vm1587 = vcmp.ge.f32.partialorder %v1555, %v1541
          %vm1588 = vcmp.ge.f32.partialorder %v1555, %v1547
          %vm1589 = vcmp.ge.f32.partialorder %v1555, %v1553
          %v1590 = vsel %vm1558, 1, 0
          %v1591 = vsel %vm1559, 1, 0
          %v1592 = vsel %vm1560, 1, 0
          %v1593 = vsel %vm1561, 1, 0
          %v1594 = vsel %vm1562, 1, 0
          %v1595 = vsel %vm1563, 1, 0
          %v1596 = vsel %vm1564, 1, 0
          %v1597 = vsel %vm1565, 1, 0
          %v1598 = vsel %vm1566, 1, 0
          %v1599 = vsel %vm1567, 1, 0
          %v1600 = vsel %vm1568, 1, 0
          %v1601 = vsel %vm1569, 1, 0
          %v1602 = vsel %vm1570, 1, 0
          %v1603 = vsel %vm1571, 1, 0
          %v1604 = vsel %vm1572, 1, 0
          %v1605 = vsel %vm1573, 1, 0
          %v1606 = vsel %vm1574, 1, 0
          %v1607 = vsel %vm1575, 1, 0
          %v1608 = vsel %vm1576, 1, 0
          %v1609 = vsel %vm1577, 1, 0
          %v1610 = vsel %vm1578, 1, 0
          %v1611 = vsel %vm1579, 1, 0
          %v1612 = vsel %vm1580, 1, 0
          %v1613 = vsel %vm1581, 1, 0
          %v1614 = vsel %vm1582, 1, 0
          %v1615 = vsel %vm1583, 1, 0
          %v1616 = vsel %vm1584, 1, 0
          %v1617 = vsel %vm1585, 1, 0
          %v1618 = vsel %vm1586, 1, 0
          %v1619 = vsel %vm1587, 1, 0
          %v1620 = vsel %vm1588, 1, 0
          %v1621 = vsel %vm1589, 1, 0
          %v1622 = vand.u32 %v1590, 65535
          %v1623 = vshrl.u32 %v1590, 16
          %v1624 = vcvt.s32.f32 %v1622
          %v1625 = vcvt.s32.f32 %v1623
          %1626 = vadd.xlane.f32.xlu0 %v1624
          %v1627 = vpop.xlane.xlu0 %1626
          %1628 = vadd.xlane.f32.xlu0 %v1625
          %v1629 = vpop.xlane.xlu0 %1628
          %v1630 = vcvt.f32.s32 %v1627
          %v1631 = vcvt.f32.s32 %v1629
          %v1632 = vshll.u32 %v1631, 16
          %v1633 = vadd.s32 %v1632, %v1630
          %v1634 = vand.u32 %v1591, 65535
          %v1635 = vshrl.u32 %v1591, 16
          %v1636 = vcvt.s32.f32 %v1634
          %v1637 = vcvt.s32.f32 %v1635
          %1638 = vadd.xlane.f32.xlu0 %v1636
          %v1639 = vpop.xlane.xlu0 %1638
          %1640 = vadd.xlane.f32.xlu0 %v1637
          %v1641 = vpop.xlane.xlu0 %1640
          %v1642 = vcvt.f32.s32 %v1639
          %v1643 = vcvt.f32.s32 %v1641
          %v1644 = vshll.u32 %v1643, 16
          %v1645 = vadd.s32 %v1644, %v1642
          %v1646 = vand.u32 %v1592, 65535
          %v1647 = vshrl.u32 %v1592, 16
          %v1648 = vcvt.s32.f32 %v1646
          %v1649 = vcvt.s32.f32 %v1647
          %1650 = vadd.xlane.f32.xlu0 %v1648
          %v1651 = vpop.xlane.xlu0 %1650
          %1652 = vadd.xlane.f32.xlu0 %v1649
          %v1653 = vpop.xlane.xlu0 %1652
          %v1654 = vcvt.f32.s32 %v1651
          %v1655 = vcvt.f32.s32 %v1653
          %v1656 = vshll.u32 %v1655, 16
          %v1657 = vadd.s32 %v1656, %v1654
          %v1658 = vand.u32 %v1593, 65535
          %v1659 = vshrl.u32 %v1593, 16
          %v1660 = vcvt.s32.f32 %v1658
          %v1661 = vcvt.s32.f32 %v1659
          %1662 = vadd.xlane.f32.xlu0 %v1660
          %v1663 = vpop.xlane.xlu0 %1662
          %1664 = vadd.xlane.f32.xlu0 %v1661
          %v1665 = vpop.xlane.xlu0 %1664
          %v1666 = vcvt.f32.s32 %v1663
          %v1667 = vcvt.f32.s32 %v1665
          %v1668 = vshll.u32 %v1667, 16
          %v1669 = vadd.s32 %v1668, %v1666
          %v1670 = vand.u32 %v1594, 65535
          %v1671 = vshrl.u32 %v1594, 16
          %v1672 = vcvt.s32.f32 %v1670
          %v1673 = vcvt.s32.f32 %v1671
          %1674 = vadd.xlane.f32.xlu0 %v1672
          %v1675 = vpop.xlane.xlu0 %1674
          %1676 = vadd.xlane.f32.xlu0 %v1673
          %v1677 = vpop.xlane.xlu0 %1676
          %v1678 = vcvt.f32.s32 %v1675
          %v1679 = vcvt.f32.s32 %v1677
          %v1680 = vshll.u32 %v1679, 16
          %v1681 = vadd.s32 %v1680, %v1678
          %v1682 = vand.u32 %v1595, 65535
          %v1683 = vshrl.u32 %v1595, 16
          %v1684 = vcvt.s32.f32 %v1682
          %v1685 = vcvt.s32.f32 %v1683
          %1686 = vadd.xlane.f32.xlu0 %v1684
          %v1687 = vpop.xlane.xlu0 %1686
          %1688 = vadd.xlane.f32.xlu0 %v1685
          %v1689 = vpop.xlane.xlu0 %1688
          %v1690 = vcvt.f32.s32 %v1687
          %v1691 = vcvt.f32.s32 %v1689
          %v1692 = vshll.u32 %v1691, 16
          %v1693 = vadd.s32 %v1692, %v1690
          %v1694 = vand.u32 %v1596, 65535
          %v1695 = vshrl.u32 %v1596, 16
          %v1696 = vcvt.s32.f32 %v1694
          %v1697 = vcvt.s32.f32 %v1695
          %1698 = vadd.xlane.f32.xlu0 %v1696
          %v1699 = vpop.xlane.xlu0 %1698
          %1700 = vadd.xlane.f32.xlu0 %v1697
          %v1701 = vpop.xlane.xlu0 %1700
          %v1702 = vcvt.f32.s32 %v1699
          %v1703 = vcvt.f32.s32 %v1701
          %v1704 = vshll.u32 %v1703, 16
          %v1705 = vadd.s32 %v1704, %v1702
          %v1706 = vand.u32 %v1597, 65535
          %v1707 = vshrl.u32 %v1597, 16
          %v1708 = vcvt.s32.f32 %v1706
          %v1709 = vcvt.s32.f32 %v1707
          %1710 = vadd.xlane.f32.xlu0 %v1708
          %v1711 = vpop.xlane.xlu0 %1710
          %1712 = vadd.xlane.f32.xlu0 %v1709
          %v1713 = vpop.xlane.xlu0 %1712
          %v1714 = vcvt.f32.s32 %v1711
          %v1715 = vcvt.f32.s32 %v1713
          %v1716 = vshll.u32 %v1715, 16
          %v1717 = vadd.s32 %v1716, %v1714
          %v1718 = vand.u32 %v1598, 65535
          %v1719 = vshrl.u32 %v1598, 16
          %v1720 = vcvt.s32.f32 %v1718
          %v1721 = vcvt.s32.f32 %v1719
          %1722 = vadd.xlane.f32.xlu0 %v1720
          %v1723 = vpop.xlane.xlu0 %1722
          %1724 = vadd.xlane.f32.xlu0 %v1721
          %v1725 = vpop.xlane.xlu0 %1724
          %v1726 = vcvt.f32.s32 %v1723
          %v1727 = vcvt.f32.s32 %v1725
          %v1728 = vshll.u32 %v1727, 16
          %v1729 = vadd.s32 %v1728, %v1726
          %v1730 = vand.u32 %v1599, 65535
          %v1731 = vshrl.u32 %v1599, 16
          %v1732 = vcvt.s32.f32 %v1730
          %v1733 = vcvt.s32.f32 %v1731
          %1734 = vadd.xlane.f32.xlu0 %v1732
          %v1735 = vpop.xlane.xlu0 %1734
          %1736 = vadd.xlane.f32.xlu0 %v1733
          %v1737 = vpop.xlane.xlu0 %1736
          %v1738 = vcvt.f32.s32 %v1735
          %v1739 = vcvt.f32.s32 %v1737
          %v1740 = vshll.u32 %v1739, 16
          %v1741 = vadd.s32 %v1740, %v1738
          %v1742 = vand.u32 %v1600, 65535
          %v1743 = vshrl.u32 %v1600, 16
          %v1744 = vcvt.s32.f32 %v1742
          %v1745 = vcvt.s32.f32 %v1743
          %1746 = vadd.xlane.f32.xlu0 %v1744
          %v1747 = vpop.xlane.xlu0 %1746
          %1748 = vadd.xlane.f32.xlu0 %v1745
          %v1749 = vpop.xlane.xlu0 %1748
          %v1750 = vcvt.f32.s32 %v1747
          %v1751 = vcvt.f32.s32 %v1749
          %v1752 = vshll.u32 %v1751, 16
          %v1753 = vadd.s32 %v1752, %v1750
          %v1754 = vand.u32 %v1601, 65535
          %v1755 = vshrl.u32 %v1601, 16
          %v1756 = vcvt.s32.f32 %v1754
          %v1757 = vcvt.s32.f32 %v1755
          %1758 = vadd.xlane.f32.xlu0 %v1756
          %v1759 = vpop.xlane.xlu0 %1758
          %1760 = vadd.xlane.f32.xlu0 %v1757
          %v1761 = vpop.xlane.xlu0 %1760
          %v1762 = vcvt.f32.s32 %v1759
          %v1763 = vcvt.f32.s32 %v1761
          %v1764 = vshll.u32 %v1763, 16
          %v1765 = vadd.s32 %v1764, %v1762
          %v1766 = vand.u32 %v1602, 65535
          %v1767 = vshrl.u32 %v1602, 16
          %v1768 = vcvt.s32.f32 %v1766
          %v1769 = vcvt.s32.f32 %v1767
          %1770 = vadd.xlane.f32.xlu0 %v1768
          %v1771 = vpop.xlane.xlu0 %1770
          %1772 = vadd.xlane.f32.xlu0 %v1769
          %v1773 = vpop.xlane.xlu0 %1772
          %v1774 = vcvt.f32.s32 %v1771
          %v1775 = vcvt.f32.s32 %v1773
          %v1776 = vshll.u32 %v1775, 16
          %v1777 = vadd.s32 %v1776, %v1774
          %v1778 = vand.u32 %v1603, 65535
          %v1779 = vshrl.u32 %v1603, 16
          %v1780 = vcvt.s32.f32 %v1778
          %v1781 = vcvt.s32.f32 %v1779
          %1782 = vadd.xlane.f32.xlu0 %v1780
          %v1783 = vpop.xlane.xlu0 %1782
          %1784 = vadd.xlane.f32.xlu0 %v1781
          %v1785 = vpop.xlane.xlu0 %1784
          %v1786 = vcvt.f32.s32 %v1783
          %v1787 = vcvt.f32.s32 %v1785
          %v1788 = vshll.u32 %v1787, 16
          %v1789 = vadd.s32 %v1788, %v1786
          %v1790 = vand.u32 %v1604, 65535
          %v1791 = vshrl.u32 %v1604, 16
          %v1792 = vcvt.s32.f32 %v1790
          %v1793 = vcvt.s32.f32 %v1791
          %1794 = vadd.xlane.f32.xlu0 %v1792
          %v1795 = vpop.xlane.xlu0 %1794
          %1796 = vadd.xlane.f32.xlu0 %v1793
          %v1797 = vpop.xlane.xlu0 %1796
          %v1798 = vcvt.f32.s32 %v1795
          %v1799 = vcvt.f32.s32 %v1797
          %v1800 = vshll.u32 %v1799, 16
          %v1801 = vadd.s32 %v1800, %v1798
          %v1802 = vand.u32 %v1605, 65535
          %v1803 = vshrl.u32 %v1605, 16
          %v1804 = vcvt.s32.f32 %v1802
          %v1805 = vcvt.s32.f32 %v1803
          %1806 = vadd.xlane.f32.xlu0 %v1804
          %v1807 = vpop.xlane.xlu0 %1806
          %1808 = vadd.xlane.f32.xlu0 %v1805
          %v1809 = vpop.xlane.xlu0 %1808
          %v1810 = vcvt.f32.s32 %v1807
          %v1811 = vcvt.f32.s32 %v1809
          %v1812 = vshll.u32 %v1811, 16
          %v1813 = vadd.s32 %v1812, %v1810
          %v1814 = vand.u32 %v1606, 65535
          %v1815 = vshrl.u32 %v1606, 16
          %v1816 = vcvt.s32.f32 %v1814
          %v1817 = vcvt.s32.f32 %v1815
          %1818 = vadd.xlane.f32.xlu0 %v1816
          %v1819 = vpop.xlane.xlu0 %1818
          %1820 = vadd.xlane.f32.xlu0 %v1817
          %v1821 = vpop.xlane.xlu0 %1820
          %v1822 = vcvt.f32.s32 %v1819
          %v1823 = vcvt.f32.s32 %v1821
          %v1824 = vshll.u32 %v1823, 16
          %v1825 = vadd.s32 %v1824, %v1822
          %v1826 = vand.u32 %v1607, 65535
          %v1827 = vshrl.u32 %v1607, 16
          %v1828 = vcvt.s32.f32 %v1826
          %v1829 = vcvt.s32.f32 %v1827
          %1830 = vadd.xlane.f32.xlu0 %v1828
          %v1831 = vpop.xlane.xlu0 %1830
          %1832 = vadd.xlane.f32.xlu0 %v1829
          %v1833 = vpop.xlane.xlu0 %1832
          %v1834 = vcvt.f32.s32 %v1831
          %v1835 = vcvt.f32.s32 %v1833
          %v1836 = vshll.u32 %v1835, 16
          %v1837 = vadd.s32 %v1836, %v1834
          %v1838 = vand.u32 %v1608, 65535
          %v1839 = vshrl.u32 %v1608, 16
          %v1840 = vcvt.s32.f32 %v1838
          %v1841 = vcvt.s32.f32 %v1839
          %1842 = vadd.xlane.f32.xlu0 %v1840
          %v1843 = vpop.xlane.xlu0 %1842
          %1844 = vadd.xlane.f32.xlu0 %v1841
          %v1845 = vpop.xlane.xlu0 %1844
          %v1846 = vcvt.f32.s32 %v1843
          %v1847 = vcvt.f32.s32 %v1845
          %v1848 = vshll.u32 %v1847, 16
          %v1849 = vadd.s32 %v1848, %v1846
          %v1850 = vand.u32 %v1609, 65535
          %v1851 = vshrl.u32 %v1609, 16
          %v1852 = vcvt.s32.f32 %v1850
          %v1853 = vcvt.s32.f32 %v1851
          %1854 = vadd.xlane.f32.xlu0 %v1852
          %v1855 = vpop.xlane.xlu0 %1854
          %1856 = vadd.xlane.f32.xlu0 %v1853
          %v1857 = vpop.xlane.xlu0 %1856
          %v1858 = vcvt.f32.s32 %v1855
          %v1859 = vcvt.f32.s32 %v1857
          %v1860 = vshll.u32 %v1859, 16
          %v1861 = vadd.s32 %v1860, %v1858
          %v1862 = vand.u32 %v1610, 65535
          %v1863 = vshrl.u32 %v1610, 16
          %v1864 = vcvt.s32.f32 %v1862
          %v1865 = vcvt.s32.f32 %v1863
          %1866 = vadd.xlane.f32.xlu0 %v1864
          %v1867 = vpop.xlane.xlu0 %1866
          %1868 = vadd.xlane.f32.xlu0 %v1865
          %v1869 = vpop.xlane.xlu0 %1868
          %v1870 = vcvt.f32.s32 %v1867
          %v1871 = vcvt.f32.s32 %v1869
          %v1872 = vshll.u32 %v1871, 16
          %v1873 = vadd.s32 %v1872, %v1870
          %v1874 = vand.u32 %v1611, 65535
          %v1875 = vshrl.u32 %v1611, 16
          %v1876 = vcvt.s32.f32 %v1874
          %v1877 = vcvt.s32.f32 %v1875
          %1878 = vadd.xlane.f32.xlu0 %v1876
          %v1879 = vpop.xlane.xlu0 %1878
          %1880 = vadd.xlane.f32.xlu0 %v1877
          %v1881 = vpop.xlane.xlu0 %1880
          %v1882 = vcvt.f32.s32 %v1879
          %v1883 = vcvt.f32.s32 %v1881
          %v1884 = vshll.u32 %v1883, 16
          %v1885 = vadd.s32 %v1884, %v1882
          %v1886 = vand.u32 %v1612, 65535
          %v1887 = vshrl.u32 %v1612, 16
          %v1888 = vcvt.s32.f32 %v1886
          %v1889 = vcvt.s32.f32 %v1887
          %1890 = vadd.xlane.f32.xlu0 %v1888
          %v1891 = vpop.xlane.xlu0 %1890
          %1892 = vadd.xlane.f32.xlu0 %v1889
          %v1893 = vpop.xlane.xlu0 %1892
          %v1894 = vcvt.f32.s32 %v1891
          %v1895 = vcvt.f32.s32 %v1893
          %v1896 = vshll.u32 %v1895, 16
          %v1897 = vadd.s32 %v1896, %v1894
          %v1898 = vand.u32 %v1613, 65535
          %v1899 = vshrl.u32 %v1613, 16
          %v1900 = vcvt.s32.f32 %v1898
          %v1901 = vcvt.s32.f32 %v1899
          %1902 = vadd.xlane.f32.xlu0 %v1900
          %v1903 = vpop.xlane.xlu0 %1902
          %1904 = vadd.xlane.f32.xlu0 %v1901
          %v1905 = vpop.xlane.xlu0 %1904
          %v1906 = vcvt.f32.s32 %v1903
          %v1907 = vcvt.f32.s32 %v1905
          %v1908 = vshll.u32 %v1907, 16
          %v1909 = vadd.s32 %v1908, %v1906
          %v1910 = vand.u32 %v1614, 65535
          %v1911 = vshrl.u32 %v1614, 16
          %v1912 = vcvt.s32.f32 %v1910
          %v1913 = vcvt.s32.f32 %v1911
          %1914 = vadd.xlane.f32.xlu0 %v1912
          %v1915 = vpop.xlane.xlu0 %1914
          %1916 = vadd.xlane.f32.xlu0 %v1913
          %v1917 = vpop.xlane.xlu0 %1916
          %v1918 = vcvt.f32.s32 %v1915
          %v1919 = vcvt.f32.s32 %v1917
          %v1920 = vshll.u32 %v1919, 16
          %v1921 = vadd.s32 %v1920, %v1918
          %v1922 = vand.u32 %v1615, 65535
          %v1923 = vshrl.u32 %v1615, 16
          %v1924 = vcvt.s32.f32 %v1922
          %v1925 = vcvt.s32.f32 %v1923
          %1926 = vadd.xlane.f32.xlu0 %v1924
          %v1927 = vpop.xlane.xlu0 %1926
          %1928 = vadd.xlane.f32.xlu0 %v1925
          %v1929 = vpop.xlane.xlu0 %1928
          %v1930 = vcvt.f32.s32 %v1927
          %v1931 = vcvt.f32.s32 %v1929
          %v1932 = vshll.u32 %v1931, 16
          %v1933 = vadd.s32 %v1932, %v1930
          %v1934 = vand.u32 %v1616, 65535
          %v1935 = vshrl.u32 %v1616, 16
          %v1936 = vcvt.s32.f32 %v1934
          %v1937 = vcvt.s32.f32 %v1935
          %1938 = vadd.xlane.f32.xlu0 %v1936
          %v1939 = vpop.xlane.xlu0 %1938
          %1940 = vadd.xlane.f32.xlu0 %v1937
          %v1941 = vpop.xlane.xlu0 %1940
          %v1942 = vcvt.f32.s32 %v1939
          %v1943 = vcvt.f32.s32 %v1941
          %v1944 = vshll.u32 %v1943, 16
          %v1945 = vadd.s32 %v1944, %v1942
          %v1946 = vand.u32 %v1617, 65535
          %v1947 = vshrl.u32 %v1617, 16
          %v1948 = vcvt.s32.f32 %v1946
          %v1949 = vcvt.s32.f32 %v1947
          %1950 = vadd.xlane.f32.xlu0 %v1948
          %v1951 = vpop.xlane.xlu0 %1950
          %1952 = vadd.xlane.f32.xlu0 %v1949
          %v1953 = vpop.xlane.xlu0 %1952
          %v1954 = vcvt.f32.s32 %v1951
          %v1955 = vcvt.f32.s32 %v1953
          %v1956 = vshll.u32 %v1955, 16
          %v1957 = vadd.s32 %v1956, %v1954
          %v1958 = vand.u32 %v1618, 65535
          %v1959 = vshrl.u32 %v1618, 16
          %v1960 = vcvt.s32.f32 %v1958
          %v1961 = vcvt.s32.f32 %v1959
          %1962 = vadd.xlane.f32.xlu0 %v1960
          %v1963 = vpop.xlane.xlu0 %1962
          %1964 = vadd.xlane.f32.xlu0 %v1961
          %v1965 = vpop.xlane.xlu0 %1964
          %v1966 = vcvt.f32.s32 %v1963
          %v1967 = vcvt.f32.s32 %v1965
          %v1968 = vshll.u32 %v1967, 16
          %v1969 = vadd.s32 %v1968, %v1966
          %v1970 = vand.u32 %v1619, 65535
          %v1971 = vshrl.u32 %v1619, 16
          %v1972 = vcvt.s32.f32 %v1970
          %v1973 = vcvt.s32.f32 %v1971
          %1974 = vadd.xlane.f32.xlu0 %v1972
          %v1975 = vpop.xlane.xlu0 %1974
          %1976 = vadd.xlane.f32.xlu0 %v1973
          %v1977 = vpop.xlane.xlu0 %1976
          %v1978 = vcvt.f32.s32 %v1975
          %v1979 = vcvt.f32.s32 %v1977
          %v1980 = vshll.u32 %v1979, 16
          %v1981 = vadd.s32 %v1980, %v1978
          %v1982 = vand.u32 %v1620, 65535
          %v1983 = vshrl.u32 %v1620, 16
          %v1984 = vcvt.s32.f32 %v1982
          %v1985 = vcvt.s32.f32 %v1983
          %1986 = vadd.xlane.f32.xlu0 %v1984
          %v1987 = vpop.xlane.xlu0 %1986
          %1988 = vadd.xlane.f32.xlu0 %v1985
          %v1989 = vpop.xlane.xlu0 %1988
          %v1990 = vcvt.f32.s32 %v1987
          %v1991 = vcvt.f32.s32 %v1989
          %v1992 = vshll.u32 %v1991, 16
          %v1993 = vadd.s32 %v1992, %v1990
          %v1994 = vand.u32 %v1621, 65535
          %v1995 = vshrl.u32 %v1621, 16
          %v1996 = vcvt.s32.f32 %v1994
          %v1997 = vcvt.s32.f32 %v1995
          %1998 = vadd.xlane.f32.xlu0 %v1996
          %v1999 = vpop.xlane.xlu0 %1998
          %2000 = vadd.xlane.f32.xlu0 %v1997
          %v2001 = vpop.xlane.xlu0 %2000
          %v2002 = vcvt.f32.s32 %v1999
          %v2003 = vcvt.f32.s32 %v2001
          %v2004 = vshll.u32 %v2003, 16
          %v2005 = vadd.s32 %v2004, %v2002
          %v2006 = vperm.slane %v985, %v609
          %v2007 = vadd.s32 %v609, 4294967288
          %v2008 = vperm.slane %v997, %v2007
          %vm2009 = vcmask 130112
          %v2010 = vsel %vm2009, %v2008, %v2006
          %v2011 = vadd.s32 %v609, 4294967280
          %v2012 = vperm.slane %v1009, %v2011
          %vm2013 = vcmask 195712
          %v2014 = vsel %vm2013, %v2012, %v2010
          %v2015 = vadd.s32 %v609, 4294967272
          %v2016 = vperm.slane %v1021, %v2015
          %vm2017 = vcmask 261312
          %v2018 = vsel %vm2017, %v2016, %v2014
          %v2019 = vadd.s32 %v609, 4294967264
          %v2020 = vperm.slane %v1033, %v2019
          %vm2021 = vcmask 326912
          %v2022 = vsel %vm2021, %v2020, %v2018
          %v2023 = vadd.s32 %v609, 4294967256
          %v2024 = vperm.slane %v1045, %v2023
          %vm2025 = vcmask 392512
          %v2026 = vsel %vm2025, %v2024, %v2022
          %v2027 = vadd.s32 %v609, 4294967248
          %v2028 = vperm.slane %v1057, %v2027
          %vm2029 = vcmask 458112
          %v2030 = vsel %vm2029, %v2028, %v2026
          %v2031 = vadd.s32 %v609, 4294967240
          %v2032 = vperm.slane %v1069, %v2031
          %vm2033 = vcmask 523712
          %v2034 = vsel %vm2033, %v2032, %v2030
          %v2035 = vadd.s32 %v609, 4294967232
          %v2036 = vperm.slane %v1081, %v2035
          %vm2037 = vcmask 589312
          %v2038 = vsel %vm2037, %v2036, %v2034
          %v2039 = vadd.s32 %v609, 4294967224
          %v2040 = vperm.slane %v1093, %v2039
          %vm2041 = vcmask 654912
          %v2042 = vsel %vm2041, %v2040, %v2038
          %v2043 = vadd.s32 %v609, 4294967216
          %v2044 = vperm.slane %v1105, %v2043
          %vm2045 = vcmask 720512
          %v2046 = vsel %vm2045, %v2044, %v2042
          %v2047 = vadd.s32 %v609, 4294967208
          %v2048 = vperm.slane %v1117, %v2047
          %vm2049 = vcmask 786112
          %v2050 = vsel %vm2049, %v2048, %v2046
          %v2051 = vadd.s32 %v609, 4294967200
          %v2052 = vperm.slane %v1129, %v2051
          %vm2053 = vcmask 851712
          %v2054 = vsel %vm2053, %v2052, %v2050
          %v2055 = vadd.s32 %v609, 4294967192
          %v2056 = vperm.slane %v1141, %v2055
          %vm2057 = vcmask 917312
          %v2058 = vsel %vm2057, %v2056, %v2054
          %v2059 = vadd.s32 %v609, 4294967184
          %v2060 = vperm.slane %v1153, %v2059
          %vm2061 = vcmask 982912
          %v2062 = vsel %vm2061, %v2060, %v2058
          %v2063 = vadd.s32 %v609, 4294967176
          %v2064 = vperm.slane %v1165, %v2063
          %vm2065 = vcmask 1048512
          %v2066 = vsel %vm2065, %v2064, %v2062
          %v2067 = vperm.slane %v1177, %v609
          %v2068 = vperm.slane %v1189, %v2007
          %v2069 = vsel %vm2009, %v2068, %v2067
          %v2070 = vperm.slane %v1201, %v2011
          %v2071 = vsel %vm2013, %v2070, %v2069
          %v2072 = vperm.slane %v1213, %v2015
          %v2073 = vsel %vm2017, %v2072, %v2071
          %v2074 = vperm.slane %v1225, %v2019
          %v2075 = vsel %vm2021, %v2074, %v2073
          %v2076 = vperm.slane %v1237, %v2023
          %v2077 = vsel %vm2025, %v2076, %v2075
          %v2078 = vperm.slane %v1249, %v2027
          %v2079 = vsel %vm2029, %v2078, %v2077
          %v2080 = vperm.slane %v1261, %v2031
          %v2081 = vsel %vm2033, %v2080, %v2079
          %v2082 = vperm.slane %v1273, %v2035
          %v2083 = vsel %vm2037, %v2082, %v2081
          %v2084 = vperm.slane %v1285, %v2039
          %v2085 = vsel %vm2041, %v2084, %v2083
          %v2086 = vperm.slane %v1297, %v2043
          %v2087 = vsel %vm2045, %v2086, %v2085
          %v2088 = vperm.slane %v1309, %v2047
          %v2089 = vsel %vm2049, %v2088, %v2087
          %v2090 = vperm.slane %v1321, %v2051
          %v2091 = vsel %vm2053, %v2090, %v2089
          %v2092 = vperm.slane %v1333, %v2055
          %v2093 = vsel %vm2057, %v2092, %v2091
          %v2094 = vperm.slane %v1345, %v2059
          %v2095 = vsel %vm2061, %v2094, %v2093
          %v2096 = vperm.slane %v1357, %v2063
          %v2097 = vsel %vm2065, %v2096, %v2095
          %vm2098 = vcmask 1041409
          %v2099 = vsel %vm2098, %v2097, %v2066
          %v2100 = vadd.s32 %v609, %v2099
          %v2101 = vperm.slane %v1633, %v609
          %v2102 = vperm.slane %v1645, %v2007
          %v2103 = vsel %vm2009, %v2102, %v2101
          %v2104 = vperm.slane %v1657, %v2011
          %v2105 = vsel %vm2013, %v2104, %v2103
          %v2106 = vperm.slane %v1669, %v2015
          %v2107 = vsel %vm2017, %v2106, %v2105
          %v2108 = vperm.slane %v1681, %v2019
          %v2109 = vsel %vm2021, %v2108, %v2107
          %v2110 = vperm.slane %v1693, %v2023
          %v2111 = vsel %vm2025, %v2110, %v2109
          %v2112 = vperm.slane %v1705, %v2027
          %v2113 = vsel %vm2029, %v2112, %v2111
          %v2114 = vperm.slane %v1717, %v2031
          %v2115 = vsel %vm2033, %v2114, %v2113
          %v2116 = vperm.slane %v1729, %v2035
          %v2117 = vsel %vm2037, %v2116, %v2115
          %v2118 = vperm.slane %v1741, %v2039
          %v2119 = vsel %vm2041, %v2118, %v2117
          %v2120 = vperm.slane %v1753, %v2043
          %v2121 = vsel %vm2045, %v2120, %v2119
          %v2122 = vperm.slane %v1765, %v2047
          %v2123 = vsel %vm2049, %v2122, %v2121
          %v2124 = vperm.slane %v1777, %v2051
          %v2125 = vsel %vm2053, %v2124, %v2123
          %v2126 = vperm.slane %v1789, %v2055
          %v2127 = vsel %vm2057, %v2126, %v2125
          %v2128 = vperm.slane %v1801, %v2059
          %v2129 = vsel %vm2061, %v2128, %v2127
          %v2130 = vperm.slane %v1813, %v2063
          %v2131 = vsel %vm2065, %v2130, %v2129
          %v2132 = vperm.slane %v1825, %v609
          %v2133 = vperm.slane %v1837, %v2007
          %v2134 = vsel %vm2009, %v2133, %v2132
          %v2135 = vperm.slane %v1849, %v2011
          %v2136 = vsel %vm2013, %v2135, %v2134
          %v2137 = vperm.slane %v1861, %v2015
          %v2138 = vsel %vm2017, %v2137, %v2136
          %v2139 = vperm.slane %v1873, %v2019
          %v2140 = vsel %vm2021, %v2139, %v2138
          %v2141 = vperm.slane %v1885, %v2023
          %v2142 = vsel %vm2025, %v2141, %v2140
          %v2143 = vperm.slane %v1897, %v2027
          %v2144 = vsel %vm2029, %v2143, %v2142
          %v2145 = vperm.slane %v1909, %v2031
          %v2146 = vsel %vm2033, %v2145, %v2144
          %v2147 = vperm.slane %v1921, %v2035
          %v2148 = vsel %vm2037, %v2147, %v2146
          %v2149 = vperm.slane %v1933, %v2039
          %v2150 = vsel %vm2041, %v2149, %v2148
          %v2151 = vperm.slane %v1945, %v2043
          %v2152 = vsel %vm2045, %v2151, %v2150
          %v2153 = vperm.slane %v1957, %v2047
          %v2154 = vsel %vm2049, %v2153, %v2152
          %v2155 = vperm.slane %v1969, %v2051
          %v2156 = vsel %vm2053, %v2155, %v2154
          %v2157 = vperm.slane %v1981, %v2055
          %v2158 = vsel %vm2057, %v2157, %v2156
          %v2159 = vperm.slane %v1993, %v2059
          %v2160 = vsel %vm2061, %v2159, %v2158
          %v2161 = vperm.slane %v2005, %v2063
          %v2162 = vsel %vm2065, %v2161, %v2160
          %v2163 = vsel %vm2098, %v2162, %v2131
          %v2164 = vadd.s32 %v609, %v2163
          %v2165 = vperm.slane %v2100, 0
          %v2166 = vlaneseq
          %v2167 = vshrl.u32 %v2166, 7
          %2169 = vset.pattern.permute.xlu0 %v2167
          %2170 = vperm.xlu0 %2169, %v2165
          %v2171 = vpop.permute.xlu0 %2170
          %v2172 = vlaneseq
          %v2173 = vshrl.u32 %v2172, 7
          %v2174 = vadd.s32 %v2173, 8
          %2175 = vset.pattern.permute.xlu0 %v2174
          %2176 = vperm.xlu0 %2175, %v2165
          %v2177 = vpop.permute.xlu0 %2176
          %v2178 = vlaneseq
          %v2179 = vshrl.u32 %v2178, 7
          %v2180 = vadd.s32 %v2179, 16
          %2181 = vset.pattern.permute.xlu0 %v2180
          %2182 = vperm.xlu0 %2181, %v2165
          %v2183 = vpop.permute.xlu0 %2182
          %v2184 = vlaneseq
          %v2185 = vshrl.u32 %v2184, 7
          %v2186 = vadd.s32 %v2185, 24
          %2187 = vset.pattern.permute.xlu0 %v2186
          %2188 = vperm.xlu0 %2187, %v2165
          %v2189 = vpop.permute.xlu0 %2188
          %v2190 = vlaneseq
          %v2191 = vshrl.u32 %v2190, 7
          %v2192 = vadd.s32 %v2191, 32
          %2193 = vset.pattern.permute.xlu0 %v2192
          %2194 = vperm.xlu0 %2193, %v2165
          %v2195 = vpop.permute.xlu0 %2194
          %v2196 = vlaneseq
          %v2197 = vshrl.u32 %v2196, 7
          %v2198 = vadd.s32 %v2197, 40
          %2199 = vset.pattern.permute.xlu0 %v2198
          %2200 = vperm.xlu0 %2199, %v2165
          %v2201 = vpop.permute.xlu0 %2200
          %v2202 = vlaneseq
          %v2203 = vshrl.u32 %v2202, 7
          %v2204 = vadd.s32 %v2203, 48
          %2205 = vset.pattern.permute.xlu0 %v2204
          %2206 = vperm.xlu0 %2205, %v2165
          %v2207 = vpop.permute.xlu0 %2206
          %v2208 = vlaneseq
          %v2209 = vshrl.u32 %v2208, 7
          %v2210 = vadd.s32 %v2209, 56
          %2211 = vset.pattern.permute.xlu0 %v2210
          %2212 = vperm.xlu0 %2211, %v2165
          %v2213 = vpop.permute.xlu0 %2212
          %v2214 = vlaneseq
          %v2215 = vshrl.u32 %v2214, 7
          %v2216 = vadd.s32 %v2215, 64
          %2217 = vset.pattern.permute.xlu0 %v2216
          %2218 = vperm.xlu0 %2217, %v2165
          %v2219 = vpop.permute.xlu0 %2218
          %v2220 = vlaneseq
          %v2221 = vshrl.u32 %v2220, 7
          %v2222 = vadd.s32 %v2221, 72
          %2223 = vset.pattern.permute.xlu0 %v2222
          %2224 = vperm.xlu0 %2223, %v2165
          %v2225 = vpop.permute.xlu0 %2224
          %v2226 = vlaneseq
          %v2227 = vshrl.u32 %v2226, 7
          %v2228 = vadd.s32 %v2227, 80
          %2229 = vset.pattern.permute.xlu0 %v2228
          %2230 = vperm.xlu0 %2229, %v2165
          %v2231 = vpop.permute.xlu0 %2230
          %v2232 = vlaneseq
          %v2233 = vshrl.u32 %v2232, 7
          %v2234 = vadd.s32 %v2233, 88
          %2235 = vset.pattern.permute.xlu0 %v2234
          %2236 = vperm.xlu0 %2235, %v2165
          %v2237 = vpop.permute.xlu0 %2236
          %v2238 = vlaneseq
          %v2239 = vshrl.u32 %v2238, 7
          %v2240 = vadd.s32 %v2239, 96
          %2241 = vset.pattern.permute.xlu0 %v2240
          %2242 = vperm.xlu0 %2241, %v2165
          %v2243 = vpop.permute.xlu0 %2242
          %v2244 = vlaneseq
          %v2245 = vshrl.u32 %v2244, 7
          %v2246 = vadd.s32 %v2245, 104
          %2247 = vset.pattern.permute.xlu0 %v2246
          %2248 = vperm.xlu0 %2247, %v2165
          %v2249 = vpop.permute.xlu0 %2248
          %v2250 = vlaneseq
          %v2251 = vshrl.u32 %v2250, 7
          %v2252 = vadd.s32 %v2251, 112
          %2253 = vset.pattern.permute.xlu0 %v2252
          %2254 = vperm.xlu0 %2253, %v2165
          %v2255 = vpop.permute.xlu0 %2254
          %v2256 = vlaneseq
          %v2257 = vshrl.u32 %v2256, 7
          %v2258 = vadd.s32 %v2257, 120
          %2259 = vset.pattern.permute.xlu0 %v2258
          %2260 = vperm.xlu0 %2259, %v2165
          %v2261 = vpop.permute.xlu0 %2260
          %v2262 = vperm.slane %v2100, 1
          %v2263 = vlaneseq
          %v2264 = vshrl.u32 %v2263, 7
          %2266 = vset.pattern.permute.xlu0 %v2264
          %2267 = vperm.xlu0 %2266, %v2262
          %v2268 = vpop.permute.xlu0 %2267
          %v2269 = vlaneseq
          %v2270 = vshrl.u32 %v2269, 7
          %v2271 = vadd.s32 %v2270, 8
          %2272 = vset.pattern.permute.xlu0 %v2271
          %2273 = vperm.xlu0 %2272, %v2262
          %v2274 = vpop.permute.xlu0 %2273
          %v2275 = vlaneseq
          %v2276 = vshrl.u32 %v2275, 7
          %v2277 = vadd.s32 %v2276, 16
          %2278 = vset.pattern.permute.xlu0 %v2277
          %2279 = vperm.xlu0 %2278, %v2262
          %v2280 = vpop.permute.xlu0 %2279
          %v2281 = vlaneseq
          %v2282 = vshrl.u32 %v2281, 7
          %v2283 = vadd.s32 %v2282, 24
          %2284 = vset.pattern.permute.xlu0 %v2283
          %2285 = vperm.xlu0 %2284, %v2262
          %v2286 = vpop.permute.xlu0 %2285
          %v2287 = vlaneseq
          %v2288 = vshrl.u32 %v2287, 7
          %v2289 = vadd.s32 %v2288, 32
          %2290 = vset.pattern.permute.xlu0 %v2289
          %2291 = vperm.xlu0 %2290, %v2262
          %v2292 = vpop.permute.xlu0 %2291
          %v2293 = vlaneseq
          %v2294 = vshrl.u32 %v2293, 7
          %v2295 = vadd.s32 %v2294, 40
          %2296 = vset.pattern.permute.xlu0 %v2295
          %2297 = vperm.xlu0 %2296, %v2262
          %v2298 = vpop.permute.xlu0 %2297
          %v2299 = vlaneseq
          %v2300 = vshrl.u32 %v2299, 7
          %v2301 = vadd.s32 %v2300, 48
          %2302 = vset.pattern.permute.xlu0 %v2301
          %2303 = vperm.xlu0 %2302, %v2262
          %v2304 = vpop.permute.xlu0 %2303
          %v2305 = vlaneseq
          %v2306 = vshrl.u32 %v2305, 7
          %v2307 = vadd.s32 %v2306, 56
          %2308 = vset.pattern.permute.xlu0 %v2307
          %2309 = vperm.xlu0 %2308, %v2262
          %v2310 = vpop.permute.xlu0 %2309
          %v2311 = vlaneseq
          %v2312 = vshrl.u32 %v2311, 7
          %v2313 = vadd.s32 %v2312, 64
          %2314 = vset.pattern.permute.xlu0 %v2313
          %2315 = vperm.xlu0 %2314, %v2262
          %v2316 = vpop.permute.xlu0 %2315
          %v2317 = vlaneseq
          %v2318 = vshrl.u32 %v2317, 7
          %v2319 = vadd.s32 %v2318, 72
          %2320 = vset.pattern.permute.xlu0 %v2319
          %2321 = vperm.xlu0 %2320, %v2262
          %v2322 = vpop.permute.xlu0 %2321
          %v2323 = vlaneseq
          %v2324 = vshrl.u32 %v2323, 7
          %v2325 = vadd.s32 %v2324, 80
          %2326 = vset.pattern.permute.xlu0 %v2325
          %2327 = vperm.xlu0 %2326, %v2262
          %v2328 = vpop.permute.xlu0 %2327
          %v2329 = vlaneseq
          %v2330 = vshrl.u32 %v2329, 7
          %v2331 = vadd.s32 %v2330, 88
          %2332 = vset.pattern.permute.xlu0 %v2331
          %2333 = vperm.xlu0 %2332, %v2262
          %v2334 = vpop.permute.xlu0 %2333
          %v2335 = vlaneseq
          %v2336 = vshrl.u32 %v2335, 7
          %v2337 = vadd.s32 %v2336, 96
          %2338 = vset.pattern.permute.xlu0 %v2337
          %2339 = vperm.xlu0 %2338, %v2262
          %v2340 = vpop.permute.xlu0 %2339
          %v2341 = vlaneseq
          %v2342 = vshrl.u32 %v2341, 7
          %v2343 = vadd.s32 %v2342, 104
          %2344 = vset.pattern.permute.xlu0 %v2343
          %2345 = vperm.xlu0 %2344, %v2262
          %v2346 = vpop.permute.xlu0 %2345
          %v2347 = vlaneseq
          %v2348 = vshrl.u32 %v2347, 7
          %v2349 = vadd.s32 %v2348, 112
          %2350 = vset.pattern.permute.xlu0 %v2349
          %2351 = vperm.xlu0 %2350, %v2262
          %v2352 = vpop.permute.xlu0 %2351
          %v2353 = vlaneseq
          %v2354 = vshrl.u32 %v2353, 7
          %v2355 = vadd.s32 %v2354, 120
          %2356 = vset.pattern.permute.xlu0 %v2355
          %2357 = vperm.xlu0 %2356, %v2262
          %v2358 = vpop.permute.xlu0 %2357
          %vm2359 = vcmp.eq.s32.totalorder %v2171, %v609
          %vm2360 = vcmp.eq.s32.totalorder %v2177, %v609
          %vm2361 = vcmp.eq.s32.totalorder %v2183, %v609
          %vm2362 = vcmp.eq.s32.totalorder %v2189, %v609
          %vm2363 = vcmp.eq.s32.totalorder %v2195, %v609
          %vm2364 = vcmp.eq.s32.totalorder %v2201, %v609
          %vm2365 = vcmp.eq.s32.totalorder %v2207, %v609
          %vm2366 = vcmp.eq.s32.totalorder %v2213, %v609
          %vm2367 = vcmp.eq.s32.totalorder %v2219, %v609
          %vm2368 = vcmp.eq.s32.totalorder %v2225, %v609
          %vm2369 = vcmp.eq.s32.totalorder %v2231, %v609
          %vm2370 = vcmp.eq.s32.totalorder %v2237, %v609
          %vm2371 = vcmp.eq.s32.totalorder %v2243, %v609
          %vm2372 = vcmp.eq.s32.totalorder %v2249, %v609
          %vm2373 = vcmp.eq.s32.totalorder %v2255, %v609
          %vm2374 = vcmp.eq.s32.totalorder %v2261, %v609
          %vm2375 = vcmp.eq.s32.totalorder %v2268, %v609
          %vm2376 = vcmp.eq.s32.totalorder %v2274, %v609
          %vm2377 = vcmp.eq.s32.totalorder %v2280, %v609
          %vm2378 = vcmp.eq.s32.totalorder %v2286, %v609
          %vm2379 = vcmp.eq.s32.totalorder %v2292, %v609
          %vm2380 = vcmp.eq.s32.totalorder %v2298, %v609
          %vm2381 = vcmp.eq.s32.totalorder %v2304, %v609
          %vm2382 = vcmp.eq.s32.totalorder %v2310, %v609
          %vm2383 = vcmp.eq.s32.totalorder %v2316, %v609
          %vm2384 = vcmp.eq.s32.totalorder %v2322, %v609
          %vm2385 = vcmp.eq.s32.totalorder %v2328, %v609
          %vm2386 = vcmp.eq.s32.totalorder %v2334, %v609
          %vm2387 = vcmp.eq.s32.totalorder %v2340, %v609
          %vm2388 = vcmp.eq.s32.totalorder %v2346, %v609
          %vm2389 = vcmp.eq.s32.totalorder %v2352, %v609
          %vm2390 = vcmp.eq.s32.totalorder %v2358, %v609
          %v2391 = vperm.slane %v2164, 0
          %v2392 = vlaneseq
          %v2393 = vshrl.u32 %v2392, 7
          %2395 = vset.pattern.permute.xlu0 %v2393
          %2396 = vperm.xlu0 %2395, %v2391
          %v2397 = vpop.permute.xlu0 %2396
          %v2398 = vlaneseq
          %v2399 = vshrl.u32 %v2398, 7
          %v2400 = vadd.s32 %v2399, 8
          %2401 = vset.pattern.permute.xlu0 %v2400
          %2402 = vperm.xlu0 %2401, %v2391
          %v2403 = vpop.permute.xlu0 %2402
          %v2404 = vlaneseq
          %v2405 = vshrl.u32 %v2404, 7
          %v2406 = vadd.s32 %v2405, 16
          %2407 = vset.pattern.permute.xlu0 %v2406
          %2408 = vperm.xlu0 %2407, %v2391
          %v2409 = vpop.permute.xlu0 %2408
          %v2410 = vlaneseq
          %v2411 = vshrl.u32 %v2410, 7
          %v2412 = vadd.s32 %v2411, 24
          %2413 = vset.pattern.permute.xlu0 %v2412
          %2414 = vperm.xlu0 %2413, %v2391
          %v2415 = vpop.permute.xlu0 %2414
          %v2416 = vlaneseq
          %v2417 = vshrl.u32 %v2416, 7
          %v2418 = vadd.s32 %v2417, 32
          %2419 = vset.pattern.permute.xlu0 %v2418
          %2420 = vperm.xlu0 %2419, %v2391
          %v2421 = vpop.permute.xlu0 %2420
          %v2422 = vlaneseq
          %v2423 = vshrl.u32 %v2422, 7
          %v2424 = vadd.s32 %v2423, 40
          %2425 = vset.pattern.permute.xlu0 %v2424
          %2426 = vperm.xlu0 %2425, %v2391
          %v2427 = vpop.permute.xlu0 %2426
          %v2428 = vlaneseq
          %v2429 = vshrl.u32 %v2428, 7
          %v2430 = vadd.s32 %v2429, 48
          %2431 = vset.pattern.permute.xlu0 %v2430
          %2432 = vperm.xlu0 %2431, %v2391
          %v2433 = vpop.permute.xlu0 %2432
          %v2434 = vlaneseq
          %v2435 = vshrl.u32 %v2434, 7
          %v2436 = vadd.s32 %v2435, 56
          %2437 = vset.pattern.permute.xlu0 %v2436
          %2438 = vperm.xlu0 %2437, %v2391
          %v2439 = vpop.permute.xlu0 %2438
          %v2440 = vlaneseq
          %v2441 = vshrl.u32 %v2440, 7
          %v2442 = vadd.s32 %v2441, 64
          %2443 = vset.pattern.permute.xlu0 %v2442
          %2444 = vperm.xlu0 %2443, %v2391
          %v2445 = vpop.permute.xlu0 %2444
          %v2446 = vlaneseq
          %v2447 = vshrl.u32 %v2446, 7
          %v2448 = vadd.s32 %v2447, 72
          %2449 = vset.pattern.permute.xlu0 %v2448
          %2450 = vperm.xlu0 %2449, %v2391
          %v2451 = vpop.permute.xlu0 %2450
          %v2452 = vlaneseq
          %v2453 = vshrl.u32 %v2452, 7
          %v2454 = vadd.s32 %v2453, 80
          %2455 = vset.pattern.permute.xlu0 %v2454
          %2456 = vperm.xlu0 %2455, %v2391
          %v2457 = vpop.permute.xlu0 %2456
          %v2458 = vlaneseq
          %v2459 = vshrl.u32 %v2458, 7
          %v2460 = vadd.s32 %v2459, 88
          %2461 = vset.pattern.permute.xlu0 %v2460
          %2462 = vperm.xlu0 %2461, %v2391
          %v2463 = vpop.permute.xlu0 %2462
          %v2464 = vlaneseq
          %v2465 = vshrl.u32 %v2464, 7
          %v2466 = vadd.s32 %v2465, 96
          %2467 = vset.pattern.permute.xlu0 %v2466
          %2468 = vperm.xlu0 %2467, %v2391
          %v2469 = vpop.permute.xlu0 %2468
          %v2470 = vlaneseq
          %v2471 = vshrl.u32 %v2470, 7
          %v2472 = vadd.s32 %v2471, 104
          %2473 = vset.pattern.permute.xlu0 %v2472
          %2474 = vperm.xlu0 %2473, %v2391
          %v2475 = vpop.permute.xlu0 %2474
          %v2476 = vlaneseq
          %v2477 = vshrl.u32 %v2476, 7
          %v2478 = vadd.s32 %v2477, 112
          %2479 = vset.pattern.permute.xlu0 %v2478
          %2480 = vperm.xlu0 %2479, %v2391
          %v2481 = vpop.permute.xlu0 %2480
          %v2482 = vlaneseq
          %v2483 = vshrl.u32 %v2482, 7
          %v2484 = vadd.s32 %v2483, 120
          %2485 = vset.pattern.permute.xlu0 %v2484
          %2486 = vperm.xlu0 %2485, %v2391
          %v2487 = vpop.permute.xlu0 %2486
          %v2488 = vperm.slane %v2164, 1
          %v2489 = vlaneseq
          %v2490 = vshrl.u32 %v2489, 7
          %2492 = vset.pattern.permute.xlu0 %v2490
          %2493 = vperm.xlu0 %2492, %v2488
          %v2494 = vpop.permute.xlu0 %2493
          %v2495 = vlaneseq
          %v2496 = vshrl.u32 %v2495, 7
          %v2497 = vadd.s32 %v2496, 8
          %2498 = vset.pattern.permute.xlu0 %v2497
          %2499 = vperm.xlu0 %2498, %v2488
          %v2500 = vpop.permute.xlu0 %2499
          %v2501 = vlaneseq
          %v2502 = vshrl.u32 %v2501, 7
          %v2503 = vadd.s32 %v2502, 16
          %2504 = vset.pattern.permute.xlu0 %v2503
          %2505 = vperm.xlu0 %2504, %v2488
          %v2506 = vpop.permute.xlu0 %2505
          %v2507 = vlaneseq
          %v2508 = vshrl.u32 %v2507, 7
          %v2509 = vadd.s32 %v2508, 24
          %2510 = vset.pattern.permute.xlu0 %v2509
          %2511 = vperm.xlu0 %2510, %v2488
          %v2512 = vpop.permute.xlu0 %2511
          %v2513 = vlaneseq
          %v2514 = vshrl.u32 %v2513, 7
          %v2515 = vadd.s32 %v2514, 32
          %2516 = vset.pattern.permute.xlu0 %v2515
          %2517 = vperm.xlu0 %2516, %v2488
          %v2518 = vpop.permute.xlu0 %2517
          %v2519 = vlaneseq
          %v2520 = vshrl.u32 %v2519, 7
          %v2521 = vadd.s32 %v2520, 40
          %2522 = vset.pattern.permute.xlu0 %v2521
          %2523 = vperm.xlu0 %2522, %v2488
          %v2524 = vpop.permute.xlu0 %2523
          %v2525 = vlaneseq
          %v2526 = vshrl.u32 %v2525, 7
          %v2527 = vadd.s32 %v2526, 48
          %2528 = vset.pattern.permute.xlu0 %v2527
          %2529 = vperm.xlu0 %2528, %v2488
          %v2530 = vpop.permute.xlu0 %2529
          %v2531 = vlaneseq
          %v2532 = vshrl.u32 %v2531, 7
          %v2533 = vadd.s32 %v2532, 56
          %2534 = vset.pattern.permute.xlu0 %v2533
          %2535 = vperm.xlu0 %2534, %v2488
          %v2536 = vpop.permute.xlu0 %2535
          %v2537 = vlaneseq
          %v2538 = vshrl.u32 %v2537, 7
          %v2539 = vadd.s32 %v2538, 64
          %2540 = vset.pattern.permute.xlu0 %v2539
          %2541 = vperm.xlu0 %2540, %v2488
          %v2542 = vpop.permute.xlu0 %2541
          %v2543 = vlaneseq
          %v2544 = vshrl.u32 %v2543, 7
          %v2545 = vadd.s32 %v2544, 72
          %2546 = vset.pattern.permute.xlu0 %v2545
          %2547 = vperm.xlu0 %2546, %v2488
          %v2548 = vpop.permute.xlu0 %2547
          %v2549 = vlaneseq
          %v2550 = vshrl.u32 %v2549, 7
          %v2551 = vadd.s32 %v2550, 80
          %2552 = vset.pattern.permute.xlu0 %v2551
          %2553 = vperm.xlu0 %2552, %v2488
          %v2554 = vpop.permute.xlu0 %2553
          %v2555 = vlaneseq
          %v2556 = vshrl.u32 %v2555, 7
          %v2557 = vadd.s32 %v2556, 88
          %2558 = vset.pattern.permute.xlu0 %v2557
          %2559 = vperm.xlu0 %2558, %v2488
          %v2560 = vpop.permute.xlu0 %2559
          %v2561 = vlaneseq
          %v2562 = vshrl.u32 %v2561, 7
          %v2563 = vadd.s32 %v2562, 96
          %2564 = vset.pattern.permute.xlu0 %v2563
          %2565 = vperm.xlu0 %2564, %v2488
          %v2566 = vpop.permute.xlu0 %2565
          %v2567 = vlaneseq
          %v2568 = vshrl.u32 %v2567, 7
          %v2569 = vadd.s32 %v2568, 104
          %2570 = vset.pattern.permute.xlu0 %v2569
          %2571 = vperm.xlu0 %2570, %v2488
          %v2572 = vpop.permute.xlu0 %2571
          %v2573 = vlaneseq
          %v2574 = vshrl.u32 %v2573, 7
          %v2575 = vadd.s32 %v2574, 112
          %2576 = vset.pattern.permute.xlu0 %v2575
          %2577 = vperm.xlu0 %2576, %v2488
          %v2578 = vpop.permute.xlu0 %2577
          %v2579 = vlaneseq
          %v2580 = vshrl.u32 %v2579, 7
          %v2581 = vadd.s32 %v2580, 120
          %2582 = vset.pattern.permute.xlu0 %v2581
          %2583 = vperm.xlu0 %2582, %v2488
          %v2584 = vpop.permute.xlu0 %2583
          %vm2585 = vcmp.eq.s32.totalorder %v2397, %v609
          %vm2586 = vcmp.eq.s32.totalorder %v2403, %v609
          %vm2587 = vcmp.eq.s32.totalorder %v2409, %v609
          %vm2588 = vcmp.eq.s32.totalorder %v2415, %v609
          %vm2589 = vcmp.eq.s32.totalorder %v2421, %v609
          %vm2590 = vcmp.eq.s32.totalorder %v2427, %v609
          %vm2591 = vcmp.eq.s32.totalorder %v2433, %v609
          %vm2592 = vcmp.eq.s32.totalorder %v2439, %v609
          %vm2593 = vcmp.eq.s32.totalorder %v2445, %v609
          %vm2594 = vcmp.eq.s32.totalorder %v2451, %v609
          %vm2595 = vcmp.eq.s32.totalorder %v2457, %v609
          %vm2596 = vcmp.eq.s32.totalorder %v2463, %v609
          %vm2597 = vcmp.eq.s32.totalorder %v2469, %v609
          %vm2598 = vcmp.eq.s32.totalorder %v2475, %v609
          %vm2599 = vcmp.eq.s32.totalorder %v2481, %v609
          %vm2600 = vcmp.eq.s32.totalorder %v2487, %v609
          %vm2601 = vcmp.eq.s32.totalorder %v2494, %v609
          %vm2602 = vcmp.eq.s32.totalorder %v2500, %v609
          %vm2603 = vcmp.eq.s32.totalorder %v2506, %v609
          %vm2604 = vcmp.eq.s32.totalorder %v2512, %v609
          %vm2605 = vcmp.eq.s32.totalorder %v2518, %v609
          %vm2606 = vcmp.eq.s32.totalorder %v2524, %v609
          %vm2607 = vcmp.eq.s32.totalorder %v2530, %v609
          %vm2608 = vcmp.eq.s32.totalorder %v2536, %v609
          %vm2609 = vcmp.eq.s32.totalorder %v2542, %v609
          %vm2610 = vcmp.eq.s32.totalorder %v2548, %v609
          %vm2611 = vcmp.eq.s32.totalorder %v2554, %v609
          %vm2612 = vcmp.eq.s32.totalorder %v2560, %v609
          %vm2613 = vcmp.eq.s32.totalorder %v2566, %v609
          %vm2614 = vcmp.eq.s32.totalorder %v2572, %v609
          %vm2615 = vcmp.eq.s32.totalorder %v2578, %v609
          %vm2616 = vcmp.eq.s32.totalorder %v2584, %v609
          %v2617 = vsel %vm2359, %v718, 0.0
          %v2618 = vsel %vm2360, %v724, 0.0
          %v2619 = vsel %vm2361, %v730, 0.0
          %v2620 = vsel %vm2362, %v736, 0.0
          %v2621 = vsel %vm2363, %v742, 0.0
          %v2622 = vsel %vm2364, %v748, 0.0
          %v2623 = vsel %vm2365, %v754, 0.0
          %v2624 = vsel %vm2366, %v760, 0.0
          %v2625 = vsel %vm2367, %v766, 0.0
          %v2626 = vsel %vm2368, %v772, 0.0
          %v2627 = vsel %vm2369, %v778, 0.0
          %v2628 = vsel %vm2370, %v784, 0.0
          %v2629 = vsel %vm2371, %v790, 0.0
          %v2630 = vsel %vm2372, %v796, 0.0
          %v2631 = vsel %vm2373, %v802, 0.0
          %v2632 = vsel %vm2374, %v808, 0.0
          %v2633 = vsel %vm2375, %v815, 0.0
          %v2634 = vsel %vm2376, %v821, 0.0
          %v2635 = vsel %vm2377, %v827, 0.0
          %v2636 = vsel %vm2378, %v833, 0.0
          %v2637 = vsel %vm2379, %v839, 0.0
          %v2638 = vsel %vm2380, %v845, 0.0
          %v2639 = vsel %vm2381, %v851, 0.0
          %v2640 = vsel %vm2382, %v857, 0.0
          %v2641 = vsel %vm2383, %v863, 0.0
          %v2642 = vsel %vm2384, %v869, 0.0
          %v2643 = vsel %vm2385, %v875, 0.0
          %v2644 = vsel %vm2386, %v881, 0.0
          %v2645 = vsel %vm2387, %v887, 0.0
          %v2646 = vsel %vm2388, %v893, 0.0
          %v2647 = vsel %vm2389, %v899, 0.0
          %v2648 = vsel %vm2390, %v905, 0.0
          %v2649 = vadd.f32 %v2617, %v2618
          %v2650 = vadd.f32 %v2649, %v2619
          %v2651 = vadd.f32 %v2650, %v2620
          %v2652 = vadd.f32 %v2651, %v2621
          %v2653 = vadd.f32 %v2652, %v2622
          %v2654 = vadd.f32 %v2653, %v2623
          %v2655 = vadd.f32 %v2654, %v2624
          %v2656 = vadd.f32 %v2655, %v2625
          %v2657 = vadd.f32 %v2656, %v2626
          %v2658 = vadd.f32 %v2657, %v2627
          %v2659 = vadd.f32 %v2658, %v2628
          %v2660 = vadd.f32 %v2659, %v2629
          %v2661 = vadd.f32 %v2660, %v2630
          %v2662 = vadd.f32 %v2661, %v2631
          %v2663 = vadd.f32 %v2662, %v2632
          %v2664 = vrot.slane %v2663, 4
          %v2665 = vadd.f32 %v2663, %v2664
          %v2666 = vrot.slane %v2665, 2
          %v2667 = vadd.f32 %v2665, %v2666
          %v2668 = vrot.slane %v2667, 1
          %v2669 = vadd.f32 %v2667, %v2668
          %v2670 = vadd.f32 %v2633, %v2634
          %v2671 = vadd.f32 %v2670, %v2635
          %v2672 = vadd.f32 %v2671, %v2636
          %v2673 = vadd.f32 %v2672, %v2637
          %v2674 = vadd.f32 %v2673, %v2638
          %v2675 = vadd.f32 %v2674, %v2639
          %v2676 = vadd.f32 %v2675, %v2640
          %v2677 = vadd.f32 %v2676, %v2641
          %v2678 = vadd.f32 %v2677, %v2642
          %v2679 = vadd.f32 %v2678, %v2643
          %v2680 = vadd.f32 %v2679, %v2644
          %v2681 = vadd.f32 %v2680, %v2645
          %v2682 = vadd.f32 %v2681, %v2646
          %v2683 = vadd.f32 %v2682, %v2647
          %v2684 = vadd.f32 %v2683, %v2648
          %v2685 = vrot.slane %v2684, 4
          %v2686 = vadd.f32 %v2684, %v2685
          %v2687 = vrot.slane %v2686, 2
          %v2688 = vadd.f32 %v2686, %v2687
          %v2689 = vrot.slane %v2688, 1
          %v2690 = vadd.f32 %v2688, %v2689
          %v2691 = vsel %vm2585, %v1366, 0.0
          %v2692 = vsel %vm2586, %v1372, 0.0
          %v2693 = vsel %vm2587, %v1378, 0.0
          %v2694 = vsel %vm2588, %v1384, 0.0
          %v2695 = vsel %vm2589, %v1390, 0.0
          %v2696 = vsel %vm2590, %v1396, 0.0
          %v2697 = vsel %vm2591, %v1402, 0.0
          %v2698 = vsel %vm2592, %v1408, 0.0
          %v2699 = vsel %vm2593, %v1414, 0.0
          %v2700 = vsel %vm2594, %v1420, 0.0
          %v2701 = vsel %vm2595, %v1426, 0.0
          %v2702 = vsel %vm2596, %v1432, 0.0
          %v2703 = vsel %vm2597, %v1438, 0.0
          %v2704 = vsel %vm2598, %v1444, 0.0
          %v2705 = vsel %vm2599, %v1450, 0.0
          %v2706 = vsel %vm2600, %v1456, 0.0
          %v2707 = vsel %vm2601, %v1463, 0.0
          %v2708 = vsel %vm2602, %v1469, 0.0
          %v2709 = vsel %vm2603, %v1475, 0.0
          %v2710 = vsel %vm2604, %v1481, 0.0
          %v2711 = vsel %vm2605, %v1487, 0.0
          %v2712 = vsel %vm2606, %v1493, 0.0
          %v2713 = vsel %vm2607, %v1499, 0.0
          %v2714 = vsel %vm2608, %v1505, 0.0
          %v2715 = vsel %vm2609, %v1511, 0.0
          %v2716 = vsel %vm2610, %v1517, 0.0
          %v2717 = vsel %vm2611, %v1523, 0.0
          %v2718 = vsel %vm2612, %v1529, 0.0
          %v2719 = vsel %vm2613, %v1535, 0.0
          %v2720 = vsel %vm2614, %v1541, 0.0
          %v2721 = vsel %vm2615, %v1547, 0.0
          %v2722 = vsel %vm2616, %v1553, 0.0
          %v2723 = vadd.f32 %v2691, %v2692
          %v2724 = vadd.f32 %v2723, %v2693
          %v2725 = vadd.f32 %v2724, %v2694
          %v2726 = vadd.f32 %v2725, %v2695
          %v2727 = vadd.f32 %v2726, %v2696
          %v2728 = vadd.f32 %v2727, %v2697
          %v2729 = vadd.f32 %v2728, %v2698
          %v2730 = vadd.f32 %v2729, %v2699
          %v2731 = vadd.f32 %v2730, %v2700
          %v2732 = vadd.f32 %v2731, %v2701
          %v2733 = vadd.f32 %v2732, %v2702
          %v2734 = vadd.f32 %v2733, %v2703
          %v2735 = vadd.f32 %v2734, %v2704
          %v2736 = vadd.f32 %v2735, %v2705
          %v2737 = vadd.f32 %v2736, %v2706
          %v2738 = vrot.slane %v2737, 4
          %v2739 = vadd.f32 %v2737, %v2738
          %v2740 = vrot.slane %v2739, 2
          %v2741 = vadd.f32 %v2739, %v2740
          %v2742 = vrot.slane %v2741, 1
          %v2743 = vadd.f32 %v2741, %v2742
          %v2744 = vadd.f32 %v2707, %v2708
          %v2745 = vadd.f32 %v2744, %v2709
          %v2746 = vadd.f32 %v2745, %v2710
          %v2747 = vadd.f32 %v2746, %v2711
          %v2748 = vadd.f32 %v2747, %v2712
          %v2749 = vadd.f32 %v2748, %v2713
          %v2750 = vadd.f32 %v2749, %v2714
          %v2751 = vadd.f32 %v2750, %v2715
          %v2752 = vadd.f32 %v2751, %v2716
          %v2753 = vadd.f32 %v2752, %v2717
          %v2754 = vadd.f32 %v2753, %v2718
          %v2755 = vadd.f32 %v2754, %v2719
          %v2756 = vadd.f32 %v2755, %v2720
          %v2757 = vadd.f32 %v2756, %v2721
          %v2758 = vadd.f32 %v2757, %v2722
          %v2759 = vrot.slane %v2758, 4
          %v2760 = vadd.f32 %v2758, %v2759
          %v2761 = vrot.slane %v2760, 2
          %v2762 = vadd.f32 %v2760, %v2761
          %v2763 = vrot.slane %v2762, 1
          %v2764 = vadd.f32 %v2762, %v2763
          %v2765 = vadd.f32 %v2669, %v2743
          %v2766 = vadd.f32 %v2690, %v2764
          %v2767 = vperm.slane %v646, 0
          %v2768 = vlaneseq
          %v2769 = vshrl.u32 %v2768, 7
          %2771 = vset.pattern.permute.xlu0 %v2769
          %2772 = vperm.xlu0 %2771, %v2767
          %v2773 = vpop.permute.xlu0 %2772
          %v2774 = vlaneseq
          %v2775 = vshrl.u32 %v2774, 7
          %v2776 = vadd.s32 %v2775, 8
          %2777 = vset.pattern.permute.xlu0 %v2776
          %2778 = vperm.xlu0 %2777, %v2767
          %v2779 = vpop.permute.xlu0 %2778
          %v2780 = vlaneseq
          %v2781 = vshrl.u32 %v2780, 7
          %v2782 = vadd.s32 %v2781, 16
          %2783 = vset.pattern.permute.xlu0 %v2782
          %2784 = vperm.xlu0 %2783, %v2767
          %v2785 = vpop.permute.xlu0 %2784
          %v2786 = vlaneseq
          %v2787 = vshrl.u32 %v2786, 7
          %v2788 = vadd.s32 %v2787, 24
          %2789 = vset.pattern.permute.xlu0 %v2788
          %2790 = vperm.xlu0 %2789, %v2767
          %v2791 = vpop.permute.xlu0 %2790
          %v2792 = vlaneseq
          %v2793 = vshrl.u32 %v2792, 7
          %v2794 = vadd.s32 %v2793, 32
          %2795 = vset.pattern.permute.xlu0 %v2794
          %2796 = vperm.xlu0 %2795, %v2767
          %v2797 = vpop.permute.xlu0 %2796
          %v2798 = vlaneseq
          %v2799 = vshrl.u32 %v2798, 7
          %v2800 = vadd.s32 %v2799, 40
          %2801 = vset.pattern.permute.xlu0 %v2800
          %2802 = vperm.xlu0 %2801, %v2767
          %v2803 = vpop.permute.xlu0 %2802
          %v2804 = vlaneseq
          %v2805 = vshrl.u32 %v2804, 7
          %v2806 = vadd.s32 %v2805, 48
          %2807 = vset.pattern.permute.xlu0 %v2806
          %2808 = vperm.xlu0 %2807, %v2767
          %v2809 = vpop.permute.xlu0 %2808
          %v2810 = vlaneseq
          %v2811 = vshrl.u32 %v2810, 7
          %v2812 = vadd.s32 %v2811, 56
          %2813 = vset.pattern.permute.xlu0 %v2812
          %2814 = vperm.xlu0 %2813, %v2767
          %v2815 = vpop.permute.xlu0 %2814
          %v2816 = vlaneseq
          %v2817 = vshrl.u32 %v2816, 7
          %v2818 = vadd.s32 %v2817, 64
          %2819 = vset.pattern.permute.xlu0 %v2818
          %2820 = vperm.xlu0 %2819, %v2767
          %v2821 = vpop.permute.xlu0 %2820
          %v2822 = vlaneseq
          %v2823 = vshrl.u32 %v2822, 7
          %v2824 = vadd.s32 %v2823, 72
          %2825 = vset.pattern.permute.xlu0 %v2824
          %2826 = vperm.xlu0 %2825, %v2767
          %v2827 = vpop.permute.xlu0 %2826
          %v2828 = vlaneseq
          %v2829 = vshrl.u32 %v2828, 7
          %v2830 = vadd.s32 %v2829, 80
          %2831 = vset.pattern.permute.xlu0 %v2830
          %2832 = vperm.xlu0 %2831, %v2767
          %v2833 = vpop.permute.xlu0 %2832
          %v2834 = vlaneseq
          %v2835 = vshrl.u32 %v2834, 7
          %v2836 = vadd.s32 %v2835, 88
          %2837 = vset.pattern.permute.xlu0 %v2836
          %2838 = vperm.xlu0 %2837, %v2767
          %v2839 = vpop.permute.xlu0 %2838
          %v2840 = vlaneseq
          %v2841 = vshrl.u32 %v2840, 7
          %v2842 = vadd.s32 %v2841, 96
          %2843 = vset.pattern.permute.xlu0 %v2842
          %2844 = vperm.xlu0 %2843, %v2767
          %v2845 = vpop.permute.xlu0 %2844
          %v2846 = vlaneseq
          %v2847 = vshrl.u32 %v2846, 7
          %v2848 = vadd.s32 %v2847, 104
          %2849 = vset.pattern.permute.xlu0 %v2848
          %2850 = vperm.xlu0 %2849, %v2767
          %v2851 = vpop.permute.xlu0 %2850
          %v2852 = vlaneseq
          %v2853 = vshrl.u32 %v2852, 7
          %v2854 = vadd.s32 %v2853, 112
          %2855 = vset.pattern.permute.xlu0 %v2854
          %2856 = vperm.xlu0 %2855, %v2767
          %v2857 = vpop.permute.xlu0 %2856
          %v2858 = vlaneseq
          %v2859 = vshrl.u32 %v2858, 7
          %v2860 = vadd.s32 %v2859, 120
          %2861 = vset.pattern.permute.xlu0 %v2860
          %2862 = vperm.xlu0 %2861, %v2767
          %v2863 = vpop.permute.xlu0 %2862
          %v2864 = vperm.slane %v646, 1
          %v2865 = vlaneseq
          %v2866 = vshrl.u32 %v2865, 7
          %2868 = vset.pattern.permute.xlu0 %v2866
          %2869 = vperm.xlu0 %2868, %v2864
          %v2870 = vpop.permute.xlu0 %2869
          %v2871 = vlaneseq
          %v2872 = vshrl.u32 %v2871, 7
          %v2873 = vadd.s32 %v2872, 8
          %2874 = vset.pattern.permute.xlu0 %v2873
          %2875 = vperm.xlu0 %2874, %v2864
          %v2876 = vpop.permute.xlu0 %2875
          %v2877 = vlaneseq
          %v2878 = vshrl.u32 %v2877, 7
          %v2879 = vadd.s32 %v2878, 16
          %2880 = vset.pattern.permute.xlu0 %v2879
          %2881 = vperm.xlu0 %2880, %v2864
          %v2882 = vpop.permute.xlu0 %2881
          %v2883 = vlaneseq
          %v2884 = vshrl.u32 %v2883, 7
          %v2885 = vadd.s32 %v2884, 24
          %2886 = vset.pattern.permute.xlu0 %v2885
          %2887 = vperm.xlu0 %2886, %v2864
          %v2888 = vpop.permute.xlu0 %2887
          %v2889 = vlaneseq
          %v2890 = vshrl.u32 %v2889, 7
          %v2891 = vadd.s32 %v2890, 32
          %2892 = vset.pattern.permute.xlu0 %v2891
          %2893 = vperm.xlu0 %2892, %v2864
          %v2894 = vpop.permute.xlu0 %2893
          %v2895 = vlaneseq
          %v2896 = vshrl.u32 %v2895, 7
          %v2897 = vadd.s32 %v2896, 40
          %2898 = vset.pattern.permute.xlu0 %v2897
          %2899 = vperm.xlu0 %2898, %v2864
          %v2900 = vpop.permute.xlu0 %2899
          %v2901 = vlaneseq
          %v2902 = vshrl.u32 %v2901, 7
          %v2903 = vadd.s32 %v2902, 48
          %2904 = vset.pattern.permute.xlu0 %v2903
          %2905 = vperm.xlu0 %2904, %v2864
          %v2906 = vpop.permute.xlu0 %2905
          %v2907 = vlaneseq
          %v2908 = vshrl.u32 %v2907, 7
          %v2909 = vadd.s32 %v2908, 56
          %2910 = vset.pattern.permute.xlu0 %v2909
          %2911 = vperm.xlu0 %2910, %v2864
          %v2912 = vpop.permute.xlu0 %2911
          %v2913 = vlaneseq
          %v2914 = vshrl.u32 %v2913, 7
          %v2915 = vadd.s32 %v2914, 64
          %2916 = vset.pattern.permute.xlu0 %v2915
          %2917 = vperm.xlu0 %2916, %v2864
          %v2918 = vpop.permute.xlu0 %2917
          %v2919 = vlaneseq
          %v2920 = vshrl.u32 %v2919, 7
          %v2921 = vadd.s32 %v2920, 72
          %2922 = vset.pattern.permute.xlu0 %v2921
          %2923 = vperm.xlu0 %2922, %v2864
          %v2924 = vpop.permute.xlu0 %2923
          %v2925 = vlaneseq
          %v2926 = vshrl.u32 %v2925, 7
          %v2927 = vadd.s32 %v2926, 80
          %2928 = vset.pattern.permute.xlu0 %v2927
          %2929 = vperm.xlu0 %2928, %v2864
          %v2930 = vpop.permute.xlu0 %2929
          %v2931 = vlaneseq
          %v2932 = vshrl.u32 %v2931, 7
          %v2933 = vadd.s32 %v2932, 88
          %2934 = vset.pattern.permute.xlu0 %v2933
          %2935 = vperm.xlu0 %2934, %v2864
          %v2936 = vpop.permute.xlu0 %2935
          %v2937 = vlaneseq
          %v2938 = vshrl.u32 %v2937, 7
          %v2939 = vadd.s32 %v2938, 96
          %2940 = vset.pattern.permute.xlu0 %v2939
          %2941 = vperm.xlu0 %2940, %v2864
          %v2942 = vpop.permute.xlu0 %2941
          %v2943 = vlaneseq
          %v2944 = vshrl.u32 %v2943, 7
          %v2945 = vadd.s32 %v2944, 104
          %2946 = vset.pattern.permute.xlu0 %v2945
          %2947 = vperm.xlu0 %2946, %v2864
          %v2948 = vpop.permute.xlu0 %2947
          %v2949 = vlaneseq
          %v2950 = vshrl.u32 %v2949, 7
          %v2951 = vadd.s32 %v2950, 112
          %2952 = vset.pattern.permute.xlu0 %v2951
          %2953 = vperm.xlu0 %2952, %v2864
          %v2954 = vpop.permute.xlu0 %2953
          %v2955 = vlaneseq
          %v2956 = vshrl.u32 %v2955, 7
          %v2957 = vadd.s32 %v2956, 120
          %2958 = vset.pattern.permute.xlu0 %v2957
          %2959 = vperm.xlu0 %2958, %v2864
          %v2960 = vpop.permute.xlu0 %2959
          %v2961 = vsel %vm2359, %v2773, 0
          %v2962 = vsel %vm2360, %v2779, 0
          %v2963 = vsel %vm2361, %v2785, 0
          %v2964 = vsel %vm2362, %v2791, 0
          %v2965 = vsel %vm2363, %v2797, 0
          %v2966 = vsel %vm2364, %v2803, 0
          %v2967 = vsel %vm2365, %v2809, 0
          %v2968 = vsel %vm2366, %v2815, 0
          %v2969 = vsel %vm2367, %v2821, 0
          %v2970 = vsel %vm2368, %v2827, 0
          %v2971 = vsel %vm2369, %v2833, 0
          %v2972 = vsel %vm2370, %v2839, 0
          %v2973 = vsel %vm2371, %v2845, 0
          %v2974 = vsel %vm2372, %v2851, 0
          %v2975 = vsel %vm2373, %v2857, 0
          %v2976 = vsel %vm2374, %v2863, 0
          %v2977 = vsel %vm2375, %v2870, 0
          %v2978 = vsel %vm2376, %v2876, 0
          %v2979 = vsel %vm2377, %v2882, 0
          %v2980 = vsel %vm2378, %v2888, 0
          %v2981 = vsel %vm2379, %v2894, 0
          %v2982 = vsel %vm2380, %v2900, 0
          %v2983 = vsel %vm2381, %v2906, 0
          %v2984 = vsel %vm2382, %v2912, 0
          %v2985 = vsel %vm2383, %v2918, 0
          %v2986 = vsel %vm2384, %v2924, 0
          %v2987 = vsel %vm2385, %v2930, 0
          %v2988 = vsel %vm2386, %v2936, 0
          %v2989 = vsel %vm2387, %v2942, 0
          %v2990 = vsel %vm2388, %v2948, 0
          %v2991 = vsel %vm2389, %v2954, 0
          %v2992 = vsel %vm2390, %v2960, 0
          %v2993 = vadd.s32 %v2961, %v2963
          %v2994 = vadd.s32 %v2962, %v2964
          %v2995 = vadd.s32 %v2993, %v2965
          %v2996 = vadd.s32 %v2994, %v2966
          %v2997 = vadd.s32 %v2995, %v2967
          %v2998 = vadd.s32 %v2996, %v2968
          %v2999 = vadd.s32 %v2997, %v2969
          %v3000 = vadd.s32 %v2998, %v2970
          %v3001 = vadd.s32 %v2999, %v2971
          %v3002 = vadd.s32 %v3000, %v2972
          %v3003 = vadd.s32 %v3001, %v2973
          %v3004 = vadd.s32 %v3002, %v2974
          %v3005 = vadd.s32 %v3003, %v2975
          %v3006 = vadd.s32 %v3004, %v2976
          %v3007 = vadd.s32 %v3005, %v3006
          %v3008 = vrot.slane %v3007, 4
          %v3009 = vadd.s32 %v3007, %v3008
          %v3010 = vrot.slane %v3009, 2
          %v3011 = vadd.s32 %v3009, %v3010
          %v3012 = vrot.slane %v3011, 1
          %v3013 = vadd.s32 %v3011, %v3012
          %v3014 = vadd.s32 %v2977, %v2979
          %v3015 = vadd.s32 %v2978, %v2980
          %v3016 = vadd.s32 %v3014, %v2981
          %v3017 = vadd.s32 %v3015, %v2982
          %v3018 = vadd.s32 %v3016, %v2983
          %v3019 = vadd.s32 %v3017, %v2984
          %v3020 = vadd.s32 %v3018, %v2985
          %v3021 = vadd.s32 %v3019, %v2986
          %v3022 = vadd.s32 %v3020, %v2987
          %v3023 = vadd.s32 %v3021, %v2988
          %v3024 = vadd.s32 %v3022, %v2989
          %v3025 = vadd.s32 %v3023, %v2990
          %v3026 = vadd.s32 %v3024, %v2991
          %v3027 = vadd.s32 %v3025, %v2992
          %v3028 = vadd.s32 %v3026, %v3027
          %v3029 = vrot.slane %v3028, 4
          %v3030 = vadd.s32 %v3028, %v3029
          %v3031 = vrot.slane %v3030, 2
          %v3032 = vadd.s32 %v3030, %v3031
          %v3033 = vrot.slane %v3032, 1
          %v3034 = vadd.s32 %v3032, %v3033
          %v3035 = vperm.slane %v653, 0
          %v3036 = vlaneseq
          %v3037 = vshrl.u32 %v3036, 7
          %3039 = vset.pattern.permute.xlu0 %v3037
          %3040 = vperm.xlu0 %3039, %v3035
          %v3041 = vpop.permute.xlu0 %3040
          %v3042 = vlaneseq
          %v3043 = vshrl.u32 %v3042, 7
          %v3044 = vadd.s32 %v3043, 8
          %3045 = vset.pattern.permute.xlu0 %v3044
          %3046 = vperm.xlu0 %3045, %v3035
          %v3047 = vpop.permute.xlu0 %3046
          %v3048 = vlaneseq
          %v3049 = vshrl.u32 %v3048, 7
          %v3050 = vadd.s32 %v3049, 16
          %3051 = vset.pattern.permute.xlu0 %v3050
          %3052 = vperm.xlu0 %3051, %v3035
          %v3053 = vpop.permute.xlu0 %3052
          %v3054 = vlaneseq
          %v3055 = vshrl.u32 %v3054, 7
          %v3056 = vadd.s32 %v3055, 24
          %3057 = vset.pattern.permute.xlu0 %v3056
          %3058 = vperm.xlu0 %3057, %v3035
          %v3059 = vpop.permute.xlu0 %3058
          %v3060 = vlaneseq
          %v3061 = vshrl.u32 %v3060, 7
          %v3062 = vadd.s32 %v3061, 32
          %3063 = vset.pattern.permute.xlu0 %v3062
          %3064 = vperm.xlu0 %3063, %v3035
          %v3065 = vpop.permute.xlu0 %3064
          %v3066 = vlaneseq
          %v3067 = vshrl.u32 %v3066, 7
          %v3068 = vadd.s32 %v3067, 40
          %3069 = vset.pattern.permute.xlu0 %v3068
          %3070 = vperm.xlu0 %3069, %v3035
          %v3071 = vpop.permute.xlu0 %3070
          %v3072 = vlaneseq
          %v3073 = vshrl.u32 %v3072, 7
          %v3074 = vadd.s32 %v3073, 48
          %3075 = vset.pattern.permute.xlu0 %v3074
          %3076 = vperm.xlu0 %3075, %v3035
          %v3077 = vpop.permute.xlu0 %3076
          %v3078 = vlaneseq
          %v3079 = vshrl.u32 %v3078, 7
          %v3080 = vadd.s32 %v3079, 56
          %3081 = vset.pattern.permute.xlu0 %v3080
          %3082 = vperm.xlu0 %3081, %v3035
          %v3083 = vpop.permute.xlu0 %3082
          %v3084 = vlaneseq
          %v3085 = vshrl.u32 %v3084, 7
          %v3086 = vadd.s32 %v3085, 64
          %3087 = vset.pattern.permute.xlu0 %v3086
          %3088 = vperm.xlu0 %3087, %v3035
          %v3089 = vpop.permute.xlu0 %3088
          %v3090 = vlaneseq
          %v3091 = vshrl.u32 %v3090, 7
          %v3092 = vadd.s32 %v3091, 72
          %3093 = vset.pattern.permute.xlu0 %v3092
          %3094 = vperm.xlu0 %3093, %v3035
          %v3095 = vpop.permute.xlu0 %3094
          %v3096 = vlaneseq
          %v3097 = vshrl.u32 %v3096, 7
          %v3098 = vadd.s32 %v3097, 80
          %3099 = vset.pattern.permute.xlu0 %v3098
          %3100 = vperm.xlu0 %3099, %v3035
          %v3101 = vpop.permute.xlu0 %3100
          %v3102 = vlaneseq
          %v3103 = vshrl.u32 %v3102, 7
          %v3104 = vadd.s32 %v3103, 88
          %3105 = vset.pattern.permute.xlu0 %v3104
          %3106 = vperm.xlu0 %3105, %v3035
          %v3107 = vpop.permute.xlu0 %3106
          %v3108 = vlaneseq
          %v3109 = vshrl.u32 %v3108, 7
          %v3110 = vadd.s32 %v3109, 96
          %3111 = vset.pattern.permute.xlu0 %v3110
          %3112 = vperm.xlu0 %3111, %v3035
          %v3113 = vpop.permute.xlu0 %3112
          %v3114 = vlaneseq
          %v3115 = vshrl.u32 %v3114, 7
          %v3116 = vadd.s32 %v3115, 104
          %3117 = vset.pattern.permute.xlu0 %v3116
          %3118 = vperm.xlu0 %3117, %v3035
          %v3119 = vpop.permute.xlu0 %3118
          %v3120 = vlaneseq
          %v3121 = vshrl.u32 %v3120, 7
          %v3122 = vadd.s32 %v3121, 112
          %3123 = vset.pattern.permute.xlu0 %v3122
          %3124 = vperm.xlu0 %3123, %v3035
          %v3125 = vpop.permute.xlu0 %3124
          %v3126 = vlaneseq
          %v3127 = vshrl.u32 %v3126, 7
          %v3128 = vadd.s32 %v3127, 120
          %3129 = vset.pattern.permute.xlu0 %v3128
          %3130 = vperm.xlu0 %3129, %v3035
          %v3131 = vpop.permute.xlu0 %3130
          %v3132 = vperm.slane %v653, 1
          %v3133 = vlaneseq
          %v3134 = vshrl.u32 %v3133, 7
          %3136 = vset.pattern.permute.xlu0 %v3134
          %3137 = vperm.xlu0 %3136, %v3132
          %v3138 = vpop.permute.xlu0 %3137
          %v3139 = vlaneseq
          %v3140 = vshrl.u32 %v3139, 7
          %v3141 = vadd.s32 %v3140, 8
          %3142 = vset.pattern.permute.xlu0 %v3141
          %3143 = vperm.xlu0 %3142, %v3132
          %v3144 = vpop.permute.xlu0 %3143
          %v3145 = vlaneseq
          %v3146 = vshrl.u32 %v3145, 7
          %v3147 = vadd.s32 %v3146, 16
          %3148 = vset.pattern.permute.xlu0 %v3147
          %3149 = vperm.xlu0 %3148, %v3132
          %v3150 = vpop.permute.xlu0 %3149
          %v3151 = vlaneseq
          %v3152 = vshrl.u32 %v3151, 7
          %v3153 = vadd.s32 %v3152, 24
          %3154 = vset.pattern.permute.xlu0 %v3153
          %3155 = vperm.xlu0 %3154, %v3132
          %v3156 = vpop.permute.xlu0 %3155
          %v3157 = vlaneseq
          %v3158 = vshrl.u32 %v3157, 7
          %v3159 = vadd.s32 %v3158, 32
          %3160 = vset.pattern.permute.xlu0 %v3159
          %3161 = vperm.xlu0 %3160, %v3132
          %v3162 = vpop.permute.xlu0 %3161
          %v3163 = vlaneseq
          %v3164 = vshrl.u32 %v3163, 7
          %v3165 = vadd.s32 %v3164, 40
          %3166 = vset.pattern.permute.xlu0 %v3165
          %3167 = vperm.xlu0 %3166, %v3132
          %v3168 = vpop.permute.xlu0 %3167
          %v3169 = vlaneseq
          %v3170 = vshrl.u32 %v3169, 7
          %v3171 = vadd.s32 %v3170, 48
          %3172 = vset.pattern.permute.xlu0 %v3171
          %3173 = vperm.xlu0 %3172, %v3132
          %v3174 = vpop.permute.xlu0 %3173
          %v3175 = vlaneseq
          %v3176 = vshrl.u32 %v3175, 7
          %v3177 = vadd.s32 %v3176, 56
          %3178 = vset.pattern.permute.xlu0 %v3177
          %3179 = vperm.xlu0 %3178, %v3132
          %v3180 = vpop.permute.xlu0 %3179
          %v3181 = vlaneseq
          %v3182 = vshrl.u32 %v3181, 7
          %v3183 = vadd.s32 %v3182, 64
          %3184 = vset.pattern.permute.xlu0 %v3183
          %3185 = vperm.xlu0 %3184, %v3132
          %v3186 = vpop.permute.xlu0 %3185
          %v3187 = vlaneseq
          %v3188 = vshrl.u32 %v3187, 7
          %v3189 = vadd.s32 %v3188, 72
          %3190 = vset.pattern.permute.xlu0 %v3189
          %3191 = vperm.xlu0 %3190, %v3132
          %v3192 = vpop.permute.xlu0 %3191
          %v3193 = vlaneseq
          %v3194 = vshrl.u32 %v3193, 7
          %v3195 = vadd.s32 %v3194, 80
          %3196 = vset.pattern.permute.xlu0 %v3195
          %3197 = vperm.xlu0 %3196, %v3132
          %v3198 = vpop.permute.xlu0 %3197
          %v3199 = vlaneseq
          %v3200 = vshrl.u32 %v3199, 7
          %v3201 = vadd.s32 %v3200, 88
          %3202 = vset.pattern.permute.xlu0 %v3201
          %3203 = vperm.xlu0 %3202, %v3132
          %v3204 = vpop.permute.xlu0 %3203
          %v3205 = vlaneseq
          %v3206 = vshrl.u32 %v3205, 7
          %v3207 = vadd.s32 %v3206, 96
          %3208 = vset.pattern.permute.xlu0 %v3207
          %3209 = vperm.xlu0 %3208, %v3132
          %v3210 = vpop.permute.xlu0 %3209
          %v3211 = vlaneseq
          %v3212 = vshrl.u32 %v3211, 7
          %v3213 = vadd.s32 %v3212, 104
          %3214 = vset.pattern.permute.xlu0 %v3213
          %3215 = vperm.xlu0 %3214, %v3132
          %v3216 = vpop.permute.xlu0 %3215
          %v3217 = vlaneseq
          %v3218 = vshrl.u32 %v3217, 7
          %v3219 = vadd.s32 %v3218, 112
          %3220 = vset.pattern.permute.xlu0 %v3219
          %3221 = vperm.xlu0 %3220, %v3132
          %v3222 = vpop.permute.xlu0 %3221
          %v3223 = vlaneseq
          %v3224 = vshrl.u32 %v3223, 7
          %v3225 = vadd.s32 %v3224, 120
          %3226 = vset.pattern.permute.xlu0 %v3225
          %3227 = vperm.xlu0 %3226, %v3132
          %v3228 = vpop.permute.xlu0 %3227
          %v3229 = vsel %vm2585, %v3041, 0
          %v3230 = vsel %vm2586, %v3047, 0
          %v3231 = vsel %vm2587, %v3053, 0
          %v3232 = vsel %vm2588, %v3059, 0
          %v3233 = vsel %vm2589, %v3065, 0
          %v3234 = vsel %vm2590, %v3071, 0
          %v3235 = vsel %vm2591, %v3077, 0
          %v3236 = vsel %vm2592, %v3083, 0
          %v3237 = vsel %vm2593, %v3089, 0
          %v3238 = vsel %vm2594, %v3095, 0
          %v3239 = vsel %vm2595, %v3101, 0
          %v3240 = vsel %vm2596, %v3107, 0
          %v3241 = vsel %vm2597, %v3113, 0
          %v3242 = vsel %vm2598, %v3119, 0
          %v3243 = vsel %vm2599, %v3125, 0
          %v3244 = vsel %vm2600, %v3131, 0
          %v3245 = vsel %vm2601, %v3138, 0
          %v3246 = vsel %vm2602, %v3144, 0
          %v3247 = vsel %vm2603, %v3150, 0
          %v3248 = vsel %vm2604, %v3156, 0
          %v3249 = vsel %vm2605, %v3162, 0
          %v3250 = vsel %vm2606, %v3168, 0
          %v3251 = vsel %vm2607, %v3174, 0
          %v3252 = vsel %vm2608, %v3180, 0
          %v3253 = vsel %vm2609, %v3186, 0
          %v3254 = vsel %vm2610, %v3192, 0
          %v3255 = vsel %vm2611, %v3198, 0
          %v3256 = vsel %vm2612, %v3204, 0
          %v3257 = vsel %vm2613, %v3210, 0
          %v3258 = vsel %vm2614, %v3216, 0
          %v3259 = vsel %vm2615, %v3222, 0
          %v3260 = vsel %vm2616, %v3228, 0
          %v3261 = vadd.s32 %v3229, %v3231
          %v3262 = vadd.s32 %v3230, %v3232
          %v3263 = vadd.s32 %v3261, %v3233
          %v3264 = vadd.s32 %v3262, %v3234
          %v3265 = vadd.s32 %v3263, %v3235
          %v3266 = vadd.s32 %v3264, %v3236
          %v3267 = vadd.s32 %v3265, %v3237
          %v3268 = vadd.s32 %v3266, %v3238
          %v3269 = vadd.s32 %v3267, %v3239
          %v3270 = vadd.s32 %v3268, %v3240
          %v3271 = vadd.s32 %v3269, %v3241
          %v3272 = vadd.s32 %v3270, %v3242
          %v3273 = vadd.s32 %v3271, %v3243
          %v3274 = vadd.s32 %v3272, %v3244
          %v3275 = vadd.s32 %v3273, %v3274
          %v3276 = vrot.slane %v3275, 4
          %v3277 = vadd.s32 %v3275, %v3276
          %v3278 = vrot.slane %v3277, 2
          %v3279 = vadd.s32 %v3277, %v3278
          %v3280 = vrot.slane %v3279, 1
          %v3281 = vadd.s32 %v3279, %v3280
          %v3282 = vadd.s32 %v3245, %v3247
          %v3283 = vadd.s32 %v3246, %v3248
          %v3284 = vadd.s32 %v3282, %v3249
          %v3285 = vadd.s32 %v3283, %v3250
          %v3286 = vadd.s32 %v3284, %v3251
          %v3287 = vadd.s32 %v3285, %v3252
          %v3288 = vadd.s32 %v3286, %v3253
          %v3289 = vadd.s32 %v3287, %v3254
          %v3290 = vadd.s32 %v3288, %v3255
          %v3291 = vadd.s32 %v3289, %v3256
          %v3292 = vadd.s32 %v3290, %v3257
          %v3293 = vadd.s32 %v3291, %v3258
          %v3294 = vadd.s32 %v3292, %v3259
          %v3295 = vadd.s32 %v3293, %v3260
          %v3296 = vadd.s32 %v3294, %v3295
          %v3297 = vrot.slane %v3296, 4
          %v3298 = vadd.s32 %v3296, %v3297
          %v3299 = vrot.slane %v3298, 2
          %v3300 = vadd.s32 %v3298, %v3299
          %v3301 = vrot.slane %v3300, 1
          %v3302 = vadd.s32 %v3300, %v3301
          %v3303 = vadd.s32 %v3013, %v3281
          %v3304 = vadd.s32 %v3034, %v3302
          %vm3305 = vcmp.lt.s32.totalorder %v609, 8
          %v3306 = vsel %vm3305, 1, 0
          %vm3307 = vcmp.eq.s32.totalorder %v3306, 1
          %v3310 = vsel %vm2098, %v2766, %v2765
          %v3312 = vsel %vm3307, %v3310, -inf
          %3313 = vst [vmem:[%s266] sm:$0x3] %v3312
          %v3314 = vsel %vm2098, %v3304, %v3303
          %v3315 = vsel %vm3307, %v3314, 1073741824
          %3316 = vst [vmem:[%s273] sm:$0x3] %v3315
        $region52: #{tpu_custom_call.1} parent=31 // pred_fallthru
          _
        %s3317 = sand.u32 %s116, 1
        %s3318 = scalar_lea.sflag [#allocation5], %s3317
        %s3319 = sand.u32 %s116, 1
        %s3320 = smul.addr %s3319, 2
        %s3321 = scalar_lea.vmem [#allocation9], %s3320
        %s3322 = sand.u32 %s142, 1
        %s3323 = scalar_lea.sflag [#allocation11], %s3322
        %s3324 = sand.u32 %s142, 1
        %s3325 = smul.addr %s3324, 2
        %s3326 = scalar_lea.vmem [#allocation10], %s3325
        // Predicated region
        $region60: #{tpu_custom_call.1} parent=31 // pred_check
          %p3327 = pneg %p126
        $region61: #{tpu_custom_call.1} parent=31 // pred_check_branch
          %3329 = sbr.rel (%p3327) target = $region63
        $region62: #{tpu_custom_call.1} parent=31 // pred_region
          %3331 = vsyncadd %s3318, 0
          %s3332 = smul.addr %s28, 2
          %s3333 = scalar_lea.hbm %s3, %s3332
          %s3335 = sshll.u32 %s3321, 4
          %s3336 = int_to_ptr.vmem [resolvable:$true] %s3335
          %s3337 = sshll.u32 %s3333, 4
          %s3338 = int_to_ptr.hbm [resolvable:$true] %s3337
          %3340 = dma.vmem_to_hbm [thread:$0]  %s3336, 32, %s3338, %s3318
        $region63: #{tpu_custom_call.1} parent=31 // pred_fallthru
          _
        // Predicated region
        $region64: #{tpu_custom_call.1} parent=31 // pred_check
          %p3341 = pneg %p152
        $region65: #{tpu_custom_call.1} parent=31 // pred_check_branch
          %3343 = sbr.rel (%p3341) target = $region67
        $region66: #{tpu_custom_call.1} parent=31 // pred_region
          %3345 = vsyncadd %s3323, 0
          %s3346 = smul.addr %s28, 2
          %s3347 = scalar_lea.hbm %s4, %s3346
          %s3349 = sshll.u32 %s3326, 4
          %s3350 = int_to_ptr.vmem [resolvable:$true] %s3349
          %s3351 = sshll.u32 %s3347, 4
          %s3352 = int_to_ptr.hbm [resolvable:$true] %s3351
          %3354 = dma.vmem_to_hbm [thread:$0]  %s3350, 32, %s3352, %s3323
        $region67: #{tpu_custom_call.1} parent=31 // pred_fallthru
          _
      $region32: #{tpu_custom_call.1} parent=5 // pred_fallthru
        _
      %p3355 = scmp.le.s32.totalorder 2, %s19
      // Predicated region
      $region68: #{tpu_custom_call.1} parent=5 // pred_check
        %p3356 = pneg %p3355
      $region69: #{tpu_custom_call.1} parent=5 // pred_check_branch
        %3358 = sbr.rel (%p3356) target = $region71
      $region70: #{tpu_custom_call.1} parent=5 // pred_region
        %s3359 = ssub.s32 %s19, 2
        // Predicated region
        $region72: #{tpu_custom_call.1} parent=70 // pred_check
          %p3360 = pneg %p132
        $region73: #{tpu_custom_call.1} parent=70 // pred_check_branch
          %3362 = sbr.rel (%p3360) target = $region75
        $region74: #{tpu_custom_call.1} parent=70 // pred_region
          %s3363 = sand.u32 %s117, 1
          %s3364 = scalar_lea.sflag [#allocation5], %s3363
          %s3365 = sand.u32 %s117, 1
          %s3366 = smul.addr %s3365, 2
          %s3367 = scalar_lea.vmem [#allocation9], %s3366
          %3369 = dma.done %s3364, 32
        $region75: #{tpu_custom_call.1} parent=70 // pred_fallthru
          _
        // Predicated region
        $region76: #{tpu_custom_call.1} parent=70 // pred_check
          %p3370 = pneg %p158
        $region77: #{tpu_custom_call.1} parent=70 // pred_check_branch
          %3372 = sbr.rel (%p3370) target = $region79
        $region78: #{tpu_custom_call.1} parent=70 // pred_region
          %s3373 = sand.u32 %s143, 1
          %s3374 = scalar_lea.sflag [#allocation11], %s3373
          %s3375 = sand.u32 %s143, 1
          %s3376 = smul.addr %s3375, 2
          %s3377 = scalar_lea.vmem [#allocation10], %s3376
          %3379 = dma.done %s3374, 32
        $region79: #{tpu_custom_call.1} parent=70 // pred_fallthru
          _
      $region71: #{tpu_custom_call.1} parent=5 // pred_fallthru
        _
    $region6: #{tpu_custom_call.1} parent=1 // loop_footer
      %s23 = sadd.s32 1, %s19
    $region7: #{tpu_custom_call.1} parent=1 // loop_footer_branch
      %18 = sbr.rel target = $region3
    $region8: #{tpu_custom_call.1} parent=1 // loop_exit
      _
    %3380 = vsyncpa [#allocation4], 1
    %s3381 = scalar_lea.sflag [#allocation4], 1
    %3382 = vsyncpa %s3381, 1
    %3383 = vsyncpa [#allocation7], 1
    %3384 = vsyncpa [#allocation5], 1
    %s3385 = scalar_lea.sflag [#allocation5], 1
    %3386 = vsyncpa %s3385, 1
    %3387 = vsyncpa [#allocation11], 1
    %s3388 = scalar_lea.sflag [#allocation11], 1
    %3389 = vsyncpa %s3388, 1

</llo_original>
